<compile_context>
chip_gen: v7x
topology: tpu7x:2x2x1
jax: 0.10.0
libtpu: 0.0.40
codegen_flags: <defaults>
</compile_context>

<pallas_src>
import jax
import jax.numpy as jnp
from jax.experimental import pallas as pl
from jax.experimental.pallas import tpu as pltpu

_NEG_SLOPE = 0.1


# ------------------------------ fused kernel ---------------------------------


def _down_fused_kernel(x_ref, w1_ref, b1_ref, w2_ref, b2_ref, o_ref,
                       pad1_ref, pad2_ref):
    # x_ref:   (NB, H2, 2, W2, 2*Cin)  width pairs pre-folded onto the lane axis
    # w1_ref:  (K, K, 2*Cin, Cout)     0.25-scaled, channel-duplicated conv1 wt
    # w2_ref:  (K, K, Cout, Cout)      conv2 weight (HWIO)
    # b*_ref:  (1, Cout)
    # o_ref:   (NB, H2, W2, Cout)
    # pad*_ref: zero-haloed VMEM scratch for the two 'same' convolutions
    NB, H2, W2, Cout = o_ref.shape
    K = w1_ref.shape[0]
    p = (K - 1) // 2
    Hp, Wp = H2 + 2 * p, W2 + 2 * p
    M = NB * H2 * W2

    # Zero only the p-wide halo; the interior is fully overwritten every step.
    def zero_halo(ref):
        C = ref.shape[-1]
        zr = jnp.zeros((NB, p, Wp, C), jnp.float32)
        ref[:, pl.ds(0, p), :, :] = zr            # top rows
        ref[:, pl.ds(p + H2, p), :, :] = zr       # bottom rows
        zc = jnp.zeros((NB, Hp, p, C), jnp.float32)
        ref[:, :, pl.ds(0, p), :] = zc            # left cols
        ref[:, :, pl.ds(p + W2, p), :] = zc       # right cols

    zero_halo(pad1_ref)
    zero_halo(pad2_ref)

    # ---- avg_pool2d(x, 2): only the row-pair add happens here (pure VPU).
    # The column-pair add and the 0.25 scale live inside w1 (see wrapper), so
    # pooling needs no MXU matmuls and no strided sublane accesses.
    xv = x_ref[...]                                   # (NB, H2, 2, W2, 2*Cin)
    pooled_pair = xv[:, :, 0] + xv[:, :, 1]           # (NB, H2, W2, 2*Cin)
    pad1_ref[:, pl.ds(p, H2), pl.ds(p, W2), :] = pooled_pair

    # ---- conv (stride 1, 'same' pad) + leaky_relu(0.1), batch folded into M
    def conv_leaky(pad_ref, w_ref, b_ref):
        Cin = pad_ref.shape[-1]
        Co = w_ref.shape[-1]
        wv = w_ref[...]                               # load weights once
        acc = jnp.zeros((M, Co), jnp.float32)
        for kh in range(K):
            for kw in range(K):
                patch = pad_ref[:, pl.ds(kh, H2), pl.ds(kw, W2), :]  # (NB,H2,W2,Cin)
                acc = acc + jnp.dot(patch.reshape(M, Cin), wv[kh, kw],
                                    preferred_element_type=jnp.float32)
        acc = acc + b_ref[...]                        # bias (1, Co) broadcast
        return jnp.maximum(acc, _NEG_SLOPE * acc)     # leaky_relu(0.1)

    h1 = conv_leaky(pad1_ref, w1_ref, b1_ref)                         # (M, Cout)
    pad2_ref[:, pl.ds(p, H2), pl.ds(p, W2), :] = h1.reshape(NB, H2, W2, Cout)
    y = conv_leaky(pad2_ref, w2_ref, b2_ref)                          # (M, Cout)
    o_ref[...] = y.reshape(NB, H2, W2, Cout).astype(o_ref.dtype)


# -------------------------------- wrappers -----------------------------------


def down_forward_nhwc(x, w1, b1, w2, b2, *, images_per_step=None):
    """x: (N, H, W, Cin) f32 -> (N, H//2, W//2, Cout); one fused pallas_call."""
    N, H, W, Cin = x.shape
    K, K2, _, Cout = w1.shape
    if K != K2 or K % 2 != 1:
        raise ValueError("filterSize must be square and odd")
    if w2.shape != (K, K, Cout, Cout):
        raise ValueError("conv2 weight shape mismatch")
    if H % 2 or W % 2:
        raise ValueError("H and W must be even for avg_pool2d(2)")
    H2, W2 = H // 2, W // 2
    p = (K - 1) // 2

    NB = N if images_per_step is None else images_per_step
    if N % NB:
        raise ValueError("images_per_step must divide the batch size")

    # Fold the 0.25 avg-pool scale and the width-pair sum into conv1's weight:
    #   w1p[kh, kw, j, o] = 0.25 * w1[kh, kw, j % Cin, o],  j in [0, 2*Cin)
    w1p = 0.25 * jnp.concatenate([w1, w1], axis=2)        # (K, K, 2*Cin, Cout)
    # Expose width pairs on the channel (lane) axis: x5[n, h2, a, w2, :] holds
    # channels of x[n, 2*h2+a, 2*w2] followed by x[n, 2*h2+a, 2*w2+1].
    x5 = x.reshape(N, H2, 2, W2, 2 * Cin)

    return pl.pallas_call(
        _down_fused_kernel,
        out_shape=jax.ShapeDtypeStruct((N, H2, W2, Cout), x.dtype),
        grid=(N // NB,),
        in_specs=[
            pl.BlockSpec((NB, H2, 2, W2, 2 * Cin), lambda n: (n, 0, 0, 0, 0)),
            pl.BlockSpec((K, K, 2 * Cin, Cout), lambda n: (0, 0, 0, 0)),
            pl.BlockSpec((1, Cout), lambda n: (0, 0)),
            pl.BlockSpec((K, K, Cout, Cout), lambda n: (0, 0, 0, 0)),
            pl.BlockSpec((1, Cout), lambda n: (0, 0)),
        ],
        out_specs=pl.BlockSpec((NB, H2, W2, Cout), lambda n: (n, 0, 0, 0)),
        scratch_shapes=[
            pltpu.VMEM((NB, H2 + 2 * p, W2 + 2 * p, 2 * Cin), jnp.float32),
            pltpu.VMEM((NB, H2 + 2 * p, W2 + 2 * p, Cout), jnp.float32),
        ],
        compiler_params=pltpu.CompilerParams(
            dimension_semantics=("parallel",)),
    )(x5, w1p, b1.reshape(1, Cout), w2, b2.reshape(1, Cout))


@jax.jit
def down_forward(x_nchw, w1, b1, w2, b2):
    """Equivalent of Down.forward; x_nchw: (N, Cin, H, W) -> (N, Cout, H/2, W/2)."""
    x = jnp.transpose(x_nchw, (0, 2, 3, 1))        # NCHW -> NHWC (glue)
    y = down_forward_nhwc(x, w1, b1, w2, b2)
    return jnp.transpose(y, (0, 3, 1, 2))          # NHWC -> NCHW (glue)


# ----------------------------- pure-JAX reference -----------------------------


def ref_forward(x_nchw, w1, b1, w2, b2):
    x = jnp.transpose(x_nchw, (0, 2, 3, 1))
    N, H, W, C = x.shape
    x = x.reshape(N, H // 2, 2, W // 2, 2, C).mean(axis=(2, 4))

    def conv(x, w, b):
        K = w.shape[0]
        p = (K - 1) // 2
        y = jax.lax.conv_general_dilated(
            x, w, window_strides=(1, 1), padding=[(p, p), (p, p)],
            dimension_numbers=("NHWC", "HWIO", "NHWC"),
            precision=jax.lax.Precision.HIGHEST) + b
        return jnp.where(y >= 0, y, _NEG_SLOPE * y)

    x = conv(x, w1, b1)
    x = conv(x, w2, b2)
    return jnp.transpose(x, (0, 3, 1, 2))


# ----------------------------------- main --------------------------------------

if __name__ == "__main__":
    key = jax.random.PRNGKey(0)
    kx, k1, k2, k3, k4 = jax.random.split(key, 5)

    # Down(inChannels=4, outChannels=8, filterSize=3), input (2, 4, 16, 16)
    N, Cin, H, W = 2, 4, 16, 16
    Cout, K = 8, 3

    x = jax.random.normal(kx, (N, Cin, H, W), jnp.float32)
    # weights stored as (K, K, Cin, Cout) == HWIO (PyTorch keeps OIHW; same math)
    w1 = 0.1 * jax.random.normal(k1, (K, K, Cin, Cout), jnp.float32)
    b1 = 0.1 * jax.random.normal(k2, (Cout,), jnp.float32)
    w2 = 0.1 * jax.random.normal(k3, (K, K, Cout, Cout), jnp.float32)
    b2 = 0.1 * jax.random.normal(k4, (Cout,), jnp.float32)

    out = jax.block_until_ready(down_forward(x, w1, b1, w2, b2))
    assert out.shape == (N, Cout, H // 2, W // 2), out.shape

    ref = jax.block_until_ready(ref_forward(x, w1, b1, w2, b2))
    max_err = float(jnp.max(jnp.abs(out - ref)))
    # Kernel uses default MXU precision (reference uses HIGHEST); real
    # indexing/padding/weight-folding bugs give O(0.1+) errors.
    if max_err > 2e-2:
        raise RuntimeError(f"mismatch vs reference, max abs err = {max_err}")

    print("KERNEL_OK")
</pallas_src>

<mosaic_0001>
module attributes {stable_mosaic.version = 11 : i64} {
  func.func @_down_fused_kernel(%arg0: i32, %arg1: memref<2x8x2x8x8xf32, #tpu.memory_space<vmem>>, %arg2: memref<3x3x8x8xf32, #tpu.memory_space<vmem>>, %arg3: memref<1x8xf32, #tpu.memory_space<vmem>>, %arg4: memref<3x3x8x8xf32, #tpu.memory_space<vmem>>, %arg5: memref<1x8xf32, #tpu.memory_space<vmem>>, %arg6: memref<2x8x8x8xf32, #tpu.memory_space<vmem>>, %arg7: memref<2x10x10x8xf32, #tpu.memory_space<vmem>>, %arg8: memref<2x10x10x8xf32, #tpu.memory_space<vmem>>) attributes {dimension_semantics = [#tpu.dimension_semantics<parallel>], iteration_bounds = array<i64: 1>, scalar_prefetch = 0 : i64, scratch_operands = 2 : i64, tpu.core_type = #tpu.core_type<tc>, window_params = [{transform_indices = @transform_0, window_bounds = array<i64: 2, 8, 2, 8, 8>}, {pipeline_mode = #tpu.pipeline_mode<synchronous>, transform_indices = @transform_1, window_bounds = array<i64: 3, 3, 8, 8>}, {pipeline_mode = #tpu.pipeline_mode<synchronous>, transform_indices = @transform_2, window_bounds = array<i64: 1, 8>}, {pipeline_mode = #tpu.pipeline_mode<synchronous>, transform_indices = @transform_3, window_bounds = array<i64: 3, 3, 8, 8>}, {pipeline_mode = #tpu.pipeline_mode<synchronous>, transform_indices = @transform_4, window_bounds = array<i64: 1, 8>}, {transform_indices = @transform_5, window_bounds = array<i64: 2, 8, 8, 8>}]} {
    %cst = arith.constant 0.000000e+00 : f32
    %0 = vector.broadcast %cst : f32 to vector<2x1x10x8xf32>
    %c0 = arith.constant 0 : index
    %c0_0 = arith.constant 0 : index
    %c0_1 = arith.constant 0 : index
    %c0_2 = arith.constant 0 : index
    %1 = vector.load %arg7[%c0, %c0_0, %c0_1, %c0_2] : memref<2x10x10x8xf32, #tpu.memory_space<vmem>>, vector<2x1x10x8xf32>
    tpu.vector_store %arg7[%c0, %c0_0, %c0_1, %c0_2], %0 {strides = array<i32>} : memref<2x10x10x8xf32, #tpu.memory_space<vmem>>, vector<2x1x10x8xf32>,
    %c0_3 = arith.constant 0 : index
    %c9 = arith.constant 9 : index
    %c0_4 = arith.constant 0 : index
    %c0_5 = arith.constant 0 : index
    %2 = vector.load %arg7[%c0_3, %c9, %c0_4, %c0_5] : memref<2x10x10x8xf32, #tpu.memory_space<vmem>>, vector<2x1x10x8xf32>
    tpu.vector_store %arg7[%c0_3, %c9, %c0_4, %c0_5], %0 {strides = array<i32>} : memref<2x10x10x8xf32, #tpu.memory_space<vmem>>, vector<2x1x10x8xf32>,
    %cst_6 = arith.constant 0.000000e+00 : f32
    %3 = vector.broadcast %cst_6 : f32 to vector<2x10x1x8xf32>
    %c0_7 = arith.constant 0 : index
    %c0_8 = arith.constant 0 : index
    %c0_9 = arith.constant 0 : index
    %c0_10 = arith.constant 0 : index
    %4 = vector.load %arg7[%c0_7, %c0_8, %c0_9, %c0_10] : memref<2x10x10x8xf32, #tpu.memory_space<vmem>>, vector<2x10x1x8xf32>
    tpu.vector_store %arg7[%c0_7, %c0_8, %c0_9, %c0_10], %3 {strides = array<i32>} : memref<2x10x10x8xf32, #tpu.memory_space<vmem>>, vector<2x10x1x8xf32>,
    %c0_11 = arith.constant 0 : index
    %c0_12 = arith.constant 0 : index
    %c9_13 = arith.constant 9 : index
    %c0_14 = arith.constant 0 : index
    %5 = vector.load %arg7[%c0_11, %c0_12, %c9_13, %c0_14] : memref<2x10x10x8xf32, #tpu.memory_space<vmem>>, vector<2x10x1x8xf32>
    tpu.vector_store %arg7[%c0_11, %c0_12, %c9_13, %c0_14], %3 {strides = array<i32>} : memref<2x10x10x8xf32, #tpu.memory_space<vmem>>, vector<2x10x1x8xf32>,
    %cst_15 = arith.constant 0.000000e+00 : f32
    %6 = vector.broadcast %cst_15 : f32 to vector<2x1x10x8xf32>
    %c0_16 = arith.constant 0 : index
    %c0_17 = arith.constant 0 : index
    %c0_18 = arith.constant 0 : index
    %c0_19 = arith.constant 0 : index
    %7 = vector.load %arg8[%c0_16, %c0_17, %c0_18, %c0_19] : memref<2x10x10x8xf32, #tpu.memory_space<vmem>>, vector<2x1x10x8xf32>
    tpu.vector_store %arg8[%c0_16, %c0_17, %c0_18, %c0_19], %6 {strides = array<i32>} : memref<2x10x10x8xf32, #tpu.memory_space<vmem>>, vector<2x1x10x8xf32>,
    %c0_20 = arith.constant 0 : index
    %c9_21 = arith.constant 9 : index
    %c0_22 = arith.constant 0 : index
    %c0_23 = arith.constant 0 : index
    %8 = vector.load %arg8[%c0_20, %c9_21, %c0_22, %c0_23] : memref<2x10x10x8xf32, #tpu.memory_space<vmem>>, vector<2x1x10x8xf32>
    tpu.vector_store %arg8[%c0_20, %c9_21, %c0_22, %c0_23], %6 {strides = array<i32>} : memref<2x10x10x8xf32, #tpu.memory_space<vmem>>, vector<2x1x10x8xf32>,
    %cst_24 = arith.constant 0.000000e+00 : f32
    %9 = vector.broadcast %cst_24 : f32 to vector<2x10x1x8xf32>
    %c0_25 = arith.constant 0 : index
    %c0_26 = arith.constant 0 : index
    %c0_27 = arith.constant 0 : index
    %c0_28 = arith.constant 0 : index
    %10 = vector.load %arg8[%c0_25, %c0_26, %c0_27, %c0_28] : memref<2x10x10x8xf32, #tpu.memory_space<vmem>>, vector<2x10x1x8xf32>
    tpu.vector_store %arg8[%c0_25, %c0_26, %c0_27, %c0_28], %9 {strides = array<i32>} : memref<2x10x10x8xf32, #tpu.memory_space<vmem>>, vector<2x10x1x8xf32>,
    %c0_29 = arith.constant 0 : index
    %c0_30 = arith.constant 0 : index
    %c9_31 = arith.constant 9 : index
    %c0_32 = arith.constant 0 : index
    %11 = vector.load %arg8[%c0_29, %c0_30, %c9_31, %c0_32] : memref<2x10x10x8xf32, #tpu.memory_space<vmem>>, vector<2x10x1x8xf32>
    tpu.vector_store %arg8[%c0_29, %c0_30, %c9_31, %c0_32], %9 {strides = array<i32>} : memref<2x10x10x8xf32, #tpu.memory_space<vmem>>, vector<2x10x1x8xf32>,
    %c0_33 = arith.constant 0 : index
    %c0_34 = arith.constant 0 : index
    %c0_35 = arith.constant 0 : index
    %c0_36 = arith.constant 0 : index
    %c0_37 = arith.constant 0 : index
    %12 = vector.load %arg1[%c0_33, %c0_34, %c0_35, %c0_36, %c0_37] : memref<2x8x2x8x8xf32, #tpu.memory_space<vmem>>, vector<2x8x2x8x8xf32>
    %13 = vector.extract_strided_slice %12 {offsets = [0, 0, 0, 0, 0], sizes = [2, 8, 1, 8, 8], strides = [1, 1, 1, 1, 1]} : vector<2x8x2x8x8xf32> to vector<2x8x1x8x8xf32>
    %14 = vector.shape_cast %13 : vector<2x8x1x8x8xf32> to vector<2x8x8x8xf32>
    %15 = vector.extract_strided_slice %12 {offsets = [0, 0, 1, 0, 0], sizes = [2, 8, 1, 8, 8], strides = [1, 1, 1, 1, 1]} : vector<2x8x2x8x8xf32> to vector<2x8x1x8x8xf32>
    %16 = vector.shape_cast %15 : vector<2x8x1x8x8xf32> to vector<2x8x8x8xf32>
    %17 = arith.addf %14, %16 : vector<2x8x8x8xf32>
    %c0_38 = arith.constant 0 : index
    %c1 = arith.constant 1 : index
    %c1_39 = arith.constant 1 : index
    %c0_40 = arith.constant 0 : index
    %18 = vector.load %arg7[%c0_38, %c1, %c1_39, %c0_40] : memref<2x10x10x8xf32, #tpu.memory_space<vmem>>, vector<2x8x8x8xf32>
    tpu.vector_store %arg7[%c0_38, %c1, %c1_39, %c0_40], %17 {strides = array<i32>} : memref<2x10x10x8xf32, #tpu.memory_space<vmem>>, vector<2x8x8x8xf32>,
    %c0_41 = arith.constant 0 : index
    %c0_42 = arith.constant 0 : index
    %c0_43 = arith.constant 0 : index
    %c0_44 = arith.constant 0 : index
    %19 = vector.load %arg2[%c0_41, %c0_42, %c0_43, %c0_44] : memref<3x3x8x8xf32, #tpu.memory_space<vmem>>, vector<3x3x8x8xf32>
    %cst_45 = arith.constant 0.000000e+00 : f32
    %20 = vector.broadcast %cst_45 : f32 to vector<128x8xf32>
    %c0_46 = arith.constant 0 : index
    %c0_47 = arith.constant 0 : index
    %c0_48 = arith.constant 0 : index
    %c0_49 = arith.constant 0 : index
    %21 = vector.load %arg7[%c0_46, %c0_47, %c0_48, %c0_49] : memref<2x10x10x8xf32, #tpu.memory_space<vmem>>, vector<2x8x8x8xf32>
    %22 = vector.shape_cast %21 : vector<2x8x8x8xf32> to vector<128x8xf32>
    %23 = vector.extract_strided_slice %19 {offsets = [0, 0, 0, 0], sizes = [1, 1, 8, 8], strides = [1, 1, 1, 1]} : vector<3x3x8x8xf32> to vector<1x1x8x8xf32>
    %24 = vector.shape_cast %23 : vector<1x1x8x8xf32> to vector<8x8xf32>
    %cst_50 = arith.constant dense<0.000000e+00> : vector<128x8xf32>
    %25 = tpu.matmul %22, %24, %cst_50 {dimension_numbers = #tpu.dot_dimension_numbers<[1], [0], [0], [1], [0, 0, 1, 1], [], []>} : vector<128x8xf32>, vector<8x8xf32>, vector<128x8xf32> -> vector<128x8xf32>
    %26 = arith.addf %20, %25 : vector<128x8xf32>
    %c0_51 = arith.constant 0 : index
    %c0_52 = arith.constant 0 : index
    %c1_53 = arith.constant 1 : index
    %c0_54 = arith.constant 0 : index
    %27 = vector.load %arg7[%c0_51, %c0_52, %c1_53, %c0_54] : memref<2x10x10x8xf32, #tpu.memory_space<vmem>>, vector<2x8x8x8xf32>
    %28 = vector.shape_cast %27 : vector<2x8x8x8xf32> to vector<128x8xf32>
    %29 = vector.extract_strided_slice %19 {offsets = [0, 1, 0, 0], sizes = [1, 1, 8, 8], strides = [1, 1, 1, 1]} : vector<3x3x8x8xf32> to vector<1x1x8x8xf32>
    %30 = vector.shape_cast %29 : vector<1x1x8x8xf32> to vector<8x8xf32>
    %cst_55 = arith.constant dense<0.000000e+00> : vector<128x8xf32>
    %31 = tpu.matmul %28, %30, %cst_55 {dimension_numbers = #tpu.dot_dimension_numbers<[1], [0], [0], [1], [0, 0, 1, 1], [], []>} : vector<128x8xf32>, vector<8x8xf32>, vector<128x8xf32> -> vector<128x8xf32>
    %32 = arith.addf %26, %31 : vector<128x8xf32>
    %c0_56 = arith.constant 0 : index
    %c0_57 = arith.constant 0 : index
    %c2 = arith.constant 2 : index
    %c0_58 = arith.constant 0 : index
    %33 = vector.load %arg7[%c0_56, %c0_57, %c2, %c0_58] : memref<2x10x10x8xf32, #tpu.memory_space<vmem>>, vector<2x8x8x8xf32>
    %34 = vector.shape_cast %33 : vector<2x8x8x8xf32> to vector<128x8xf32>
    %35 = vector.extract_strided_slice %19 {offsets = [0, 2, 0, 0], sizes = [1, 1, 8, 8], strides = [1, 1, 1, 1]} : vector<3x3x8x8xf32> to vector<1x1x8x8xf32>
    %36 = vector.shape_cast %35 : vector<1x1x8x8xf32> to vector<8x8xf32>
    %cst_59 = arith.constant dense<0.000000e+00> : vector<128x8xf32>
    %37 = tpu.matmul %34, %36, %cst_59 {dimension_numbers = #tpu.dot_dimension_numbers<[1], [0], [0], [1], [0, 0, 1, 1], [], []>} : vector<128x8xf32>, vector<8x8xf32>, vector<128x8xf32> -> vector<128x8xf32>
    %38 = arith.addf %32, %37 : vector<128x8xf32>
    %c0_60 = arith.constant 0 : index
    %c1_61 = arith.constant 1 : index
    %c0_62 = arith.constant 0 : index
    %c0_63 = arith.constant 0 : index
    %39 = vector.load %arg7[%c0_60, %c1_61, %c0_62, %c0_63] : memref<2x10x10x8xf32, #tpu.memory_space<vmem>>, vector<2x8x8x8xf32>
    %40 = vector.shape_cast %39 : vector<2x8x8x8xf32> to vector<128x8xf32>
    %41 = vector.extract_strided_slice %19 {offsets = [1, 0, 0, 0], sizes = [1, 1, 8, 8], strides = [1, 1, 1, 1]} : vector<3x3x8x8xf32> to vector<1x1x8x8xf32>
    %42 = vector.shape_cast %41 : vector<1x1x8x8xf32> to vector<8x8xf32>
    %cst_64 = arith.constant dense<0.000000e+00> : vector<128x8xf32>
    %43 = tpu.matmul %40, %42, %cst_64 {dimension_numbers = #tpu.dot_dimension_numbers<[1], [0], [0], [1], [0, 0, 1, 1], [], []>} : vector<128x8xf32>, vector<8x8xf32>, vector<128x8xf32> -> vector<128x8xf32>
    %44 = arith.addf %38, %43 : vector<128x8xf32>
    %c0_65 = arith.constant 0 : index
    %c1_66 = arith.constant 1 : index
    %c1_67 = arith.constant 1 : index
    %c0_68 = arith.constant 0 : index
    %45 = vector.load %arg7[%c0_65, %c1_66, %c1_67, %c0_68] : memref<2x10x10x8xf32, #tpu.memory_space<vmem>>, vector<2x8x8x8xf32>
    %46 = vector.shape_cast %45 : vector<2x8x8x8xf32> to vector<128x8xf32>
    %47 = vector.extract_strided_slice %19 {offsets = [1, 1, 0, 0], sizes = [1, 1, 8, 8], strides = [1, 1, 1, 1]} : vector<3x3x8x8xf32> to vector<1x1x8x8xf32>
    %48 = vector.shape_cast %47 : vector<1x1x8x8xf32> to vector<8x8xf32>
    %cst_69 = arith.constant dense<0.000000e+00> : vector<128x8xf32>
    %49 = tpu.matmul %46, %48, %cst_69 {dimension_numbers = #tpu.dot_dimension_numbers<[1], [0], [0], [1], [0, 0, 1, 1], [], []>} : vector<128x8xf32>, vector<8x8xf32>, vector<128x8xf32> -> vector<128x8xf32>
    %50 = arith.addf %44, %49 : vector<128x8xf32>
    %c0_70 = arith.constant 0 : index
    %c1_71 = arith.constant 1 : index
    %c2_72 = arith.constant 2 : index
    %c0_73 = arith.constant 0 : index
    %51 = vector.load %arg7[%c0_70, %c1_71, %c2_72, %c0_73] : memref<2x10x10x8xf32, #tpu.memory_space<vmem>>, vector<2x8x8x8xf32>
    %52 = vector.shape_cast %51 : vector<2x8x8x8xf32> to vector<128x8xf32>
    %53 = vector.extract_strided_slice %19 {offsets = [1, 2, 0, 0], sizes = [1, 1, 8, 8], strides = [1, 1, 1, 1]} : vector<3x3x8x8xf32> to vector<1x1x8x8xf32>
    %54 = vector.shape_cast %53 : vector<1x1x8x8xf32> to vector<8x8xf32>
    %cst_74 = arith.constant dense<0.000000e+00> : vector<128x8xf32>
    %55 = tpu.matmul %52, %54, %cst_74 {dimension_numbers = #tpu.dot_dimension_numbers<[1], [0], [0], [1], [0, 0, 1, 1], [], []>} : vector<128x8xf32>, vector<8x8xf32>, vector<128x8xf32> -> vector<128x8xf32>
    %56 = arith.addf %50, %55 : vector<128x8xf32>
    %c0_75 = arith.constant 0 : index
    %c2_76 = arith.constant 2 : index
    %c0_77 = arith.constant 0 : index
    %c0_78 = arith.constant 0 : index
    %57 = vector.load %arg7[%c0_75, %c2_76, %c0_77, %c0_78] : memref<2x10x10x8xf32, #tpu.memory_space<vmem>>, vector<2x8x8x8xf32>
    %58 = vector.shape_cast %57 : vector<2x8x8x8xf32> to vector<128x8xf32>
    %59 = vector.extract_strided_slice %19 {offsets = [2, 0, 0, 0], sizes = [1, 1, 8, 8], strides = [1, 1, 1, 1]} : vector<3x3x8x8xf32> to vector<1x1x8x8xf32>
    %60 = vector.shape_cast %59 : vector<1x1x8x8xf32> to vector<8x8xf32>
    %cst_79 = arith.constant dense<0.000000e+00> : vector<128x8xf32>
    %61 = tpu.matmul %58, %60, %cst_79 {dimension_numbers = #tpu.dot_dimension_numbers<[1], [0], [0], [1], [0, 0, 1, 1], [], []>} : vector<128x8xf32>, vector<8x8xf32>, vector<128x8xf32> -> vector<128x8xf32>
    %62 = arith.addf %56, %61 : vector<128x8xf32>
    %c0_80 = arith.constant 0 : index
    %c2_81 = arith.constant 2 : index
    %c1_82 = arith.constant 1 : index
    %c0_83 = arith.constant 0 : index
    %63 = vector.load %arg7[%c0_80, %c2_81, %c1_82, %c0_83] : memref<2x10x10x8xf32, #tpu.memory_space<vmem>>, vector<2x8x8x8xf32>
    %64 = vector.shape_cast %63 : vector<2x8x8x8xf32> to vector<128x8xf32>
    %65 = vector.extract_strided_slice %19 {offsets = [2, 1, 0, 0], sizes = [1, 1, 8, 8], strides = [1, 1, 1, 1]} : vector<3x3x8x8xf32> to vector<1x1x8x8xf32>
    %66 = vector.shape_cast %65 : vector<1x1x8x8xf32> to vector<8x8xf32>
    %cst_84 = arith.constant dense<0.000000e+00> : vector<128x8xf32>
    %67 = tpu.matmul %64, %66, %cst_84 {dimension_numbers = #tpu.dot_dimension_numbers<[1], [0], [0], [1], [0, 0, 1, 1], [], []>} : vector<128x8xf32>, vector<8x8xf32>, vector<128x8xf32> -> vector<128x8xf32>
    %68 = arith.addf %62, %67 : vector<128x8xf32>
    %c0_85 = arith.constant 0 : index
    %c2_86 = arith.constant 2 : index
    %c2_87 = arith.constant 2 : index
    %c0_88 = arith.constant 0 : index
    %69 = vector.load %arg7[%c0_85, %c2_86, %c2_87, %c0_88] : memref<2x10x10x8xf32, #tpu.memory_space<vmem>>, vector<2x8x8x8xf32>
    %70 = vector.shape_cast %69 : vector<2x8x8x8xf32> to vector<128x8xf32>
    %71 = vector.extract_strided_slice %19 {offsets = [2, 2, 0, 0], sizes = [1, 1, 8, 8], strides = [1, 1, 1, 1]} : vector<3x3x8x8xf32> to vector<1x1x8x8xf32>
    %72 = vector.shape_cast %71 : vector<1x1x8x8xf32> to vector<8x8xf32>
    %cst_89 = arith.constant dense<0.000000e+00> : vector<128x8xf32>
    %73 = tpu.matmul %70, %72, %cst_89 {dimension_numbers = #tpu.dot_dimension_numbers<[1], [0], [0], [1], [0, 0, 1, 1], [], []>} : vector<128x8xf32>, vector<8x8xf32>, vector<128x8xf32> -> vector<128x8xf32>
    %74 = arith.addf %68, %73 : vector<128x8xf32>
    %c0_90 = arith.constant 0 : index
    %c0_91 = arith.constant 0 : index
    %75 = vector.load %arg3[%c0_90, %c0_91] : memref<1x8xf32, #tpu.memory_space<vmem>>, vector<1x8xf32>
    %76 = vector.broadcast %75 : vector<1x8xf32> to vector<128x8xf32>
    %77 = arith.addf %74, %76 : vector<128x8xf32>
    %cst_92 = arith.constant 1.000000e-01 : f32
    %78 = vector.broadcast %cst_92 : f32 to vector<128x8xf32>
    %79 = arith.mulf %78, %77 : vector<128x8xf32>
    %80 = arith.maximumf %77, %79 : vector<128x8xf32>
    %81 = vector.shape_cast %80 : vector<128x8xf32> to vector<2x8x8x8xf32>
    %c0_93 = arith.constant 0 : index
    %c1_94 = arith.constant 1 : index
    %c1_95 = arith.constant 1 : index
    %c0_96 = arith.constant 0 : index
    %82 = vector.load %arg8[%c0_93, %c1_94, %c1_95, %c0_96] : memref<2x10x10x8xf32, #tpu.memory_space<vmem>>, vector<2x8x8x8xf32>
    tpu.vector_store %arg8[%c0_93, %c1_94, %c1_95, %c0_96], %81 {strides = array<i32>} : memref<2x10x10x8xf32, #tpu.memory_space<vmem>>, vector<2x8x8x8xf32>,
    %c0_97 = arith.constant 0 : index
    %c0_98 = arith.constant 0 : index
    %c0_99 = arith.constant 0 : index
    %c0_100 = arith.constant 0 : index
    %83 = vector.load %arg4[%c0_97, %c0_98, %c0_99, %c0_100] : memref<3x3x8x8xf32, #tpu.memory_space<vmem>>, vector<3x3x8x8xf32>
    %cst_101 = arith.constant 0.000000e+00 : f32
    %84 = vector.broadcast %cst_101 : f32 to vector<128x8xf32>
    %c0_102 = arith.constant 0 : index
    %c0_103 = arith.constant 0 : index
    %c0_104 = arith.constant 0 : index
    %c0_105 = arith.constant 0 : index
    %85 = vector.load %arg8[%c0_102, %c0_103, %c0_104, %c0_105] : memref<2x10x10x8xf32, #tpu.memory_space<vmem>>, vector<2x8x8x8xf32>
    %86 = vector.shape_cast %85 : vector<2x8x8x8xf32> to vector<128x8xf32>
    %87 = vector.extract_strided_slice %83 {offsets = [0, 0, 0, 0], sizes = [1, 1, 8, 8], strides = [1, 1, 1, 1]} : vector<3x3x8x8xf32> to vector<1x1x8x8xf32>
    %88 = vector.shape_cast %87 : vector<1x1x8x8xf32> to vector<8x8xf32>
    %cst_106 = arith.constant dense<0.000000e+00> : vector<128x8xf32>
    %89 = tpu.matmul %86, %88, %cst_106 {dimension_numbers = #tpu.dot_dimension_numbers<[1], [0], [0], [1], [0, 0, 1, 1], [], []>} : vector<128x8xf32>, vector<8x8xf32>, vector<128x8xf32> -> vector<128x8xf32>
    %90 = arith.addf %84, %89 : vector<128x8xf32>
    %c0_107 = arith.constant 0 : index
    %c0_108 = arith.constant 0 : index
    %c1_109 = arith.constant 1 : index
    %c0_110 = arith.constant 0 : index
    %91 = vector.load %arg8[%c0_107, %c0_108, %c1_109, %c0_110] : memref<2x10x10x8xf32, #tpu.memory_space<vmem>>, vector<2x8x8x8xf32>
    %92 = vector.shape_cast %91 : vector<2x8x8x8xf32> to vector<128x8xf32>
    %93 = vector.extract_strided_slice %83 {offsets = [0, 1, 0, 0], sizes = [1, 1, 8, 8], strides = [1, 1, 1, 1]} : vector<3x3x8x8xf32> to vector<1x1x8x8xf32>
    %94 = vector.shape_cast %93 : vector<1x1x8x8xf32> to vector<8x8xf32>
    %cst_111 = arith.constant dense<0.000000e+00> : vector<128x8xf32>
    %95 = tpu.matmul %92, %94, %cst_111 {dimension_numbers = #tpu.dot_dimension_numbers<[1], [0], [0], [1], [0, 0, 1, 1], [], []>} : vector<128x8xf32>, vector<8x8xf32>, vector<128x8xf32> -> vector<128x8xf32>
    %96 = arith.addf %90, %95 : vector<128x8xf32>
    %c0_112 = arith.constant 0 : index
    %c0_113 = arith.constant 0 : index
    %c2_114 = arith.constant 2 : index
    %c0_115 = arith.constant 0 : index
    %97 = vector.load %arg8[%c0_112, %c0_113, %c2_114, %c0_115] : memref<2x10x10x8xf32, #tpu.memory_space<vmem>>, vector<2x8x8x8xf32>
    %98 = vector.shape_cast %97 : vector<2x8x8x8xf32> to vector<128x8xf32>
    %99 = vector.extract_strided_slice %83 {offsets = [0, 2, 0, 0], sizes = [1, 1, 8, 8], strides = [1, 1, 1, 1]} : vector<3x3x8x8xf32> to vector<1x1x8x8xf32>
    %100 = vector.shape_cast %99 : vector<1x1x8x8xf32> to vector<8x8xf32>
    %cst_116 = arith.constant dense<0.000000e+00> : vector<128x8xf32>
    %101 = tpu.matmul %98, %100, %cst_116 {dimension_numbers = #tpu.dot_dimension_numbers<[1], [0], [0], [1], [0, 0, 1, 1], [], []>} : vector<128x8xf32>, vector<8x8xf32>, vector<128x8xf32> -> vector<128x8xf32>
    %102 = arith.addf %96, %101 : vector<128x8xf32>
    %c0_117 = arith.constant 0 : index
    %c1_118 = arith.constant 1 : index
    %c0_119 = arith.constant 0 : index
    %c0_120 = arith.constant 0 : index
    %103 = vector.load %arg8[%c0_117, %c1_118, %c0_119, %c0_120] : memref<2x10x10x8xf32, #tpu.memory_space<vmem>>, vector<2x8x8x8xf32>
    %104 = vector.shape_cast %103 : vector<2x8x8x8xf32> to vector<128x8xf32>
    %105 = vector.extract_strided_slice %83 {offsets = [1, 0, 0, 0], sizes = [1, 1, 8, 8], strides = [1, 1, 1, 1]} : vector<3x3x8x8xf32> to vector<1x1x8x8xf32>
    %106 = vector.shape_cast %105 : vector<1x1x8x8xf32> to vector<8x8xf32>
    %cst_121 = arith.constant dense<0.000000e+00> : vector<128x8xf32>
    %107 = tpu.matmul %104, %106, %cst_121 {dimension_numbers = #tpu.dot_dimension_numbers<[1], [0], [0], [1], [0, 0, 1, 1], [], []>} : vector<128x8xf32>, vector<8x8xf32>, vector<128x8xf32> -> vector<128x8xf32>
    %108 = arith.addf %102, %107 : vector<128x8xf32>
    %c0_122 = arith.constant 0 : index
    %c1_123 = arith.constant 1 : index
    %c1_124 = arith.constant 1 : index
    %c0_125 = arith.constant 0 : index
    %109 = vector.load %arg8[%c0_122, %c1_123, %c1_124, %c0_125] : memref<2x10x10x8xf32, #tpu.memory_space<vmem>>, vector<2x8x8x8xf32>
    %110 = vector.shape_cast %109 : vector<2x8x8x8xf32> to vector<128x8xf32>
    %111 = vector.extract_strided_slice %83 {offsets = [1, 1, 0, 0], sizes = [1, 1, 8, 8], strides = [1, 1, 1, 1]} : vector<3x3x8x8xf32> to vector<1x1x8x8xf32>
    %112 = vector.shape_cast %111 : vector<1x1x8x8xf32> to vector<8x8xf32>
    %cst_126 = arith.constant dense<0.000000e+00> : vector<128x8xf32>
    %113 = tpu.matmul %110, %112, %cst_126 {dimension_numbers = #tpu.dot_dimension_numbers<[1], [0], [0], [1], [0, 0, 1, 1], [], []>} : vector<128x8xf32>, vector<8x8xf32>, vector<128x8xf32> -> vector<128x8xf32>
    %114 = arith.addf %108, %113 : vector<128x8xf32>
    %c0_127 = arith.constant 0 : index
    %c1_128 = arith.constant 1 : index
    %c2_129 = arith.constant 2 : index
    %c0_130 = arith.constant 0 : index
    %115 = vector.load %arg8[%c0_127, %c1_128, %c2_129, %c0_130] : memref<2x10x10x8xf32, #tpu.memory_space<vmem>>, vector<2x8x8x8xf32>
    %116 = vector.shape_cast %115 : vector<2x8x8x8xf32> to vector<128x8xf32>
    %117 = vector.extract_strided_slice %83 {offsets = [1, 2, 0, 0], sizes = [1, 1, 8, 8], strides = [1, 1, 1, 1]} : vector<3x3x8x8xf32> to vector<1x1x8x8xf32>
    %118 = vector.shape_cast %117 : vector<1x1x8x8xf32> to vector<8x8xf32>
    %cst_131 = arith.constant dense<0.000000e+00> : vector<128x8xf32>
    %119 = tpu.matmul %116, %118, %cst_131 {dimension_numbers = #tpu.dot_dimension_numbers<[1], [0], [0], [1], [0, 0, 1, 1], [], []>} : vector<128x8xf32>, vector<8x8xf32>, vector<128x8xf32> -> vector<128x8xf32>
    %120 = arith.addf %114, %119 : vector<128x8xf32>
    %c0_132 = arith.constant 0 : index
    %c2_133 = arith.constant 2 : index
    %c0_134 = arith.constant 0 : index
    %c0_135 = arith.constant 0 : index
    %121 = vector.load %arg8[%c0_132, %c2_133, %c0_134, %c0_135] : memref<2x10x10x8xf32, #tpu.memory_space<vmem>>, vector<2x8x8x8xf32>
    %122 = vector.shape_cast %121 : vector<2x8x8x8xf32> to vector<128x8xf32>
    %123 = vector.extract_strided_slice %83 {offsets = [2, 0, 0, 0], sizes = [1, 1, 8, 8], strides = [1, 1, 1, 1]} : vector<3x3x8x8xf32> to vector<1x1x8x8xf32>
    %124 = vector.shape_cast %123 : vector<1x1x8x8xf32> to vector<8x8xf32>
    %cst_136 = arith.constant dense<0.000000e+00> : vector<128x8xf32>
    %125 = tpu.matmul %122, %124, %cst_136 {dimension_numbers = #tpu.dot_dimension_numbers<[1], [0], [0], [1], [0, 0, 1, 1], [], []>} : vector<128x8xf32>, vector<8x8xf32>, vector<128x8xf32> -> vector<128x8xf32>
    %126 = arith.addf %120, %125 : vector<128x8xf32>
    %c0_137 = arith.constant 0 : index
    %c2_138 = arith.constant 2 : index
    %c1_139 = arith.constant 1 : index
    %c0_140 = arith.constant 0 : index
    %127 = vector.load %arg8[%c0_137, %c2_138, %c1_139, %c0_140] : memref<2x10x10x8xf32, #tpu.memory_space<vmem>>, vector<2x8x8x8xf32>
    %128 = vector.shape_cast %127 : vector<2x8x8x8xf32> to vector<128x8xf32>
    %129 = vector.extract_strided_slice %83 {offsets = [2, 1, 0, 0], sizes = [1, 1, 8, 8], strides = [1, 1, 1, 1]} : vector<3x3x8x8xf32> to vector<1x1x8x8xf32>
    %130 = vector.shape_cast %129 : vector<1x1x8x8xf32> to vector<8x8xf32>
    %cst_141 = arith.constant dense<0.000000e+00> : vector<128x8xf32>
    %131 = tpu.matmul %128, %130, %cst_141 {dimension_numbers = #tpu.dot_dimension_numbers<[1], [0], [0], [1], [0, 0, 1, 1], [], []>} : vector<128x8xf32>, vector<8x8xf32>, vector<128x8xf32> -> vector<128x8xf32>
    %132 = arith.addf %126, %131 : vector<128x8xf32>
    %c0_142 = arith.constant 0 : index
    %c2_143 = arith.constant 2 : index
    %c2_144 = arith.constant 2 : index
    %c0_145 = arith.constant 0 : index
    %133 = vector.load %arg8[%c0_142, %c2_143, %c2_144, %c0_145] : memref<2x10x10x8xf32, #tpu.memory_space<vmem>>, vector<2x8x8x8xf32>
    %134 = vector.shape_cast %133 : vector<2x8x8x8xf32> to vector<128x8xf32>
    %135 = vector.extract_strided_slice %83 {offsets = [2, 2, 0, 0], sizes = [1, 1, 8, 8], strides = [1, 1, 1, 1]} : vector<3x3x8x8xf32> to vector<1x1x8x8xf32>
    %136 = vector.shape_cast %135 : vector<1x1x8x8xf32> to vector<8x8xf32>
    %cst_146 = arith.constant dense<0.000000e+00> : vector<128x8xf32>
    %137 = tpu.matmul %134, %136, %cst_146 {dimension_numbers = #tpu.dot_dimension_numbers<[1], [0], [0], [1], [0, 0, 1, 1], [], []>} : vector<128x8xf32>, vector<8x8xf32>, vector<128x8xf32> -> vector<128x8xf32>
    %138 = arith.addf %132, %137 : vector<128x8xf32>
    %c0_147 = arith.constant 0 : index
    %c0_148 = arith.constant 0 : index
    %139 = vector.load %arg5[%c0_147, %c0_148] : memref<1x8xf32, #tpu.memory_space<vmem>>, vector<1x8xf32>
    %140 = vector.broadcast %139 : vector<1x8xf32> to vector<128x8xf32>
    %141 = arith.addf %138, %140 : vector<128x8xf32>
    %cst_149 = arith.constant 1.000000e-01 : f32
    %142 = vector.broadcast %cst_149 : f32 to vector<128x8xf32>
    %143 = arith.mulf %142, %141 : vector<128x8xf32>
    %144 = arith.maximumf %141, %143 : vector<128x8xf32>
    %145 = vector.shape_cast %144 : vector<128x8xf32> to vector<2x8x8x8xf32>
    %c0_150 = arith.constant 0 : index
    %c0_151 = arith.constant 0 : index
    %c0_152 = arith.constant 0 : index
    %c0_153 = arith.constant 0 : index
    %146 = vector.load %arg6[%c0_150, %c0_151, %c0_152, %c0_153] : memref<2x8x8x8xf32, #tpu.memory_space<vmem>>, vector<2x8x8x8xf32>
    tpu.vector_store %arg6[%c0_150, %c0_151, %c0_152, %c0_153], %145 {strides = array<i32>} : memref<2x8x8x8xf32, #tpu.memory_space<vmem>>, vector<2x8x8x8xf32>,
    return
  }
  func.func @transform_0(%arg0: i32) -> (i32, i32, i32, i32, i32) {
    %c0_i32 = arith.constant 0 : i32
    %c0_i32_0 = arith.constant 0 : i32
    %c0_i32_1 = arith.constant 0 : i32
    %c0_i32_2 = arith.constant 0 : i32
    %c0_i32_3 = arith.constant 0 : i32
    return %arg0, %c0_i32, %c0_i32_0, %c0_i32_1, %c0_i32_2 : i32, i32, i32, i32, i32
  }
  func.func @transform_1(%arg0: i32) -> (i32, i32, i32, i32) {
    %c0_i32 = arith.constant 0 : i32
    %c0_i32_0 = arith.constant 0 : i32
    %c0_i32_1 = arith.constant 0 : i32
    %c0_i32_2 = arith.constant 0 : i32
    %c0_i32_3 = arith.constant 0 : i32
    return %c0_i32, %c0_i32_0, %c0_i32_1, %c0_i32_2 : i32, i32, i32, i32
  }
  func.func @transform_2(%arg0: i32) -> (i32, i32) {
    %c0_i32 = arith.constant 0 : i32
    %c0_i32_0 = arith.constant 0 : i32
    %c0_i32_1 = arith.constant 0 : i32
    return %c0_i32, %c0_i32_0 : i32, i32
  }
  func.func @transform_3(%arg0: i32) -> (i32, i32, i32, i32) {
    %c0_i32 = arith.constant 0 : i32
    %c0_i32_0 = arith.constant 0 : i32
    %c0_i32_1 = arith.constant 0 : i32
    %c0_i32_2 = arith.constant 0 : i32
    %c0_i32_3 = arith.constant 0 : i32
    return %c0_i32, %c0_i32_0, %c0_i32_1, %c0_i32_2 : i32, i32, i32, i32
  }
  func.func @transform_4(%arg0: i32) -> (i32, i32) {
    %c0_i32 = arith.constant 0 : i32
    %c0_i32_0 = arith.constant 0 : i32
    %c0_i32_1 = arith.constant 0 : i32
    return %c0_i32, %c0_i32_0 : i32, i32
  }
  func.func @transform_5(%arg0: i32) -> (i32, i32, i32, i32) {
    %c0_i32 = arith.constant 0 : i32
    %c0_i32_0 = arith.constant 0 : i32
    %c0_i32_1 = arith.constant 0 : i32
    %c0_i32_2 = arith.constant 0 : i32
    return %arg0, %c0_i32, %c0_i32_0, %c0_i32_1 : i32, i32, i32, i32
  }
}

</mosaic_0001>

<llo_original>
// kernel: down_forward.1
$region0: #{down_forward.1}
  #allocation0 [shape = 'u32[]', space=smem, size = 0x4, offset = 0x4, fixed_abs, tag = 'smem constant byte address 0x4 - core index']
  #allocation1 [shape = 'u32[144,128]{1,0:T(1,128)}', space=vmem, size = 0x12000, scoped, tag = 'internal scratch']
  #allocation2 [shape = 'f32[2,10,10,8]{3,2,1,0:T(8,128)}', space=vmem, size = 0x28000, scoped, tag = 'scratch operand']
  #allocation3 [shape = 'f32[2,10,10,8]{3,2,1,0:T(8,128)}', space=vmem, size = 0x28000, scoped, tag = 'scratch operand']
  %s0 = inlined_call_operand.vmem [shape: f32[2,8,2,8,8], index: 0, kind: input, shape index: {}]
  %s1 = inlined_call_operand.vmem [shape: f32[3,3,8,8], index: 1, kind: input, shape index: {}]
  %s2 = inlined_call_operand.vmem [shape: f32[1,8], index: 2, kind: input, shape index: {}]
  %s3 = inlined_call_operand.vmem [shape: f32[3,3,8,8], index: 3, kind: input, shape index: {}]
  %s4 = inlined_call_operand.vmem [shape: f32[1,8], index: 4, kind: input, shape index: {}]
  %s5 = inlined_call_operand.vmem [shape: f32[2,8,8,8], index: 5, kind: output, shape index: {}]
  %s6 = sld [smem:[#allocation0]]
  $region30: #{down_forward.1} parent=0
    _
  %s8 = ssub.s32 1, %s6
  %s9 = scalar_select 0, %s8, %s6
  // Predicated region
  $region2: #{down_forward.1} parent=0 // pred_check
    _
  $region3: #{down_forward.1} parent=0 // pred_check_branch
    %11 = sbr.rel (0) target = $region5
  $region4: #{down_forward.1} parent=0 // pred_region
    _
  $region5: #{down_forward.1} parent=0 // pred_fallthru
    _
  // Predicated region
  $region6: #{down_forward.1} parent=0 // pred_check
    _
  $region7: #{down_forward.1} parent=0 // pred_check_branch
    %13 = sbr.rel (0) target = $region9
  $region8: #{down_forward.1} parent=0 // pred_region
    _
  $region9: #{down_forward.1} parent=0 // pred_fallthru
    _
  // Predicated region
  $region10: #{down_forward.1} parent=0 // pred_check
    _
  $region11: #{down_forward.1} parent=0 // pred_check_branch
    %15 = sbr.rel (0) target = $region13
  $region12: #{down_forward.1} parent=0 // pred_region
    _
  $region13: #{down_forward.1} parent=0 // pred_fallthru
    _
  // Predicated region
  $region14: #{down_forward.1} parent=0 // pred_check
    _
  $region15: #{down_forward.1} parent=0 // pred_check_branch
    %17 = sbr.rel (0) target = $region17
  $region16: #{down_forward.1} parent=0 // pred_region
    _
  $region17: #{down_forward.1} parent=0 // pred_fallthru
    _
  // Predicated region
  $region18: #{down_forward.1} parent=0 // pred_check
    _
  $region19: #{down_forward.1} parent=0 // pred_check_branch
    %19 = sbr.rel (0) target = $region21
  $region20: #{down_forward.1} parent=0 // pred_region
    _
  $region21: #{down_forward.1} parent=0 // pred_fallthru
    _
  %vm20 = vcmask 64512
  %21 = vst.msk [vmem:[#allocation2] sm:$0xff] %vm20, 0.0
  %vm22 = vcmask 58368
  %23 = vst.msk [vmem:[#allocation2 + $0x8] sm:$0x3] %vm22, 0.0
  %24 = vst.msk [vmem:[#allocation2 + $0xa0] sm:$0xff] %vm20, 0.0
  %25 = vst.msk [vmem:[#allocation2 + $0xa8] sm:$0x3] %vm22, 0.0
  %s26 = scalar_lea.vmem [#allocation2], 144
  %27 = vst.msk [vmem:[%s26] sm:$0xff] %vm20, 0.0
  %28 = vst.msk [vmem:[%s26 + $0x8] sm:$0x3] %vm22, 0.0
  %29 = vst.msk [vmem:[%s26 + $0xa0] sm:$0xff] %vm20, 0.0
  %30 = vst.msk [vmem:[%s26 + $0xa8] sm:$0x3] %vm22, 0.0
  %vm31 = vcmask 57344
  %32 = vst.msk [vmem:[#allocation2] sm:$0x1] %vm31, 0.0
  %33 = vst.msk [vmem:[#allocation2 + $0x10] sm:$0x1] %vm31, 0.0
  %34 = vst.msk [vmem:[#allocation2 + $0x20] sm:$0x1] %vm31, 0.0
  %35 = vst.msk [vmem:[#allocation2 + $0x30] sm:$0x1] %vm31, 0.0
  %36 = vst.msk [vmem:[#allocation2 + $0x40] sm:$0x1] %vm31, 0.0
  %37 = vst.msk [vmem:[#allocation2 + $0x50] sm:$0x1] %vm31, 0.0
  %38 = vst.msk [vmem:[#allocation2 + $0x60] sm:$0x1] %vm31, 0.0
  %39 = vst.msk [vmem:[#allocation2 + $0x70] sm:$0x1] %vm31, 0.0
  %40 = vst.msk [vmem:[#allocation2 + $0x80] sm:$0x1] %vm31, 0.0
  %41 = vst.msk [vmem:[#allocation2 + $0x90] sm:$0x1] %vm31, 0.0
  %42 = vst.msk [vmem:[#allocation2 + $0xa0] sm:$0x1] %vm31, 0.0
  %43 = vst.msk [vmem:[#allocation2 + $0xb0] sm:$0x1] %vm31, 0.0
  %44 = vst.msk [vmem:[#allocation2 + $0xc0] sm:$0x1] %vm31, 0.0
  %45 = vst.msk [vmem:[#allocation2 + $0xd0] sm:$0x1] %vm31, 0.0
  %46 = vst.msk [vmem:[#allocation2 + $0xe0] sm:$0x1] %vm31, 0.0
  %47 = vst.msk [vmem:[#allocation2 + $0xf0] sm:$0x1] %vm31, 0.0
  %48 = vst.msk [vmem:[#allocation2 + $0x100] sm:$0x1] %vm31, 0.0
  %49 = vst.msk [vmem:[#allocation2 + $0x110] sm:$0x1] %vm31, 0.0
  %50 = vst.msk [vmem:[#allocation2 + $0x120] sm:$0x1] %vm31, 0.0
  %51 = vst.msk [vmem:[#allocation2 + $0x130] sm:$0x1] %vm31, 0.0
  %52 = vst.msk [vmem:[#allocation2 + $0x9] sm:$0x1] %vm31, 0.0
  %53 = vst.msk [vmem:[#allocation2 + $0x19] sm:$0x1] %vm31, 0.0
  %54 = vst.msk [vmem:[#allocation2 + $0x29] sm:$0x1] %vm31, 0.0
  %55 = vst.msk [vmem:[#allocation2 + $0x39] sm:$0x1] %vm31, 0.0
  %56 = vst.msk [vmem:[#allocation2 + $0x49] sm:$0x1] %vm31, 0.0
  %57 = vst.msk [vmem:[#allocation2 + $0x59] sm:$0x1] %vm31, 0.0
  %58 = vst.msk [vmem:[#allocation2 + $0x69] sm:$0x1] %vm31, 0.0
  %59 = vst.msk [vmem:[#allocation2 + $0x79] sm:$0x1] %vm31, 0.0
  %60 = vst.msk [vmem:[#allocation2 + $0x89] sm:$0x1] %vm31, 0.0
  %61 = vst.msk [vmem:[#allocation2 + $0x99] sm:$0x1] %vm31, 0.0
  %62 = vst.msk [vmem:[#allocation2 + $0xa9] sm:$0x1] %vm31, 0.0
  %63 = vst.msk [vmem:[#allocation2 + $0xb9] sm:$0x1] %vm31, 0.0
  %64 = vst.msk [vmem:[#allocation2 + $0xc9] sm:$0x1] %vm31, 0.0
  %65 = vst.msk [vmem:[#allocation2 + $0xd9] sm:$0x1] %vm31, 0.0
  %66 = vst.msk [vmem:[#allocation2 + $0xe9] sm:$0x1] %vm31, 0.0
  %67 = vst.msk [vmem:[#allocation2 + $0xf9] sm:$0x1] %vm31, 0.0
  %68 = vst.msk [vmem:[#allocation2 + $0x109] sm:$0x1] %vm31, 0.0
  %69 = vst.msk [vmem:[#allocation2 + $0x119] sm:$0x1] %vm31, 0.0
  %70 = vst.msk [vmem:[#allocation2 + $0x129] sm:$0x1] %vm31, 0.0
  %71 = vst.msk [vmem:[#allocation2 + $0x139] sm:$0x1] %vm31, 0.0
  %72 = vst.msk [vmem:[#allocation3] sm:$0xff] %vm20, 0.0
  %73 = vst.msk [vmem:[#allocation3 + $0x8] sm:$0x3] %vm22, 0.0
  %74 = vst.msk [vmem:[#allocation3 + $0xa0] sm:$0xff] %vm20, 0.0
  %75 = vst.msk [vmem:[#allocation3 + $0xa8] sm:$0x3] %vm22, 0.0
  %s76 = scalar_lea.vmem [#allocation3], 144
  %77 = vst.msk [vmem:[%s76] sm:$0xff] %vm20, 0.0
  %78 = vst.msk [vmem:[%s76 + $0x8] sm:$0x3] %vm22, 0.0
  %79 = vst.msk [vmem:[%s76 + $0xa0] sm:$0xff] %vm20, 0.0
  %80 = vst.msk [vmem:[%s76 + $0xa8] sm:$0x3] %vm22, 0.0
  %81 = vst.msk [vmem:[#allocation3] sm:$0x1] %vm31, 0.0
  %82 = vst.msk [vmem:[#allocation3 + $0x10] sm:$0x1] %vm31, 0.0
  %83 = vst.msk [vmem:[#allocation3 + $0x20] sm:$0x1] %vm31, 0.0
  %84 = vst.msk [vmem:[#allocation3 + $0x30] sm:$0x1] %vm31, 0.0
  %85 = vst.msk [vmem:[#allocation3 + $0x40] sm:$0x1] %vm31, 0.0
  %86 = vst.msk [vmem:[#allocation3 + $0x50] sm:$0x1] %vm31, 0.0
  %87 = vst.msk [vmem:[#allocation3 + $0x60] sm:$0x1] %vm31, 0.0
  %88 = vst.msk [vmem:[#allocation3 + $0x70] sm:$0x1] %vm31, 0.0
  %89 = vst.msk [vmem:[#allocation3 + $0x80] sm:$0x1] %vm31, 0.0
  %90 = vst.msk [vmem:[#allocation3 + $0x90] sm:$0x1] %vm31, 0.0
  %91 = vst.msk [vmem:[#allocation3 + $0xa0] sm:$0x1] %vm31, 0.0
  %92 = vst.msk [vmem:[#allocation3 + $0xb0] sm:$0x1] %vm31, 0.0
  %93 = vst.msk [vmem:[#allocation3 + $0xc0] sm:$0x1] %vm31, 0.0
  %94 = vst.msk [vmem:[#allocation3 + $0xd0] sm:$0x1] %vm31, 0.0
  %95 = vst.msk [vmem:[#allocation3 + $0xe0] sm:$0x1] %vm31, 0.0
  %96 = vst.msk [vmem:[#allocation3 + $0xf0] sm:$0x1] %vm31, 0.0
  %97 = vst.msk [vmem:[#allocation3 + $0x100] sm:$0x1] %vm31, 0.0
  %98 = vst.msk [vmem:[#allocation3 + $0x110] sm:$0x1] %vm31, 0.0
  %99 = vst.msk [vmem:[#allocation3 + $0x120] sm:$0x1] %vm31, 0.0
  %100 = vst.msk [vmem:[#allocation3 + $0x130] sm:$0x1] %vm31, 0.0
  %101 = vst.msk [vmem:[#allocation3 + $0x9] sm:$0x1] %vm31, 0.0
  %102 = vst.msk [vmem:[#allocation3 + $0x19] sm:$0x1] %vm31, 0.0
  %103 = vst.msk [vmem:[#allocation3 + $0x29] sm:$0x1] %vm31, 0.0
  %104 = vst.msk [vmem:[#allocation3 + $0x39] sm:$0x1] %vm31, 0.0
  %105 = vst.msk [vmem:[#allocation3 + $0x49] sm:$0x1] %vm31, 0.0
  %106 = vst.msk [vmem:[#allocation3 + $0x59] sm:$0x1] %vm31, 0.0
  %107 = vst.msk [vmem:[#allocation3 + $0x69] sm:$0x1] %vm31, 0.0
  %108 = vst.msk [vmem:[#allocation3 + $0x79] sm:$0x1] %vm31, 0.0
  %109 = vst.msk [vmem:[#allocation3 + $0x89] sm:$0x1] %vm31, 0.0
  %110 = vst.msk [vmem:[#allocation3 + $0x99] sm:$0x1] %vm31, 0.0
  %111 = vst.msk [vmem:[#allocation3 + $0xa9] sm:$0x1] %vm31, 0.0
  %112 = vst.msk [vmem:[#allocation3 + $0xb9] sm:$0x1] %vm31, 0.0
  %113 = vst.msk [vmem:[#allocation3 + $0xc9] sm:$0x1] %vm31, 0.0
  %114 = vst.msk [vmem:[#allocation3 + $0xd9] sm:$0x1] %vm31, 0.0
  %115 = vst.msk [vmem:[#allocation3 + $0xe9] sm:$0x1] %vm31, 0.0
  %116 = vst.msk [vmem:[#allocation3 + $0xf9] sm:$0x1] %vm31, 0.0
  %117 = vst.msk [vmem:[#allocation3 + $0x109] sm:$0x1] %vm31, 0.0
  %118 = vst.msk [vmem:[#allocation3 + $0x119] sm:$0x1] %vm31, 0.0
  %119 = vst.msk [vmem:[#allocation3 + $0x129] sm:$0x1] %vm31, 0.0
  %120 = vst.msk [vmem:[#allocation3 + $0x139] sm:$0x1] %vm31, 0.0
  %v121 = vld [vmem:[%s0] sm:$0xff]
  %v122 = vld [vmem:[%s0 + $0x8] sm:$0xff]
  %v123 = vld [vmem:[%s0 + $0x10] sm:$0xff]
  %v124 = vld [vmem:[%s0 + $0x18] sm:$0xff]
  %v125 = vld [vmem:[%s0 + $0x20] sm:$0xff]
  %v126 = vld [vmem:[%s0 + $0x28] sm:$0xff]
  %v127 = vld [vmem:[%s0 + $0x30] sm:$0xff]
  %v128 = vld [vmem:[%s0 + $0x38] sm:$0xff]
  %v129 = vld [vmem:[%s0 + $0x40] sm:$0xff]
  %v130 = vld [vmem:[%s0 + $0x48] sm:$0xff]
  %v131 = vld [vmem:[%s0 + $0x50] sm:$0xff]
  %v132 = vld [vmem:[%s0 + $0x58] sm:$0xff]
  %v133 = vld [vmem:[%s0 + $0x60] sm:$0xff]
  %v134 = vld [vmem:[%s0 + $0x68] sm:$0xff]
  %v135 = vld [vmem:[%s0 + $0x70] sm:$0xff]
  %v136 = vld [vmem:[%s0 + $0x78] sm:$0xff]
  %v137 = vld [vmem:[%s0 + $0x80] sm:$0xff]
  %v138 = vld [vmem:[%s0 + $0x88] sm:$0xff]
  %v139 = vld [vmem:[%s0 + $0x90] sm:$0xff]
  %v140 = vld [vmem:[%s0 + $0x98] sm:$0xff]
  %v141 = vld [vmem:[%s0 + $0xa0] sm:$0xff]
  %v142 = vld [vmem:[%s0 + $0xa8] sm:$0xff]
  %v143 = vld [vmem:[%s0 + $0xb0] sm:$0xff]
  %v144 = vld [vmem:[%s0 + $0xb8] sm:$0xff]
  %v145 = vld [vmem:[%s0 + $0xc0] sm:$0xff]
  %v146 = vld [vmem:[%s0 + $0xc8] sm:$0xff]
  %v147 = vld [vmem:[%s0 + $0xd0] sm:$0xff]
  %v148 = vld [vmem:[%s0 + $0xd8] sm:$0xff]
  %v149 = vld [vmem:[%s0 + $0xe0] sm:$0xff]
  %v150 = vld [vmem:[%s0 + $0xe8] sm:$0xff]
  %v151 = vld [vmem:[%s0 + $0xf0] sm:$0xff]
  %v152 = vld [vmem:[%s0 + $0xf8] sm:$0xff]
  %v153 = vadd.f32 %v121, %v122
  %v154 = vadd.f32 %v123, %v124
  %v155 = vadd.f32 %v125, %v126
  %v156 = vadd.f32 %v127, %v128
  %v157 = vadd.f32 %v129, %v130
  %v158 = vadd.f32 %v131, %v132
  %v159 = vadd.f32 %v133, %v134
  %v160 = vadd.f32 %v135, %v136
  %v161 = vadd.f32 %v137, %v138
  %v162 = vadd.f32 %v139, %v140
  %v163 = vadd.f32 %v141, %v142
  %v164 = vadd.f32 %v143, %v144
  %v165 = vadd.f32 %v145, %v146
  %v166 = vadd.f32 %v147, %v148
  %v167 = vadd.f32 %v149, %v150
  %v168 = vadd.f32 %v151, %v152
  %s169 = scalar_lea.vmem [#allocation2], 16
  %170 = vst.msk [vmem:[%s169 + $0x1] sm:$0xff] %vm20, %v153
  %171 = vst.msk [vmem:[%s169 + $0x11] sm:$0xff] %vm20, %v154
  %172 = vst.msk [vmem:[%s169 + $0x21] sm:$0xff] %vm20, %v155
  %173 = vst.msk [vmem:[%s169 + $0x31] sm:$0xff] %vm20, %v156
  %174 = vst.msk [vmem:[%s169 + $0x41] sm:$0xff] %vm20, %v157
  %175 = vst.msk [vmem:[%s169 + $0x51] sm:$0xff] %vm20, %v158
  %176 = vst.msk [vmem:[%s169 + $0x61] sm:$0xff] %vm20, %v159
  %177 = vst.msk [vmem:[%s169 + $0x71] sm:$0xff] %vm20, %v160
  %178 = vst.msk [vmem:[%s169 + $0xa1] sm:$0xff] %vm20, %v161
  %179 = vst.msk [vmem:[%s169 + $0xb1] sm:$0xff] %vm20, %v162
  %180 = vst.msk [vmem:[%s169 + $0xc1] sm:$0xff] %vm20, %v163
  %181 = vst.msk [vmem:[%s169 + $0xd1] sm:$0xff] %vm20, %v164
  %182 = vst.msk [vmem:[%s169 + $0xe1] sm:$0xff] %vm20, %v165
  %183 = vst.msk [vmem:[%s169 + $0xf1] sm:$0xff] %vm20, %v166
  %184 = vst.msk [vmem:[%s169 + $0x101] sm:$0xff] %vm20, %v167
  %185 = vst.msk [vmem:[%s169 + $0x111] sm:$0xff] %vm20, %v168
  %v186 = vld [vmem:[%s1] sm:$0xff]
  %v187 = vld [vmem:[%s1 + $0x8] sm:$0xff]
  %v188 = vld [vmem:[%s1 + $0x10] sm:$0xff]
  %v189 = vld [vmem:[%s1 + $0x18] sm:$0xff]
  %v190 = vld [vmem:[%s1 + $0x20] sm:$0xff]
  %v191 = vld [vmem:[%s1 + $0x28] sm:$0xff]
  %v192 = vld [vmem:[%s1 + $0x30] sm:$0xff]
  %v193 = vld [vmem:[%s1 + $0x38] sm:$0xff]
  %v194 = vld [vmem:[%s1 + $0x40] sm:$0xff]
  %v195 = vld [vmem:[#allocation2] sm:$0xff]
  %v196 = vld [vmem:[#allocation2 + $0x10] sm:$0xff]
  %v197 = vld [vmem:[#allocation2 + $0x20] sm:$0xff]
  %v198 = vld [vmem:[#allocation2 + $0x30] sm:$0xff]
  %v199 = vld [vmem:[#allocation2 + $0x40] sm:$0xff]
  %v200 = vld [vmem:[#allocation2 + $0x50] sm:$0xff]
  %v201 = vld [vmem:[#allocation2 + $0x60] sm:$0xff]
  %v202 = vld [vmem:[#allocation2 + $0x70] sm:$0xff]
  %v203 = vld [vmem:[#allocation2 + $0xa0] sm:$0xff]
  %v204 = vld [vmem:[#allocation2 + $0xb0] sm:$0xff]
  %v205 = vld [vmem:[#allocation2 + $0xc0] sm:$0xff]
  %v206 = vld [vmem:[#allocation2 + $0xd0] sm:$0xff]
  %v207 = vld [vmem:[#allocation2 + $0xe0] sm:$0xff]
  %v208 = vld [vmem:[#allocation2 + $0xf0] sm:$0xff]
  %v209 = vld [vmem:[#allocation2 + $0x100] sm:$0xff]
  %v210 = vld [vmem:[#allocation2 + $0x110] sm:$0xff]
  %v211 = vld [vmem:[#allocation2 + $0x1] sm:$0xff]
  %v212 = vld [vmem:[#allocation2 + $0x11] sm:$0xff]
  %v213 = vld [vmem:[#allocation2 + $0x21] sm:$0xff]
  %v214 = vld [vmem:[#allocation2 + $0x31] sm:$0xff]
  %v215 = vld [vmem:[#allocation2 + $0x41] sm:$0xff]
  %v216 = vld [vmem:[#allocation2 + $0x51] sm:$0xff]
  %v217 = vld [vmem:[#allocation2 + $0x61] sm:$0xff]
  %v218 = vld [vmem:[#allocation2 + $0x71] sm:$0xff]
  %v219 = vld [vmem:[#allocation2 + $0xa1] sm:$0xff]
  %v220 = vld [vmem:[#allocation2 + $0xb1] sm:$0xff]
  %v221 = vld [vmem:[#allocation2 + $0xc1] sm:$0xff]
  %v222 = vld [vmem:[#allocation2 + $0xd1] sm:$0xff]
  %v223 = vld [vmem:[#allocation2 + $0xe1] sm:$0xff]
  %v224 = vld [vmem:[#allocation2 + $0xf1] sm:$0xff]
  %v225 = vld [vmem:[#allocation2 + $0x101] sm:$0xff]
  %v226 = vld [vmem:[#allocation2 + $0x111] sm:$0xff]
  %v228 = vsel %vm20, %v211, 0
  %v231 = vsel %vm20, %v212, 0
  %v234 = vsel %vm20, %v213, 0
  %v237 = vsel %vm20, %v214, 0
  %v240 = vsel %vm20, %v215, 0
  %v243 = vsel %vm20, %v216, 0
  %v246 = vsel %vm20, %v217, 0
  %v249 = vsel %vm20, %v218, 0
  %v252 = vsel %vm20, %v219, 0
  %v255 = vsel %vm20, %v220, 0
  %v258 = vsel %vm20, %v221, 0
  %v261 = vsel %vm20, %v222, 0
  %v264 = vsel %vm20, %v223, 0
  %v267 = vsel %vm20, %v224, 0
  %v270 = vsel %vm20, %v225, 0
  %v273 = vsel %vm20, %v226, 0
  %275 = vmatprep.subr.mxu0 0.0
  %276 = vmatpush1.msra.mxu0 %v187
  %277 = vmatprep.subr.mxu0 0.0
  %278 = vmatpush1.msra.mxu0 0.0
  %279 = vmatprep.subr.mxu0 0.0
  %280 = vmatpush1.msra.mxu0 0.0
  %281 = vmatprep.subr.mxu0 0.0
  %282 = vmatpush1.msra.mxu0 0.0
  %283 = vmatprep.subr.mxu0 0.0
  %284 = vmatpush1.msra.mxu0 0.0
  %285 = vmatprep.subr.mxu0 0.0
  %286 = vmatpush1.msra.mxu0 0.0
  %287 = vmatprep.subr.mxu0 0.0
  %288 = vmatpush1.msra.mxu0 0.0
  %289 = vmatprep.subr.mxu0 0.0
  %290 = vmatpush1.msra.mxu0 0.0
  %291 = vmatprep.subr.mxu0 0.0
  %292 = vmatpush1.msra.mxu0 0.0
  %293 = vmatprep.subr.mxu0 0.0
  %294 = vmatpush1.msra.mxu0 0.0
  %295 = vmatprep.subr.mxu0 0.0
  %296 = vmatpush1.msra.mxu0 0.0
  %297 = vmatprep.subr.mxu0 0.0
  %298 = vmatpush1.msra.mxu0 0.0
  %299 = vmatprep.subr.mxu0 0.0
  %300 = vmatpush1.msra.mxu0 0.0
  %301 = vmatprep.subr.mxu0 0.0
  %302 = vmatpush1.msra.mxu0 0.0
  %303 = vmatprep.subr.mxu0 0.0
  %304 = vmatpush1.msra.mxu0 0.0
  %305 = vmatprep.subr.mxu0 0.0
  %306 = vmatpush1.msra.mxu0 0.0
  %307 = vmatprep.subr.mxu0 0.0
  %308 = vmatpush1.msra.mxu0 0.0
  %309 = vmatprep.subr.mxu0 0.0
  %310 = vmatpush1.msra.mxu0 0.0
  %311 = vmatprep.subr.mxu0 0.0
  %312 = vmatpush1.msra.mxu0 0.0
  %313 = vmatprep.subr.mxu0 0.0
  %314 = vmatpush1.msra.mxu0 0.0
  %315 = vmatprep.subr.mxu0 0.0
  %316 = vmatpush1.msra.mxu0 0.0
  %317 = vmatprep.subr.mxu0 0.0
  %318 = vmatpush1.msra.mxu0 0.0
  %319 = vmatprep.subr.mxu0 0.0
  %320 = vmatpush1.msra.mxu0 0.0
  %321 = vmatprep.subr.mxu0 0.0
  %322 = vmatpush1.msra.mxu0 0.0
  %323 = vmatprep.subr.mxu0 0.0
  %324 = vmatpush1.msra.mxu0 0.0
  %325 = vmatprep.subr.mxu0 0.0
  %326 = vmatpush1.msra.mxu0 0.0
  %327 = vmatprep.subr.mxu0 0.0
  %328 = vmatpush1.msra.mxu0 0.0
  %329 = vmatprep.subr.mxu0 0.0
  %330 = vmatpush1.msra.mxu0 0.0
  %331 = vmatprep.subr.mxu0 0.0
  %332 = vmatpush1.msra.mxu0 0.0
  %333 = vmatprep.subr.mxu0 0.0
  %334 = vmatpush1.msra.mxu0 0.0
  %335 = vmatprep.subr.mxu0 0.0
  %336 = vmatpush1.msra.mxu0 0.0
  %337 = vmatprep.subr.mxu0 0.0
  %338 = vmatpush1.msra.mxu0 0.0
  %339 = vmatprep.mubr.f32.mxu0 0.0
  %340 = vmatmul.mubr.f32.gmra.mrb[0].mxu0 %v228
  %v341 = vpop.f32.mrb[0].mxu0
  %v342 = vadd.f32 0.0, %v341
  %v343 = vpop.f32.mrb[0].mxu0
  %344 = vmatprep.mubr.f32.mxu0 0.0
  %345 = vmatmul.mubr.f32.gmra.mrb[0].mxu0 %v231
  %v346 = vpop.f32.mrb[0].mxu0
  %v347 = vadd.f32 0.0, %v346
  %v348 = vpop.f32.mrb[0].mxu0
  %349 = vmatprep.mubr.f32.mxu0 0.0
  %350 = vmatmul.mubr.f32.gmra.mrb[0].mxu0 %v234
  %v351 = vpop.f32.mrb[0].mxu0
  %v352 = vadd.f32 0.0, %v351
  %v353 = vpop.f32.mrb[0].mxu0
  %354 = vmatprep.mubr.f32.mxu0 0.0
  %355 = vmatmul.mubr.f32.gmra.mrb[0].mxu0 %v237
  %v356 = vpop.f32.mrb[0].mxu0
  %v357 = vadd.f32 0.0, %v356
  %v358 = vpop.f32.mrb[0].mxu0
  %359 = vmatprep.mubr.f32.mxu0 0.0
  %360 = vmatmul.mubr.f32.gmra.mrb[0].mxu0 %v240
  %v361 = vpop.f32.mrb[0].mxu0
  %v362 = vadd.f32 0.0, %v361
  %v363 = vpop.f32.mrb[0].mxu0
  %364 = vmatprep.mubr.f32.mxu0 0.0
  %365 = vmatmul.mubr.f32.gmra.mrb[0].mxu0 %v243
  %v366 = vpop.f32.mrb[0].mxu0
  %v367 = vadd.f32 0.0, %v366
  %v368 = vpop.f32.mrb[0].mxu0
  %369 = vmatprep.mubr.f32.mxu0 0.0
  %370 = vmatmul.mubr.f32.gmra.mrb[0].mxu0 %v246
  %v371 = vpop.f32.mrb[0].mxu0
  %v372 = vadd.f32 0.0, %v371
  %v373 = vpop.f32.mrb[0].mxu0
  %374 = vmatprep.mubr.f32.mxu0 0.0
  %375 = vmatmul.mubr.f32.gmra.mrb[0].mxu0 %v249
  %v376 = vpop.f32.mrb[0].mxu0
  %v377 = vadd.f32 0.0, %v376
  %v378 = vpop.f32.mrb[0].mxu0
  %379 = vmatprep.mubr.f32.mxu0 0.0
  %380 = vmatmul.mubr.f32.gmra.mrb[0].mxu0 %v252
  %v381 = vpop.f32.mrb[0].mxu0
  %v382 = vadd.f32 0.0, %v381
  %v383 = vpop.f32.mrb[0].mxu0
  %384 = vmatprep.mubr.f32.mxu0 0.0
  %385 = vmatmul.mubr.f32.gmra.mrb[0].mxu0 %v255
  %v386 = vpop.f32.mrb[0].mxu0
  %v387 = vadd.f32 0.0, %v386
  %v388 = vpop.f32.mrb[0].mxu0
  %389 = vmatprep.mubr.f32.mxu0 0.0
  %390 = vmatmul.mubr.f32.gmra.mrb[0].mxu0 %v258
  %v391 = vpop.f32.mrb[0].mxu0
  %v392 = vadd.f32 0.0, %v391
  %v393 = vpop.f32.mrb[0].mxu0
  %394 = vmatprep.mubr.f32.mxu0 0.0
  %395 = vmatmul.mubr.f32.gmra.mrb[0].mxu0 %v261
  %v396 = vpop.f32.mrb[0].mxu0
  %v397 = vadd.f32 0.0, %v396
  %v398 = vpop.f32.mrb[0].mxu0
  %399 = vmatprep.mubr.f32.mxu0 0.0
  %400 = vmatmul.mubr.f32.gmra.mrb[0].mxu0 %v264
  %v401 = vpop.f32.mrb[0].mxu0
  %v402 = vadd.f32 0.0, %v401
  %v403 = vpop.f32.mrb[0].mxu0
  %404 = vmatprep.mubr.f32.mxu0 0.0
  %405 = vmatmul.mubr.f32.gmra.mrb[0].mxu0 %v267
  %v406 = vpop.f32.mrb[0].mxu0
  %v407 = vadd.f32 0.0, %v406
  %v408 = vpop.f32.mrb[0].mxu0
  %409 = vmatprep.mubr.f32.mxu0 0.0
  %410 = vmatmul.mubr.f32.gmra.mrb[0].mxu0 %v270
  %v411 = vpop.f32.mrb[0].mxu0
  %v412 = vadd.f32 0.0, %v411
  %v413 = vpop.f32.mrb[0].mxu0
  %414 = vmatprep.mubr.f32.mxu0 0.0
  %415 = vmatmul.mubr.f32.gmra.mrb[0].mxu0 %v273
  %v416 = vpop.f32.mrb[0].mxu0
  %v417 = vadd.f32 0.0, %v416
  %v418 = vpop.f32.mrb[0].mxu0
  %419 = vdwg.mxu0
  %v421 = vsel %vm20, %v195, 0
  %v424 = vsel %vm20, %v196, 0
  %v427 = vsel %vm20, %v197, 0
  %v430 = vsel %vm20, %v198, 0
  %v433 = vsel %vm20, %v199, 0
  %v436 = vsel %vm20, %v200, 0
  %v439 = vsel %vm20, %v201, 0
  %v442 = vsel %vm20, %v202, 0
  %v445 = vsel %vm20, %v203, 0
  %v448 = vsel %vm20, %v204, 0
  %v451 = vsel %vm20, %v205, 0
  %v454 = vsel %vm20, %v206, 0
  %v457 = vsel %vm20, %v207, 0
  %v460 = vsel %vm20, %v208, 0
  %v463 = vsel %vm20, %v209, 0
  %v466 = vsel %vm20, %v210, 0
  %468 = vmatprep.subr.mxu0 0.0
  %469 = vmatpush1.msra.mxu0 %v186
  %470 = vmatprep.subr.mxu0 0.0
  %471 = vmatpush1.msra.mxu0 0.0
  %472 = vmatprep.subr.mxu0 0.0
  %473 = vmatpush1.msra.mxu0 0.0
  %474 = vmatprep.subr.mxu0 0.0
  %475 = vmatpush1.msra.mxu0 0.0
  %476 = vmatprep.subr.mxu0 0.0
  %477 = vmatpush1.msra.mxu0 0.0
  %478 = vmatprep.subr.mxu0 0.0
  %479 = vmatpush1.msra.mxu0 0.0
  %480 = vmatprep.subr.mxu0 0.0
  %481 = vmatpush1.msra.mxu0 0.0
  %482 = vmatprep.subr.mxu0 0.0
  %483 = vmatpush1.msra.mxu0 0.0
  %484 = vmatprep.subr.mxu0 0.0
  %485 = vmatpush1.msra.mxu0 0.0
  %486 = vmatprep.subr.mxu0 0.0
  %487 = vmatpush1.msra.mxu0 0.0
  %488 = vmatprep.subr.mxu0 0.0
  %489 = vmatpush1.msra.mxu0 0.0
  %490 = vmatprep.subr.mxu0 0.0
  %491 = vmatpush1.msra.mxu0 0.0
  %492 = vmatprep.subr.mxu0 0.0
  %493 = vmatpush1.msra.mxu0 0.0
  %494 = vmatprep.subr.mxu0 0.0
  %495 = vmatpush1.msra.mxu0 0.0
  %496 = vmatprep.subr.mxu0 0.0
  %497 = vmatpush1.msra.mxu0 0.0
  %498 = vmatprep.subr.mxu0 0.0
  %499 = vmatpush1.msra.mxu0 0.0
  %500 = vmatprep.subr.mxu0 0.0
  %501 = vmatpush1.msra.mxu0 0.0
  %502 = vmatprep.subr.mxu0 0.0
  %503 = vmatpush1.msra.mxu0 0.0
  %504 = vmatprep.subr.mxu0 0.0
  %505 = vmatpush1.msra.mxu0 0.0
  %506 = vmatprep.subr.mxu0 0.0
  %507 = vmatpush1.msra.mxu0 0.0
  %508 = vmatprep.subr.mxu0 0.0
  %509 = vmatpush1.msra.mxu0 0.0
  %510 = vmatprep.subr.mxu0 0.0
  %511 = vmatpush1.msra.mxu0 0.0
  %512 = vmatprep.subr.mxu0 0.0
  %513 = vmatpush1.msra.mxu0 0.0
  %514 = vmatprep.subr.mxu0 0.0
  %515 = vmatpush1.msra.mxu0 0.0
  %516 = vmatprep.subr.mxu0 0.0
  %517 = vmatpush1.msra.mxu0 0.0
  %518 = vmatprep.subr.mxu0 0.0
  %519 = vmatpush1.msra.mxu0 0.0
  %520 = vmatprep.subr.mxu0 0.0
  %521 = vmatpush1.msra.mxu0 0.0
  %522 = vmatprep.subr.mxu0 0.0
  %523 = vmatpush1.msra.mxu0 0.0
  %524 = vmatprep.subr.mxu0 0.0
  %525 = vmatpush1.msra.mxu0 0.0
  %526 = vmatprep.subr.mxu0 0.0
  %527 = vmatpush1.msra.mxu0 0.0
  %528 = vmatprep.subr.mxu0 0.0
  %529 = vmatpush1.msra.mxu0 0.0
  %530 = vmatprep.subr.mxu0 0.0
  %531 = vmatpush1.msra.mxu0 0.0
  %532 = vmatprep.mubr.f32.mxu0 0.0
  %533 = vmatmul.mubr.f32.gmra.mrb[0].mxu0 %v421
  %v534 = vpop.f32.mrb[0].mxu0
  %v535 = vadd.f32 %v342, %v534
  %v536 = vpop.f32.mrb[0].mxu0
  %537 = vmatprep.mubr.f32.mxu0 0.0
  %538 = vmatmul.mubr.f32.gmra.mrb[0].mxu0 %v424
  %v539 = vpop.f32.mrb[0].mxu0
  %v540 = vadd.f32 %v347, %v539
  %v541 = vpop.f32.mrb[0].mxu0
  %542 = vmatprep.mubr.f32.mxu0 0.0
  %543 = vmatmul.mubr.f32.gmra.mrb[0].mxu0 %v427
  %v544 = vpop.f32.mrb[0].mxu0
  %v545 = vadd.f32 %v352, %v544
  %v546 = vpop.f32.mrb[0].mxu0
  %547 = vmatprep.mubr.f32.mxu0 0.0
  %548 = vmatmul.mubr.f32.gmra.mrb[0].mxu0 %v430
  %v549 = vpop.f32.mrb[0].mxu0
  %v550 = vadd.f32 %v357, %v549
  %v551 = vpop.f32.mrb[0].mxu0
  %552 = vmatprep.mubr.f32.mxu0 0.0
  %553 = vmatmul.mubr.f32.gmra.mrb[0].mxu0 %v433
  %v554 = vpop.f32.mrb[0].mxu0
  %v555 = vadd.f32 %v362, %v554
  %v556 = vpop.f32.mrb[0].mxu0
  %557 = vmatprep.mubr.f32.mxu0 0.0
  %558 = vmatmul.mubr.f32.gmra.mrb[0].mxu0 %v436
  %v559 = vpop.f32.mrb[0].mxu0
  %v560 = vadd.f32 %v367, %v559
  %v561 = vpop.f32.mrb[0].mxu0
  %562 = vmatprep.mubr.f32.mxu0 0.0
  %563 = vmatmul.mubr.f32.gmra.mrb[0].mxu0 %v439
  %v564 = vpop.f32.mrb[0].mxu0
  %v565 = vadd.f32 %v372, %v564
  %v566 = vpop.f32.mrb[0].mxu0
  %567 = vmatprep.mubr.f32.mxu0 0.0
  %568 = vmatmul.mubr.f32.gmra.mrb[0].mxu0 %v442
  %v569 = vpop.f32.mrb[0].mxu0
  %v570 = vadd.f32 %v377, %v569
  %v571 = vpop.f32.mrb[0].mxu0
  %572 = vmatprep.mubr.f32.mxu0 0.0
  %573 = vmatmul.mubr.f32.gmra.mrb[0].mxu0 %v445
  %v574 = vpop.f32.mrb[0].mxu0
  %v575 = vadd.f32 %v382, %v574
  %v576 = vpop.f32.mrb[0].mxu0
  %577 = vmatprep.mubr.f32.mxu0 0.0
  %578 = vmatmul.mubr.f32.gmra.mrb[0].mxu0 %v448
  %v579 = vpop.f32.mrb[0].mxu0
  %v580 = vadd.f32 %v387, %v579
  %v581 = vpop.f32.mrb[0].mxu0
  %582 = vmatprep.mubr.f32.mxu0 0.0
  %583 = vmatmul.mubr.f32.gmra.mrb[0].mxu0 %v451
  %v584 = vpop.f32.mrb[0].mxu0
  %v585 = vadd.f32 %v392, %v584
  %v586 = vpop.f32.mrb[0].mxu0
  %587 = vmatprep.mubr.f32.mxu0 0.0
  %588 = vmatmul.mubr.f32.gmra.mrb[0].mxu0 %v454
  %v589 = vpop.f32.mrb[0].mxu0
  %v590 = vadd.f32 %v397, %v589
  %v591 = vpop.f32.mrb[0].mxu0
  %592 = vmatprep.mubr.f32.mxu0 0.0
  %593 = vmatmul.mubr.f32.gmra.mrb[0].mxu0 %v457
  %v594 = vpop.f32.mrb[0].mxu0
  %v595 = vadd.f32 %v402, %v594
  %v596 = vpop.f32.mrb[0].mxu0
  %597 = vmatprep.mubr.f32.mxu0 0.0
  %598 = vmatmul.mubr.f32.gmra.mrb[0].mxu0 %v460
  %v599 = vpop.f32.mrb[0].mxu0
  %v600 = vadd.f32 %v407, %v599
  %v601 = vpop.f32.mrb[0].mxu0
  %602 = vmatprep.mubr.f32.mxu0 0.0
  %603 = vmatmul.mubr.f32.gmra.mrb[0].mxu0 %v463
  %v604 = vpop.f32.mrb[0].mxu0
  %v605 = vadd.f32 %v412, %v604
  %v606 = vpop.f32.mrb[0].mxu0
  %607 = vmatprep.mubr.f32.mxu0 0.0
  %608 = vmatmul.mubr.f32.gmra.mrb[0].mxu0 %v466
  %v609 = vpop.f32.mrb[0].mxu0
  %v610 = vadd.f32 %v417, %v609
  %v611 = vpop.f32.mrb[0].mxu0
  %612 = vdwg.mxu0
  %v613 = vld [vmem:[#allocation2 + $0x2] sm:$0xff]
  %v614 = vld [vmem:[#allocation2 + $0x12] sm:$0xff]
  %v615 = vld [vmem:[#allocation2 + $0x22] sm:$0xff]
  %v616 = vld [vmem:[#allocation2 + $0x32] sm:$0xff]
  %v617 = vld [vmem:[#allocation2 + $0x42] sm:$0xff]
  %v618 = vld [vmem:[#allocation2 + $0x52] sm:$0xff]
  %v619 = vld [vmem:[#allocation2 + $0x62] sm:$0xff]
  %v620 = vld [vmem:[#allocation2 + $0x72] sm:$0xff]
  %v621 = vld [vmem:[#allocation2 + $0xa2] sm:$0xff]
  %v622 = vld [vmem:[#allocation2 + $0xb2] sm:$0xff]
  %v623 = vld [vmem:[#allocation2 + $0xc2] sm:$0xff]
  %v624 = vld [vmem:[#allocation2 + $0xd2] sm:$0xff]
  %v625 = vld [vmem:[#allocation2 + $0xe2] sm:$0xff]
  %v626 = vld [vmem:[#allocation2 + $0xf2] sm:$0xff]
  %v627 = vld [vmem:[#allocation2 + $0x102] sm:$0xff]
  %v628 = vld [vmem:[#allocation2 + $0x112] sm:$0xff]
  %v630 = vsel %vm20, %v613, 0
  %v633 = vsel %vm20, %v614, 0
  %v636 = vsel %vm20, %v615, 0
  %v639 = vsel %vm20, %v616, 0
  %v642 = vsel %vm20, %v617, 0
  %v645 = vsel %vm20, %v618, 0
  %v648 = vsel %vm20, %v619, 0
  %v651 = vsel %vm20, %v620, 0
  %v654 = vsel %vm20, %v621, 0
  %v657 = vsel %vm20, %v622, 0
  %v660 = vsel %vm20, %v623, 0
  %v663 = vsel %vm20, %v624, 0
  %v666 = vsel %vm20, %v625, 0
  %v669 = vsel %vm20, %v626, 0
  %v672 = vsel %vm20, %v627, 0
  %v675 = vsel %vm20, %v628, 0
  %677 = vmatprep.subr.mxu0 0.0
  %678 = vmatpush1.msra.mxu0 %v188
  %679 = vmatprep.subr.mxu0 0.0
  %680 = vmatpush1.msra.mxu0 0.0
  %681 = vmatprep.subr.mxu0 0.0
  %682 = vmatpush1.msra.mxu0 0.0
  %683 = vmatprep.subr.mxu0 0.0
  %684 = vmatpush1.msra.mxu0 0.0
  %685 = vmatprep.subr.mxu0 0.0
  %686 = vmatpush1.msra.mxu0 0.0
  %687 = vmatprep.subr.mxu0 0.0
  %688 = vmatpush1.msra.mxu0 0.0
  %689 = vmatprep.subr.mxu0 0.0
  %690 = vmatpush1.msra.mxu0 0.0
  %691 = vmatprep.subr.mxu0 0.0
  %692 = vmatpush1.msra.mxu0 0.0
  %693 = vmatprep.subr.mxu0 0.0
  %694 = vmatpush1.msra.mxu0 0.0
  %695 = vmatprep.subr.mxu0 0.0
  %696 = vmatpush1.msra.mxu0 0.0
  %697 = vmatprep.subr.mxu0 0.0
  %698 = vmatpush1.msra.mxu0 0.0
  %699 = vmatprep.subr.mxu0 0.0
  %700 = vmatpush1.msra.mxu0 0.0
  %701 = vmatprep.subr.mxu0 0.0
  %702 = vmatpush1.msra.mxu0 0.0
  %703 = vmatprep.subr.mxu0 0.0
  %704 = vmatpush1.msra.mxu0 0.0
  %705 = vmatprep.subr.mxu0 0.0
  %706 = vmatpush1.msra.mxu0 0.0
  %707 = vmatprep.subr.mxu0 0.0
  %708 = vmatpush1.msra.mxu0 0.0
  %709 = vmatprep.subr.mxu0 0.0
  %710 = vmatpush1.msra.mxu0 0.0
  %711 = vmatprep.subr.mxu0 0.0
  %712 = vmatpush1.msra.mxu0 0.0
  %713 = vmatprep.subr.mxu0 0.0
  %714 = vmatpush1.msra.mxu0 0.0
  %715 = vmatprep.subr.mxu0 0.0
  %716 = vmatpush1.msra.mxu0 0.0
  %717 = vmatprep.subr.mxu0 0.0
  %718 = vmatpush1.msra.mxu0 0.0
  %719 = vmatprep.subr.mxu0 0.0
  %720 = vmatpush1.msra.mxu0 0.0
  %721 = vmatprep.subr.mxu0 0.0
  %722 = vmatpush1.msra.mxu0 0.0
  %723 = vmatprep.subr.mxu0 0.0
  %724 = vmatpush1.msra.mxu0 0.0
  %725 = vmatprep.subr.mxu0 0.0
  %726 = vmatpush1.msra.mxu0 0.0
  %727 = vmatprep.subr.mxu0 0.0
  %728 = vmatpush1.msra.mxu0 0.0
  %729 = vmatprep.subr.mxu0 0.0
  %730 = vmatpush1.msra.mxu0 0.0
  %731 = vmatprep.subr.mxu0 0.0
  %732 = vmatpush1.msra.mxu0 0.0
  %733 = vmatprep.subr.mxu0 0.0
  %734 = vmatpush1.msra.mxu0 0.0
  %735 = vmatprep.subr.mxu0 0.0
  %736 = vmatpush1.msra.mxu0 0.0
  %737 = vmatprep.subr.mxu0 0.0
  %738 = vmatpush1.msra.mxu0 0.0
  %739 = vmatprep.subr.mxu0 0.0
  %740 = vmatpush1.msra.mxu0 0.0
  %741 = vmatprep.mubr.f32.mxu0 0.0
  %742 = vmatmul.mubr.f32.gmra.mrb[0].mxu0 %v630
  %v743 = vpop.f32.mrb[0].mxu0
  %v744 = vadd.f32 0.0, %v743
  %v745 = vpop.f32.mrb[0].mxu0
  %746 = vmatprep.mubr.f32.mxu0 0.0
  %747 = vmatmul.mubr.f32.gmra.mrb[0].mxu0 %v633
  %v748 = vpop.f32.mrb[0].mxu0
  %v749 = vadd.f32 0.0, %v748
  %v750 = vpop.f32.mrb[0].mxu0
  %751 = vmatprep.mubr.f32.mxu0 0.0
  %752 = vmatmul.mubr.f32.gmra.mrb[0].mxu0 %v636
  %v753 = vpop.f32.mrb[0].mxu0
  %v754 = vadd.f32 0.0, %v753
  %v755 = vpop.f32.mrb[0].mxu0
  %756 = vmatprep.mubr.f32.mxu0 0.0
  %757 = vmatmul.mubr.f32.gmra.mrb[0].mxu0 %v639
  %v758 = vpop.f32.mrb[0].mxu0
  %v759 = vadd.f32 0.0, %v758
  %v760 = vpop.f32.mrb[0].mxu0
  %761 = vmatprep.mubr.f32.mxu0 0.0
  %762 = vmatmul.mubr.f32.gmra.mrb[0].mxu0 %v642
  %v763 = vpop.f32.mrb[0].mxu0
  %v764 = vadd.f32 0.0, %v763
  %v765 = vpop.f32.mrb[0].mxu0
  %766 = vmatprep.mubr.f32.mxu0 0.0
  %767 = vmatmul.mubr.f32.gmra.mrb[0].mxu0 %v645
  %v768 = vpop.f32.mrb[0].mxu0
  %v769 = vadd.f32 0.0, %v768
  %v770 = vpop.f32.mrb[0].mxu0
  %771 = vmatprep.mubr.f32.mxu0 0.0
  %772 = vmatmul.mubr.f32.gmra.mrb[0].mxu0 %v648
  %v773 = vpop.f32.mrb[0].mxu0
  %v774 = vadd.f32 0.0, %v773
  %v775 = vpop.f32.mrb[0].mxu0
  %776 = vmatprep.mubr.f32.mxu0 0.0
  %777 = vmatmul.mubr.f32.gmra.mrb[0].mxu0 %v651
  %v778 = vpop.f32.mrb[0].mxu0
  %v779 = vadd.f32 0.0, %v778
  %v780 = vpop.f32.mrb[0].mxu0
  %781 = vmatprep.mubr.f32.mxu0 0.0
  %782 = vmatmul.mubr.f32.gmra.mrb[0].mxu0 %v654
  %v783 = vpop.f32.mrb[0].mxu0
  %v784 = vadd.f32 0.0, %v783
  %v785 = vpop.f32.mrb[0].mxu0
  %786 = vmatprep.mubr.f32.mxu0 0.0
  %787 = vmatmul.mubr.f32.gmra.mrb[0].mxu0 %v657
  %v788 = vpop.f32.mrb[0].mxu0
  %v789 = vadd.f32 0.0, %v788
  %v790 = vpop.f32.mrb[0].mxu0
  %791 = vmatprep.mubr.f32.mxu0 0.0
  %792 = vmatmul.mubr.f32.gmra.mrb[0].mxu0 %v660
  %v793 = vpop.f32.mrb[0].mxu0
  %v794 = vadd.f32 0.0, %v793
  %v795 = vpop.f32.mrb[0].mxu0
  %796 = vmatprep.mubr.f32.mxu0 0.0
  %797 = vmatmul.mubr.f32.gmra.mrb[0].mxu0 %v663
  %v798 = vpop.f32.mrb[0].mxu0
  %v799 = vadd.f32 0.0, %v798
  %v800 = vpop.f32.mrb[0].mxu0
  %801 = vmatprep.mubr.f32.mxu0 0.0
  %802 = vmatmul.mubr.f32.gmra.mrb[0].mxu0 %v666
  %v803 = vpop.f32.mrb[0].mxu0
  %v804 = vadd.f32 0.0, %v803
  %v805 = vpop.f32.mrb[0].mxu0
  %806 = vmatprep.mubr.f32.mxu0 0.0
  %807 = vmatmul.mubr.f32.gmra.mrb[0].mxu0 %v669
  %v808 = vpop.f32.mrb[0].mxu0
  %v809 = vadd.f32 0.0, %v808
  %v810 = vpop.f32.mrb[0].mxu0
  %811 = vmatprep.mubr.f32.mxu0 0.0
  %812 = vmatmul.mubr.f32.gmra.mrb[0].mxu0 %v672
  %v813 = vpop.f32.mrb[0].mxu0
  %v814 = vadd.f32 0.0, %v813
  %v815 = vpop.f32.mrb[0].mxu0
  %816 = vmatprep.mubr.f32.mxu0 0.0
  %817 = vmatmul.mubr.f32.gmra.mrb[0].mxu0 %v675
  %v818 = vpop.f32.mrb[0].mxu0
  %v819 = vadd.f32 0.0, %v818
  %v820 = vpop.f32.mrb[0].mxu0
  %821 = vdwg.mxu0
  %v822 = vadd.f32 %v535, %v744
  %v823 = vadd.f32 %v540, %v749
  %v824 = vadd.f32 %v545, %v754
  %v825 = vadd.f32 %v550, %v759
  %v826 = vadd.f32 %v555, %v764
  %v827 = vadd.f32 %v560, %v769
  %v828 = vadd.f32 %v565, %v774
  %v829 = vadd.f32 %v570, %v779
  %v830 = vadd.f32 %v575, %v784
  %v831 = vadd.f32 %v580, %v789
  %v832 = vadd.f32 %v585, %v794
  %v833 = vadd.f32 %v590, %v799
  %v834 = vadd.f32 %v595, %v804
  %v835 = vadd.f32 %v600, %v809
  %v836 = vadd.f32 %v605, %v814
  %v837 = vadd.f32 %v610, %v819
  %v838 = vld [vmem:[%s169] sm:$0xff]
  %v839 = vld [vmem:[%s169 + $0x10] sm:$0xff]
  %v840 = vld [vmem:[%s169 + $0x20] sm:$0xff]
  %v841 = vld [vmem:[%s169 + $0x30] sm:$0xff]
  %v842 = vld [vmem:[%s169 + $0x40] sm:$0xff]
  %v843 = vld [vmem:[%s169 + $0x50] sm:$0xff]
  %v844 = vld [vmem:[%s169 + $0x60] sm:$0xff]
  %v845 = vld [vmem:[%s169 + $0x70] sm:$0xff]
  %v846 = vld [vmem:[%s169 + $0xa0] sm:$0xff]
  %v847 = vld [vmem:[%s169 + $0xb0] sm:$0xff]
  %v848 = vld [vmem:[%s169 + $0xc0] sm:$0xff]
  %v849 = vld [vmem:[%s169 + $0xd0] sm:$0xff]
  %v850 = vld [vmem:[%s169 + $0xe0] sm:$0xff]
  %v851 = vld [vmem:[%s169 + $0xf0] sm:$0xff]
  %v852 = vld [vmem:[%s169 + $0x100] sm:$0xff]
  %v853 = vld [vmem:[%s169 + $0x110] sm:$0xff]
  %v855 = vsel %vm20, %v838, 0
  %v858 = vsel %vm20, %v839, 0
  %v861 = vsel %vm20, %v840, 0
  %v864 = vsel %vm20, %v841, 0
  %v867 = vsel %vm20, %v842, 0
  %v870 = vsel %vm20, %v843, 0
  %v873 = vsel %vm20, %v844, 0
  %v876 = vsel %vm20, %v845, 0
  %v879 = vsel %vm20, %v846, 0
  %v882 = vsel %vm20, %v847, 0
  %v885 = vsel %vm20, %v848, 0
  %v888 = vsel %vm20, %v849, 0
  %v891 = vsel %vm20, %v850, 0
  %v894 = vsel %vm20, %v851, 0
  %v897 = vsel %vm20, %v852, 0
  %v900 = vsel %vm20, %v853, 0
  %902 = vmatprep.subr.mxu0 0.0
  %903 = vmatpush1.msra.mxu0 %v189
  %904 = vmatprep.subr.mxu0 0.0
  %905 = vmatpush1.msra.mxu0 0.0
  %906 = vmatprep.subr.mxu0 0.0
  %907 = vmatpush1.msra.mxu0 0.0
  %908 = vmatprep.subr.mxu0 0.0
  %909 = vmatpush1.msra.mxu0 0.0
  %910 = vmatprep.subr.mxu0 0.0
  %911 = vmatpush1.msra.mxu0 0.0
  %912 = vmatprep.subr.mxu0 0.0
  %913 = vmatpush1.msra.mxu0 0.0
  %914 = vmatprep.subr.mxu0 0.0
  %915 = vmatpush1.msra.mxu0 0.0
  %916 = vmatprep.subr.mxu0 0.0
  %917 = vmatpush1.msra.mxu0 0.0
  %918 = vmatprep.subr.mxu0 0.0
  %919 = vmatpush1.msra.mxu0 0.0
  %920 = vmatprep.subr.mxu0 0.0
  %921 = vmatpush1.msra.mxu0 0.0
  %922 = vmatprep.subr.mxu0 0.0
  %923 = vmatpush1.msra.mxu0 0.0
  %924 = vmatprep.subr.mxu0 0.0
  %925 = vmatpush1.msra.mxu0 0.0
  %926 = vmatprep.subr.mxu0 0.0
  %927 = vmatpush1.msra.mxu0 0.0
  %928 = vmatprep.subr.mxu0 0.0
  %929 = vmatpush1.msra.mxu0 0.0
  %930 = vmatprep.subr.mxu0 0.0
  %931 = vmatpush1.msra.mxu0 0.0
  %932 = vmatprep.subr.mxu0 0.0
  %933 = vmatpush1.msra.mxu0 0.0
  %934 = vmatprep.subr.mxu0 0.0
  %935 = vmatpush1.msra.mxu0 0.0
  %936 = vmatprep.subr.mxu0 0.0
  %937 = vmatpush1.msra.mxu0 0.0
  %938 = vmatprep.subr.mxu0 0.0
  %939 = vmatpush1.msra.mxu0 0.0
  %940 = vmatprep.subr.mxu0 0.0
  %941 = vmatpush1.msra.mxu0 0.0
  %942 = vmatprep.subr.mxu0 0.0
  %943 = vmatpush1.msra.mxu0 0.0
  %944 = vmatprep.subr.mxu0 0.0
  %945 = vmatpush1.msra.mxu0 0.0
  %946 = vmatprep.subr.mxu0 0.0
  %947 = vmatpush1.msra.mxu0 0.0
  %948 = vmatprep.subr.mxu0 0.0
  %949 = vmatpush1.msra.mxu0 0.0
  %950 = vmatprep.subr.mxu0 0.0
  %951 = vmatpush1.msra.mxu0 0.0
  %952 = vmatprep.subr.mxu0 0.0
  %953 = vmatpush1.msra.mxu0 0.0
  %954 = vmatprep.subr.mxu0 0.0
  %955 = vmatpush1.msra.mxu0 0.0
  %956 = vmatprep.subr.mxu0 0.0
  %957 = vmatpush1.msra.mxu0 0.0
  %958 = vmatprep.subr.mxu0 0.0
  %959 = vmatpush1.msra.mxu0 0.0
  %960 = vmatprep.subr.mxu0 0.0
  %961 = vmatpush1.msra.mxu0 0.0
  %962 = vmatprep.subr.mxu0 0.0
  %963 = vmatpush1.msra.mxu0 0.0
  %964 = vmatprep.subr.mxu0 0.0
  %965 = vmatpush1.msra.mxu0 0.0
  %966 = vmatprep.mubr.f32.mxu0 0.0
  %967 = vmatmul.mubr.f32.gmra.mrb[0].mxu0 %v855
  %v968 = vpop.f32.mrb[0].mxu0
  %v969 = vadd.f32 0.0, %v968
  %v970 = vpop.f32.mrb[0].mxu0
  %971 = vmatprep.mubr.f32.mxu0 0.0
  %972 = vmatmul.mubr.f32.gmra.mrb[0].mxu0 %v858
  %v973 = vpop.f32.mrb[0].mxu0
  %v974 = vadd.f32 0.0, %v973
  %v975 = vpop.f32.mrb[0].mxu0
  %976 = vmatprep.mubr.f32.mxu0 0.0
  %977 = vmatmul.mubr.f32.gmra.mrb[0].mxu0 %v861
  %v978 = vpop.f32.mrb[0].mxu0
  %v979 = vadd.f32 0.0, %v978
  %v980 = vpop.f32.mrb[0].mxu0
  %981 = vmatprep.mubr.f32.mxu0 0.0
  %982 = vmatmul.mubr.f32.gmra.mrb[0].mxu0 %v864
  %v983 = vpop.f32.mrb[0].mxu0
  %v984 = vadd.f32 0.0, %v983
  %v985 = vpop.f32.mrb[0].mxu0
  %986 = vmatprep.mubr.f32.mxu0 0.0
  %987 = vmatmul.mubr.f32.gmra.mrb[0].mxu0 %v867
  %v988 = vpop.f32.mrb[0].mxu0
  %v989 = vadd.f32 0.0, %v988
  %v990 = vpop.f32.mrb[0].mxu0
  %991 = vmatprep.mubr.f32.mxu0 0.0
  %992 = vmatmul.mubr.f32.gmra.mrb[0].mxu0 %v870
  %v993 = vpop.f32.mrb[0].mxu0
  %v994 = vadd.f32 0.0, %v993
  %v995 = vpop.f32.mrb[0].mxu0
  %996 = vmatprep.mubr.f32.mxu0 0.0
  %997 = vmatmul.mubr.f32.gmra.mrb[0].mxu0 %v873
  %v998 = vpop.f32.mrb[0].mxu0
  %v999 = vadd.f32 0.0, %v998
  %v1000 = vpop.f32.mrb[0].mxu0
  %1001 = vmatprep.mubr.f32.mxu0 0.0
  %1002 = vmatmul.mubr.f32.gmra.mrb[0].mxu0 %v876
  %v1003 = vpop.f32.mrb[0].mxu0
  %v1004 = vadd.f32 0.0, %v1003
  %v1005 = vpop.f32.mrb[0].mxu0
  %1006 = vmatprep.mubr.f32.mxu0 0.0
  %1007 = vmatmul.mubr.f32.gmra.mrb[0].mxu0 %v879
  %v1008 = vpop.f32.mrb[0].mxu0
  %v1009 = vadd.f32 0.0, %v1008
  %v1010 = vpop.f32.mrb[0].mxu0
  %1011 = vmatprep.mubr.f32.mxu0 0.0
  %1012 = vmatmul.mubr.f32.gmra.mrb[0].mxu0 %v882
  %v1013 = vpop.f32.mrb[0].mxu0
  %v1014 = vadd.f32 0.0, %v1013
  %v1015 = vpop.f32.mrb[0].mxu0
  %1016 = vmatprep.mubr.f32.mxu0 0.0
  %1017 = vmatmul.mubr.f32.gmra.mrb[0].mxu0 %v885
  %v1018 = vpop.f32.mrb[0].mxu0
  %v1019 = vadd.f32 0.0, %v1018
  %v1020 = vpop.f32.mrb[0].mxu0
  %1021 = vmatprep.mubr.f32.mxu0 0.0
  %1022 = vmatmul.mubr.f32.gmra.mrb[0].mxu0 %v888
  %v1023 = vpop.f32.mrb[0].mxu0
  %v1024 = vadd.f32 0.0, %v1023
  %v1025 = vpop.f32.mrb[0].mxu0
  %1026 = vmatprep.mubr.f32.mxu0 0.0
  %1027 = vmatmul.mubr.f32.gmra.mrb[0].mxu0 %v891
  %v1028 = vpop.f32.mrb[0].mxu0
  %v1029 = vadd.f32 0.0, %v1028
  %v1030 = vpop.f32.mrb[0].mxu0
  %1031 = vmatprep.mubr.f32.mxu0 0.0
  %1032 = vmatmul.mubr.f32.gmra.mrb[0].mxu0 %v894
  %v1033 = vpop.f32.mrb[0].mxu0
  %v1034 = vadd.f32 0.0, %v1033
  %v1035 = vpop.f32.mrb[0].mxu0
  %1036 = vmatprep.mubr.f32.mxu0 0.0
  %1037 = vmatmul.mubr.f32.gmra.mrb[0].mxu0 %v897
  %v1038 = vpop.f32.mrb[0].mxu0
  %v1039 = vadd.f32 0.0, %v1038
  %v1040 = vpop.f32.mrb[0].mxu0
  %1041 = vmatprep.mubr.f32.mxu0 0.0
  %1042 = vmatmul.mubr.f32.gmra.mrb[0].mxu0 %v900
  %v1043 = vpop.f32.mrb[0].mxu0
  %v1044 = vadd.f32 0.0, %v1043
  %v1045 = vpop.f32.mrb[0].mxu0
  %1046 = vdwg.mxu0
  %v1047 = vadd.f32 %v822, %v969
  %v1048 = vadd.f32 %v823, %v974
  %v1049 = vadd.f32 %v824, %v979
  %v1050 = vadd.f32 %v825, %v984
  %v1051 = vadd.f32 %v826, %v989
  %v1052 = vadd.f32 %v827, %v994
  %v1053 = vadd.f32 %v828, %v999
  %v1054 = vadd.f32 %v829, %v1004
  %v1055 = vadd.f32 %v830, %v1009
  %v1056 = vadd.f32 %v831, %v1014
  %v1057 = vadd.f32 %v832, %v1019
  %v1058 = vadd.f32 %v833, %v1024
  %v1059 = vadd.f32 %v834, %v1029
  %v1060 = vadd.f32 %v835, %v1034
  %v1061 = vadd.f32 %v836, %v1039
  %v1062 = vadd.f32 %v837, %v1044
  %v1063 = vld [vmem:[%s169 + $0x1] sm:$0xff]
  %v1064 = vld [vmem:[%s169 + $0x11] sm:$0xff]
  %v1065 = vld [vmem:[%s169 + $0x21] sm:$0xff]
  %v1066 = vld [vmem:[%s169 + $0x31] sm:$0xff]
  %v1067 = vld [vmem:[%s169 + $0x41] sm:$0xff]
  %v1068 = vld [vmem:[%s169 + $0x51] sm:$0xff]
  %v1069 = vld [vmem:[%s169 + $0x61] sm:$0xff]
  %v1070 = vld [vmem:[%s169 + $0x71] sm:$0xff]
  %v1071 = vld [vmem:[%s169 + $0xa1] sm:$0xff]
  %v1072 = vld [vmem:[%s169 + $0xb1] sm:$0xff]
  %v1073 = vld [vmem:[%s169 + $0xc1] sm:$0xff]
  %v1074 = vld [vmem:[%s169 + $0xd1] sm:$0xff]
  %v1075 = vld [vmem:[%s169 + $0xe1] sm:$0xff]
  %v1076 = vld [vmem:[%s169 + $0xf1] sm:$0xff]
  %v1077 = vld [vmem:[%s169 + $0x101] sm:$0xff]
  %v1078 = vld [vmem:[%s169 + $0x111] sm:$0xff]
  %v1080 = vsel %vm20, %v1063, 0
  %v1083 = vsel %vm20, %v1064, 0
  %v1086 = vsel %vm20, %v1065, 0
  %v1089 = vsel %vm20, %v1066, 0
  %v1092 = vsel %vm20, %v1067, 0
  %v1095 = vsel %vm20, %v1068, 0
  %v1098 = vsel %vm20, %v1069, 0
  %v1101 = vsel %vm20, %v1070, 0
  %v1104 = vsel %vm20, %v1071, 0
  %v1107 = vsel %vm20, %v1072, 0
  %v1110 = vsel %vm20, %v1073, 0
  %v1113 = vsel %vm20, %v1074, 0
  %v1116 = vsel %vm20, %v1075, 0
  %v1119 = vsel %vm20, %v1076, 0
  %v1122 = vsel %vm20, %v1077, 0
  %v1125 = vsel %vm20, %v1078, 0
  %1127 = vmatprep.subr.mxu0 0.0
  %1128 = vmatpush1.msra.mxu0 %v190
  %1129 = vmatprep.subr.mxu0 0.0
  %1130 = vmatpush1.msra.mxu0 0.0
  %1131 = vmatprep.subr.mxu0 0.0
  %1132 = vmatpush1.msra.mxu0 0.0
  %1133 = vmatprep.subr.mxu0 0.0
  %1134 = vmatpush1.msra.mxu0 0.0
  %1135 = vmatprep.subr.mxu0 0.0
  %1136 = vmatpush1.msra.mxu0 0.0
  %1137 = vmatprep.subr.mxu0 0.0
  %1138 = vmatpush1.msra.mxu0 0.0
  %1139 = vmatprep.subr.mxu0 0.0
  %1140 = vmatpush1.msra.mxu0 0.0
  %1141 = vmatprep.subr.mxu0 0.0
  %1142 = vmatpush1.msra.mxu0 0.0
  %1143 = vmatprep.subr.mxu0 0.0
  %1144 = vmatpush1.msra.mxu0 0.0
  %1145 = vmatprep.subr.mxu0 0.0
  %1146 = vmatpush1.msra.mxu0 0.0
  %1147 = vmatprep.subr.mxu0 0.0
  %1148 = vmatpush1.msra.mxu0 0.0
  %1149 = vmatprep.subr.mxu0 0.0
  %1150 = vmatpush1.msra.mxu0 0.0
  %1151 = vmatprep.subr.mxu0 0.0
  %1152 = vmatpush1.msra.mxu0 0.0
  %1153 = vmatprep.subr.mxu0 0.0
  %1154 = vmatpush1.msra.mxu0 0.0
  %1155 = vmatprep.subr.mxu0 0.0
  %1156 = vmatpush1.msra.mxu0 0.0
  %1157 = vmatprep.subr.mxu0 0.0
  %1158 = vmatpush1.msra.mxu0 0.0
  %1159 = vmatprep.subr.mxu0 0.0
  %1160 = vmatpush1.msra.mxu0 0.0
  %1161 = vmatprep.subr.mxu0 0.0
  %1162 = vmatpush1.msra.mxu0 0.0
  %1163 = vmatprep.subr.mxu0 0.0
  %1164 = vmatpush1.msra.mxu0 0.0
  %1165 = vmatprep.subr.mxu0 0.0
  %1166 = vmatpush1.msra.mxu0 0.0
  %1167 = vmatprep.subr.mxu0 0.0
  %1168 = vmatpush1.msra.mxu0 0.0
  %1169 = vmatprep.subr.mxu0 0.0
  %1170 = vmatpush1.msra.mxu0 0.0
  %1171 = vmatprep.subr.mxu0 0.0
  %1172 = vmatpush1.msra.mxu0 0.0
  %1173 = vmatprep.subr.mxu0 0.0
  %1174 = vmatpush1.msra.mxu0 0.0
  %1175 = vmatprep.subr.mxu0 0.0
  %1176 = vmatpush1.msra.mxu0 0.0
  %1177 = vmatprep.subr.mxu0 0.0
  %1178 = vmatpush1.msra.mxu0 0.0
  %1179 = vmatprep.subr.mxu0 0.0
  %1180 = vmatpush1.msra.mxu0 0.0
  %1181 = vmatprep.subr.mxu0 0.0
  %1182 = vmatpush1.msra.mxu0 0.0
  %1183 = vmatprep.subr.mxu0 0.0
  %1184 = vmatpush1.msra.mxu0 0.0
  %1185 = vmatprep.subr.mxu0 0.0
  %1186 = vmatpush1.msra.mxu0 0.0
  %1187 = vmatprep.subr.mxu0 0.0
  %1188 = vmatpush1.msra.mxu0 0.0
  %1189 = vmatprep.subr.mxu0 0.0
  %1190 = vmatpush1.msra.mxu0 0.0
  %1191 = vmatprep.mubr.f32.mxu0 0.0
  %1192 = vmatmul.mubr.f32.gmra.mrb[0].mxu0 %v1080
  %v1193 = vpop.f32.mrb[0].mxu0
  %v1194 = vadd.f32 0.0, %v1193
  %v1195 = vpop.f32.mrb[0].mxu0
  %1196 = vmatprep.mubr.f32.mxu0 0.0
  %1197 = vmatmul.mubr.f32.gmra.mrb[0].mxu0 %v1083
  %v1198 = vpop.f32.mrb[0].mxu0
  %v1199 = vadd.f32 0.0, %v1198
  %v1200 = vpop.f32.mrb[0].mxu0
  %1201 = vmatprep.mubr.f32.mxu0 0.0
  %1202 = vmatmul.mubr.f32.gmra.mrb[0].mxu0 %v1086
  %v1203 = vpop.f32.mrb[0].mxu0
  %v1204 = vadd.f32 0.0, %v1203
  %v1205 = vpop.f32.mrb[0].mxu0
  %1206 = vmatprep.mubr.f32.mxu0 0.0
  %1207 = vmatmul.mubr.f32.gmra.mrb[0].mxu0 %v1089
  %v1208 = vpop.f32.mrb[0].mxu0
  %v1209 = vadd.f32 0.0, %v1208
  %v1210 = vpop.f32.mrb[0].mxu0
  %1211 = vmatprep.mubr.f32.mxu0 0.0
  %1212 = vmatmul.mubr.f32.gmra.mrb[0].mxu0 %v1092
  %v1213 = vpop.f32.mrb[0].mxu0
  %v1214 = vadd.f32 0.0, %v1213
  %v1215 = vpop.f32.mrb[0].mxu0
  %1216 = vmatprep.mubr.f32.mxu0 0.0
  %1217 = vmatmul.mubr.f32.gmra.mrb[0].mxu0 %v1095
  %v1218 = vpop.f32.mrb[0].mxu0
  %v1219 = vadd.f32 0.0, %v1218
  %v1220 = vpop.f32.mrb[0].mxu0
  %1221 = vmatprep.mubr.f32.mxu0 0.0
  %1222 = vmatmul.mubr.f32.gmra.mrb[0].mxu0 %v1098
  %v1223 = vpop.f32.mrb[0].mxu0
  %v1224 = vadd.f32 0.0, %v1223
  %v1225 = vpop.f32.mrb[0].mxu0
  %1226 = vmatprep.mubr.f32.mxu0 0.0
  %1227 = vmatmul.mubr.f32.gmra.mrb[0].mxu0 %v1101
  %v1228 = vpop.f32.mrb[0].mxu0
  %v1229 = vadd.f32 0.0, %v1228
  %v1230 = vpop.f32.mrb[0].mxu0
  %1231 = vmatprep.mubr.f32.mxu0 0.0
  %1232 = vmatmul.mubr.f32.gmra.mrb[0].mxu0 %v1104
  %v1233 = vpop.f32.mrb[0].mxu0
  %v1234 = vadd.f32 0.0, %v1233
  %v1235 = vpop.f32.mrb[0].mxu0
  %1236 = vmatprep.mubr.f32.mxu0 0.0
  %1237 = vmatmul.mubr.f32.gmra.mrb[0].mxu0 %v1107
  %v1238 = vpop.f32.mrb[0].mxu0
  %v1239 = vadd.f32 0.0, %v1238
  %v1240 = vpop.f32.mrb[0].mxu0
  %1241 = vmatprep.mubr.f32.mxu0 0.0
  %1242 = vmatmul.mubr.f32.gmra.mrb[0].mxu0 %v1110
  %v1243 = vpop.f32.mrb[0].mxu0
  %v1244 = vadd.f32 0.0, %v1243
  %v1245 = vpop.f32.mrb[0].mxu0
  %1246 = vmatprep.mubr.f32.mxu0 0.0
  %1247 = vmatmul.mubr.f32.gmra.mrb[0].mxu0 %v1113
  %v1248 = vpop.f32.mrb[0].mxu0
  %v1249 = vadd.f32 0.0, %v1248
  %v1250 = vpop.f32.mrb[0].mxu0
  %1251 = vmatprep.mubr.f32.mxu0 0.0
  %1252 = vmatmul.mubr.f32.gmra.mrb[0].mxu0 %v1116
  %v1253 = vpop.f32.mrb[0].mxu0
  %v1254 = vadd.f32 0.0, %v1253
  %v1255 = vpop.f32.mrb[0].mxu0
  %1256 = vmatprep.mubr.f32.mxu0 0.0
  %1257 = vmatmul.mubr.f32.gmra.mrb[0].mxu0 %v1119
  %v1258 = vpop.f32.mrb[0].mxu0
  %v1259 = vadd.f32 0.0, %v1258
  %v1260 = vpop.f32.mrb[0].mxu0
  %1261 = vmatprep.mubr.f32.mxu0 0.0
  %1262 = vmatmul.mubr.f32.gmra.mrb[0].mxu0 %v1122
  %v1263 = vpop.f32.mrb[0].mxu0
  %v1264 = vadd.f32 0.0, %v1263
  %v1265 = vpop.f32.mrb[0].mxu0
  %1266 = vmatprep.mubr.f32.mxu0 0.0
  %1267 = vmatmul.mubr.f32.gmra.mrb[0].mxu0 %v1125
  %v1268 = vpop.f32.mrb[0].mxu0
  %v1269 = vadd.f32 0.0, %v1268
  %v1270 = vpop.f32.mrb[0].mxu0
  %1271 = vdwg.mxu0
  %v1272 = vadd.f32 %v1047, %v1194
  %v1273 = vadd.f32 %v1048, %v1199
  %v1274 = vadd.f32 %v1049, %v1204
  %v1275 = vadd.f32 %v1050, %v1209
  %v1276 = vadd.f32 %v1051, %v1214
  %v1277 = vadd.f32 %v1052, %v1219
  %v1278 = vadd.f32 %v1053, %v1224
  %v1279 = vadd.f32 %v1054, %v1229
  %v1280 = vadd.f32 %v1055, %v1234
  %v1281 = vadd.f32 %v1056, %v1239
  %v1282 = vadd.f32 %v1057, %v1244
  %v1283 = vadd.f32 %v1058, %v1249
  %v1284 = vadd.f32 %v1059, %v1254
  %v1285 = vadd.f32 %v1060, %v1259
  %v1286 = vadd.f32 %v1061, %v1264
  %v1287 = vadd.f32 %v1062, %v1269
  %v1288 = vld [vmem:[%s169 + $0x2] sm:$0xff]
  %v1289 = vld [vmem:[%s169 + $0x12] sm:$0xff]
  %v1290 = vld [vmem:[%s169 + $0x22] sm:$0xff]
  %v1291 = vld [vmem:[%s169 + $0x32] sm:$0xff]
  %v1292 = vld [vmem:[%s169 + $0x42] sm:$0xff]
  %v1293 = vld [vmem:[%s169 + $0x52] sm:$0xff]
  %v1294 = vld [vmem:[%s169 + $0x62] sm:$0xff]
  %v1295 = vld [vmem:[%s169 + $0x72] sm:$0xff]
  %v1296 = vld [vmem:[%s169 + $0xa2] sm:$0xff]
  %v1297 = vld [vmem:[%s169 + $0xb2] sm:$0xff]
  %v1298 = vld [vmem:[%s169 + $0xc2] sm:$0xff]
  %v1299 = vld [vmem:[%s169 + $0xd2] sm:$0xff]
  %v1300 = vld [vmem:[%s169 + $0xe2] sm:$0xff]
  %v1301 = vld [vmem:[%s169 + $0xf2] sm:$0xff]
  %v1302 = vld [vmem:[%s169 + $0x102] sm:$0xff]
  %v1303 = vld [vmem:[%s169 + $0x112] sm:$0xff]
  %v1305 = vsel %vm20, %v1288, 0
  %v1308 = vsel %vm20, %v1289, 0
  %v1311 = vsel %vm20, %v1290, 0
  %v1314 = vsel %vm20, %v1291, 0
  %v1317 = vsel %vm20, %v1292, 0
  %v1320 = vsel %vm20, %v1293, 0
  %v1323 = vsel %vm20, %v1294, 0
  %v1326 = vsel %vm20, %v1295, 0
  %v1329 = vsel %vm20, %v1296, 0
  %v1332 = vsel %vm20, %v1297, 0
  %v1335 = vsel %vm20, %v1298, 0
  %v1338 = vsel %vm20, %v1299, 0
  %v1341 = vsel %vm20, %v1300, 0
  %v1344 = vsel %vm20, %v1301, 0
  %v1347 = vsel %vm20, %v1302, 0
  %v1350 = vsel %vm20, %v1303, 0
  %1352 = vmatprep.subr.mxu0 0.0
  %1353 = vmatpush1.msra.mxu0 %v191
  %1354 = vmatprep.subr.mxu0 0.0
  %1355 = vmatpush1.msra.mxu0 0.0
  %1356 = vmatprep.subr.mxu0 0.0
  %1357 = vmatpush1.msra.mxu0 0.0
  %1358 = vmatprep.subr.mxu0 0.0
  %1359 = vmatpush1.msra.mxu0 0.0
  %1360 = vmatprep.subr.mxu0 0.0
  %1361 = vmatpush1.msra.mxu0 0.0
  %1362 = vmatprep.subr.mxu0 0.0
  %1363 = vmatpush1.msra.mxu0 0.0
  %1364 = vmatprep.subr.mxu0 0.0
  %1365 = vmatpush1.msra.mxu0 0.0
  %1366 = vmatprep.subr.mxu0 0.0
  %1367 = vmatpush1.msra.mxu0 0.0
  %1368 = vmatprep.subr.mxu0 0.0
  %1369 = vmatpush1.msra.mxu0 0.0
  %1370 = vmatprep.subr.mxu0 0.0
  %1371 = vmatpush1.msra.mxu0 0.0
  %1372 = vmatprep.subr.mxu0 0.0
  %1373 = vmatpush1.msra.mxu0 0.0
  %1374 = vmatprep.subr.mxu0 0.0
  %1375 = vmatpush1.msra.mxu0 0.0
  %1376 = vmatprep.subr.mxu0 0.0
  %1377 = vmatpush1.msra.mxu0 0.0
  %1378 = vmatprep.subr.mxu0 0.0
  %1379 = vmatpush1.msra.mxu0 0.0
  %1380 = vmatprep.subr.mxu0 0.0
  %1381 = vmatpush1.msra.mxu0 0.0
  %1382 = vmatprep.subr.mxu0 0.0
  %1383 = vmatpush1.msra.mxu0 0.0
  %1384 = vmatprep.subr.mxu0 0.0
  %1385 = vmatpush1.msra.mxu0 0.0
  %1386 = vmatprep.subr.mxu0 0.0
  %1387 = vmatpush1.msra.mxu0 0.0
  %1388 = vmatprep.subr.mxu0 0.0
  %1389 = vmatpush1.msra.mxu0 0.0
  %1390 = vmatprep.subr.mxu0 0.0
  %1391 = vmatpush1.msra.mxu0 0.0
  %1392 = vmatprep.subr.mxu0 0.0
  %1393 = vmatpush1.msra.mxu0 0.0
  %1394 = vmatprep.subr.mxu0 0.0
  %1395 = vmatpush1.msra.mxu0 0.0
  %1396 = vmatprep.subr.mxu0 0.0
  %1397 = vmatpush1.msra.mxu0 0.0
  %1398 = vmatprep.subr.mxu0 0.0
  %1399 = vmatpush1.msra.mxu0 0.0
  %1400 = vmatprep.subr.mxu0 0.0
  %1401 = vmatpush1.msra.mxu0 0.0
  %1402 = vmatprep.subr.mxu0 0.0
  %1403 = vmatpush1.msra.mxu0 0.0
  %1404 = vmatprep.subr.mxu0 0.0
  %1405 = vmatpush1.msra.mxu0 0.0
  %1406 = vmatprep.subr.mxu0 0.0
  %1407 = vmatpush1.msra.mxu0 0.0
  %1408 = vmatprep.subr.mxu0 0.0
  %1409 = vmatpush1.msra.mxu0 0.0
  %1410 = vmatprep.subr.mxu0 0.0
  %1411 = vmatpush1.msra.mxu0 0.0
  %1412 = vmatprep.subr.mxu0 0.0
  %1413 = vmatpush1.msra.mxu0 0.0
  %1414 = vmatprep.subr.mxu0 0.0
  %1415 = vmatpush1.msra.mxu0 0.0
  %1416 = vmatprep.mubr.f32.mxu0 0.0
  %1417 = vmatmul.mubr.f32.gmra.mrb[0].mxu0 %v1305
  %v1418 = vpop.f32.mrb[0].mxu0
  %v1419 = vadd.f32 0.0, %v1418
  %v1420 = vpop.f32.mrb[0].mxu0
  %1421 = vmatprep.mubr.f32.mxu0 0.0
  %1422 = vmatmul.mubr.f32.gmra.mrb[0].mxu0 %v1308
  %v1423 = vpop.f32.mrb[0].mxu0
  %v1424 = vadd.f32 0.0, %v1423
  %v1425 = vpop.f32.mrb[0].mxu0
  %1426 = vmatprep.mubr.f32.mxu0 0.0
  %1427 = vmatmul.mubr.f32.gmra.mrb[0].mxu0 %v1311
  %v1428 = vpop.f32.mrb[0].mxu0
  %v1429 = vadd.f32 0.0, %v1428
  %v1430 = vpop.f32.mrb[0].mxu0
  %1431 = vmatprep.mubr.f32.mxu0 0.0
  %1432 = vmatmul.mubr.f32.gmra.mrb[0].mxu0 %v1314
  %v1433 = vpop.f32.mrb[0].mxu0
  %v1434 = vadd.f32 0.0, %v1433
  %v1435 = vpop.f32.mrb[0].mxu0
  %1436 = vmatprep.mubr.f32.mxu0 0.0
  %1437 = vmatmul.mubr.f32.gmra.mrb[0].mxu0 %v1317
  %v1438 = vpop.f32.mrb[0].mxu0
  %v1439 = vadd.f32 0.0, %v1438
  %v1440 = vpop.f32.mrb[0].mxu0
  %1441 = vmatprep.mubr.f32.mxu0 0.0
  %1442 = vmatmul.mubr.f32.gmra.mrb[0].mxu0 %v1320
  %v1443 = vpop.f32.mrb[0].mxu0
  %v1444 = vadd.f32 0.0, %v1443
  %v1445 = vpop.f32.mrb[0].mxu0
  %1446 = vmatprep.mubr.f32.mxu0 0.0
  %1447 = vmatmul.mubr.f32.gmra.mrb[0].mxu0 %v1323
  %v1448 = vpop.f32.mrb[0].mxu0
  %v1449 = vadd.f32 0.0, %v1448
  %v1450 = vpop.f32.mrb[0].mxu0
  %1451 = vmatprep.mubr.f32.mxu0 0.0
  %1452 = vmatmul.mubr.f32.gmra.mrb[0].mxu0 %v1326
  %v1453 = vpop.f32.mrb[0].mxu0
  %v1454 = vadd.f32 0.0, %v1453
  %v1455 = vpop.f32.mrb[0].mxu0
  %1456 = vmatprep.mubr.f32.mxu0 0.0
  %1457 = vmatmul.mubr.f32.gmra.mrb[0].mxu0 %v1329
  %v1458 = vpop.f32.mrb[0].mxu0
  %v1459 = vadd.f32 0.0, %v1458
  %v1460 = vpop.f32.mrb[0].mxu0
  %1461 = vmatprep.mubr.f32.mxu0 0.0
  %1462 = vmatmul.mubr.f32.gmra.mrb[0].mxu0 %v1332
  %v1463 = vpop.f32.mrb[0].mxu0
  %v1464 = vadd.f32 0.0, %v1463
  %v1465 = vpop.f32.mrb[0].mxu0
  %1466 = vmatprep.mubr.f32.mxu0 0.0
  %1467 = vmatmul.mubr.f32.gmra.mrb[0].mxu0 %v1335
  %v1468 = vpop.f32.mrb[0].mxu0
  %v1469 = vadd.f32 0.0, %v1468
  %v1470 = vpop.f32.mrb[0].mxu0
  %1471 = vmatprep.mubr.f32.mxu0 0.0
  %1472 = vmatmul.mubr.f32.gmra.mrb[0].mxu0 %v1338
  %v1473 = vpop.f32.mrb[0].mxu0
  %v1474 = vadd.f32 0.0, %v1473
  %v1475 = vpop.f32.mrb[0].mxu0
  %1476 = vmatprep.mubr.f32.mxu0 0.0
  %1477 = vmatmul.mubr.f32.gmra.mrb[0].mxu0 %v1341
  %v1478 = vpop.f32.mrb[0].mxu0
  %v1479 = vadd.f32 0.0, %v1478
  %v1480 = vpop.f32.mrb[0].mxu0
  %1481 = vmatprep.mubr.f32.mxu0 0.0
  %1482 = vmatmul.mubr.f32.gmra.mrb[0].mxu0 %v1344
  %v1483 = vpop.f32.mrb[0].mxu0
  %v1484 = vadd.f32 0.0, %v1483
  %v1485 = vpop.f32.mrb[0].mxu0
  %1486 = vmatprep.mubr.f32.mxu0 0.0
  %1487 = vmatmul.mubr.f32.gmra.mrb[0].mxu0 %v1347
  %v1488 = vpop.f32.mrb[0].mxu0
  %v1489 = vadd.f32 0.0, %v1488
  %v1490 = vpop.f32.mrb[0].mxu0
  %1491 = vmatprep.mubr.f32.mxu0 0.0
  %1492 = vmatmul.mubr.f32.gmra.mrb[0].mxu0 %v1350
  %v1493 = vpop.f32.mrb[0].mxu0
  %v1494 = vadd.f32 0.0, %v1493
  %v1495 = vpop.f32.mrb[0].mxu0
  %1496 = vdwg.mxu0
  %v1497 = vadd.f32 %v1272, %v1419
  %v1498 = vadd.f32 %v1273, %v1424
  %v1499 = vadd.f32 %v1274, %v1429
  %v1500 = vadd.f32 %v1275, %v1434
  %v1501 = vadd.f32 %v1276, %v1439
  %v1502 = vadd.f32 %v1277, %v1444
  %v1503 = vadd.f32 %v1278, %v1449
  %v1504 = vadd.f32 %v1279, %v1454
  %v1505 = vadd.f32 %v1280, %v1459
  %v1506 = vadd.f32 %v1281, %v1464
  %v1507 = vadd.f32 %v1282, %v1469
  %v1508 = vadd.f32 %v1283, %v1474
  %v1509 = vadd.f32 %v1284, %v1479
  %v1510 = vadd.f32 %v1285, %v1484
  %v1511 = vadd.f32 %v1286, %v1489
  %v1512 = vadd.f32 %v1287, %v1494
  %s1513 = scalar_lea.vmem [#allocation2], 32
  %v1514 = vld [vmem:[%s1513] sm:$0xff]
  %v1515 = vld [vmem:[%s1513 + $0x10] sm:$0xff]
  %v1516 = vld [vmem:[%s1513 + $0x20] sm:$0xff]
  %v1517 = vld [vmem:[%s1513 + $0x30] sm:$0xff]
  %v1518 = vld [vmem:[%s1513 + $0x40] sm:$0xff]
  %v1519 = vld [vmem:[%s1513 + $0x50] sm:$0xff]
  %v1520 = vld [vmem:[%s1513 + $0x60] sm:$0xff]
  %v1521 = vld [vmem:[%s1513 + $0x70] sm:$0xff]
  %v1522 = vld [vmem:[%s1513 + $0xa0] sm:$0xff]
  %v1523 = vld [vmem:[%s1513 + $0xb0] sm:$0xff]
  %v1524 = vld [vmem:[%s1513 + $0xc0] sm:$0xff]
  %v1525 = vld [vmem:[%s1513 + $0xd0] sm:$0xff]
  %v1526 = vld [vmem:[%s1513 + $0xe0] sm:$0xff]
  %v1527 = vld [vmem:[%s1513 + $0xf0] sm:$0xff]
  %v1528 = vld [vmem:[%s1513 + $0x100] sm:$0xff]
  %v1529 = vld [vmem:[%s1513 + $0x110] sm:$0xff]
  %v1531 = vsel %vm20, %v1514, 0
  %v1534 = vsel %vm20, %v1515, 0
  %v1537 = vsel %vm20, %v1516, 0
  %v1540 = vsel %vm20, %v1517, 0
  %v1543 = vsel %vm20, %v1518, 0
  %v1546 = vsel %vm20, %v1519, 0
  %v1549 = vsel %vm20, %v1520, 0
  %v1552 = vsel %vm20, %v1521, 0
  %v1555 = vsel %vm20, %v1522, 0
  %v1558 = vsel %vm20, %v1523, 0
  %v1561 = vsel %vm20, %v1524, 0
  %v1564 = vsel %vm20, %v1525, 0
  %v1567 = vsel %vm20, %v1526, 0
  %v1570 = vsel %vm20, %v1527, 0
  %v1573 = vsel %vm20, %v1528, 0
  %v1576 = vsel %vm20, %v1529, 0
  %1578 = vmatprep.subr.mxu0 0.0
  %1579 = vmatpush1.msra.mxu0 %v192
  %1580 = vmatprep.subr.mxu0 0.0
  %1581 = vmatpush1.msra.mxu0 0.0
  %1582 = vmatprep.subr.mxu0 0.0
  %1583 = vmatpush1.msra.mxu0 0.0
  %1584 = vmatprep.subr.mxu0 0.0
  %1585 = vmatpush1.msra.mxu0 0.0
  %1586 = vmatprep.subr.mxu0 0.0
  %1587 = vmatpush1.msra.mxu0 0.0
  %1588 = vmatprep.subr.mxu0 0.0
  %1589 = vmatpush1.msra.mxu0 0.0
  %1590 = vmatprep.subr.mxu0 0.0
  %1591 = vmatpush1.msra.mxu0 0.0
  %1592 = vmatprep.subr.mxu0 0.0
  %1593 = vmatpush1.msra.mxu0 0.0
  %1594 = vmatprep.subr.mxu0 0.0
  %1595 = vmatpush1.msra.mxu0 0.0
  %1596 = vmatprep.subr.mxu0 0.0
  %1597 = vmatpush1.msra.mxu0 0.0
  %1598 = vmatprep.subr.mxu0 0.0
  %1599 = vmatpush1.msra.mxu0 0.0
  %1600 = vmatprep.subr.mxu0 0.0
  %1601 = vmatpush1.msra.mxu0 0.0
  %1602 = vmatprep.subr.mxu0 0.0
  %1603 = vmatpush1.msra.mxu0 0.0
  %1604 = vmatprep.subr.mxu0 0.0
  %1605 = vmatpush1.msra.mxu0 0.0
  %1606 = vmatprep.subr.mxu0 0.0
  %1607 = vmatpush1.msra.mxu0 0.0
  %1608 = vmatprep.subr.mxu0 0.0
  %1609 = vmatpush1.msra.mxu0 0.0
  %1610 = vmatprep.subr.mxu0 0.0
  %1611 = vmatpush1.msra.mxu0 0.0
  %1612 = vmatprep.subr.mxu0 0.0
  %1613 = vmatpush1.msra.mxu0 0.0
  %1614 = vmatprep.subr.mxu0 0.0
  %1615 = vmatpush1.msra.mxu0 0.0
  %1616 = vmatprep.subr.mxu0 0.0
  %1617 = vmatpush1.msra.mxu0 0.0
  %1618 = vmatprep.subr.mxu0 0.0
  %1619 = vmatpush1.msra.mxu0 0.0
  %1620 = vmatprep.subr.mxu0 0.0
  %1621 = vmatpush1.msra.mxu0 0.0
  %1622 = vmatprep.subr.mxu0 0.0
  %1623 = vmatpush1.msra.mxu0 0.0
  %1624 = vmatprep.subr.mxu0 0.0
  %1625 = vmatpush1.msra.mxu0 0.0
  %1626 = vmatprep.subr.mxu0 0.0
  %1627 = vmatpush1.msra.mxu0 0.0
  %1628 = vmatprep.subr.mxu0 0.0
  %1629 = vmatpush1.msra.mxu0 0.0
  %1630 = vmatprep.subr.mxu0 0.0
  %1631 = vmatpush1.msra.mxu0 0.0
  %1632 = vmatprep.subr.mxu0 0.0
  %1633 = vmatpush1.msra.mxu0 0.0
  %1634 = vmatprep.subr.mxu0 0.0
  %1635 = vmatpush1.msra.mxu0 0.0
  %1636 = vmatprep.subr.mxu0 0.0
  %1637 = vmatpush1.msra.mxu0 0.0
  %1638 = vmatprep.subr.mxu0 0.0
  %1639 = vmatpush1.msra.mxu0 0.0
  %1640 = vmatprep.subr.mxu0 0.0
  %1641 = vmatpush1.msra.mxu0 0.0
  %1642 = vmatprep.mubr.f32.mxu0 0.0
  %1643 = vmatmul.mubr.f32.gmra.mrb[0].mxu0 %v1531
  %v1644 = vpop.f32.mrb[0].mxu0
  %v1645 = vadd.f32 0.0, %v1644
  %v1646 = vpop.f32.mrb[0].mxu0
  %1647 = vmatprep.mubr.f32.mxu0 0.0
  %1648 = vmatmul.mubr.f32.gmra.mrb[0].mxu0 %v1534
  %v1649 = vpop.f32.mrb[0].mxu0
  %v1650 = vadd.f32 0.0, %v1649
  %v1651 = vpop.f32.mrb[0].mxu0
  %1652 = vmatprep.mubr.f32.mxu0 0.0
  %1653 = vmatmul.mubr.f32.gmra.mrb[0].mxu0 %v1537
  %v1654 = vpop.f32.mrb[0].mxu0
  %v1655 = vadd.f32 0.0, %v1654
  %v1656 = vpop.f32.mrb[0].mxu0
  %1657 = vmatprep.mubr.f32.mxu0 0.0
  %1658 = vmatmul.mubr.f32.gmra.mrb[0].mxu0 %v1540
  %v1659 = vpop.f32.mrb[0].mxu0
  %v1660 = vadd.f32 0.0, %v1659
  %v1661 = vpop.f32.mrb[0].mxu0
  %1662 = vmatprep.mubr.f32.mxu0 0.0
  %1663 = vmatmul.mubr.f32.gmra.mrb[0].mxu0 %v1543
  %v1664 = vpop.f32.mrb[0].mxu0
  %v1665 = vadd.f32 0.0, %v1664
  %v1666 = vpop.f32.mrb[0].mxu0
  %1667 = vmatprep.mubr.f32.mxu0 0.0
  %1668 = vmatmul.mubr.f32.gmra.mrb[0].mxu0 %v1546
  %v1669 = vpop.f32.mrb[0].mxu0
  %v1670 = vadd.f32 0.0, %v1669
  %v1671 = vpop.f32.mrb[0].mxu0
  %1672 = vmatprep.mubr.f32.mxu0 0.0
  %1673 = vmatmul.mubr.f32.gmra.mrb[0].mxu0 %v1549
  %v1674 = vpop.f32.mrb[0].mxu0
  %v1675 = vadd.f32 0.0, %v1674
  %v1676 = vpop.f32.mrb[0].mxu0
  %1677 = vmatprep.mubr.f32.mxu0 0.0
  %1678 = vmatmul.mubr.f32.gmra.mrb[0].mxu0 %v1552
  %v1679 = vpop.f32.mrb[0].mxu0
  %v1680 = vadd.f32 0.0, %v1679
  %v1681 = vpop.f32.mrb[0].mxu0
  %1682 = vmatprep.mubr.f32.mxu0 0.0
  %1683 = vmatmul.mubr.f32.gmra.mrb[0].mxu0 %v1555
  %v1684 = vpop.f32.mrb[0].mxu0
  %v1685 = vadd.f32 0.0, %v1684
  %v1686 = vpop.f32.mrb[0].mxu0
  %1687 = vmatprep.mubr.f32.mxu0 0.0
  %1688 = vmatmul.mubr.f32.gmra.mrb[0].mxu0 %v1558
  %v1689 = vpop.f32.mrb[0].mxu0
  %v1690 = vadd.f32 0.0, %v1689
  %v1691 = vpop.f32.mrb[0].mxu0
  %1692 = vmatprep.mubr.f32.mxu0 0.0
  %1693 = vmatmul.mubr.f32.gmra.mrb[0].mxu0 %v1561
  %v1694 = vpop.f32.mrb[0].mxu0
  %v1695 = vadd.f32 0.0, %v1694
  %v1696 = vpop.f32.mrb[0].mxu0
  %1697 = vmatprep.mubr.f32.mxu0 0.0
  %1698 = vmatmul.mubr.f32.gmra.mrb[0].mxu0 %v1564
  %v1699 = vpop.f32.mrb[0].mxu0
  %v1700 = vadd.f32 0.0, %v1699
  %v1701 = vpop.f32.mrb[0].mxu0
  %1702 = vmatprep.mubr.f32.mxu0 0.0
  %1703 = vmatmul.mubr.f32.gmra.mrb[0].mxu0 %v1567
  %v1704 = vpop.f32.mrb[0].mxu0
  %v1705 = vadd.f32 0.0, %v1704
  %v1706 = vpop.f32.mrb[0].mxu0
  %1707 = vmatprep.mubr.f32.mxu0 0.0
  %1708 = vmatmul.mubr.f32.gmra.mrb[0].mxu0 %v1570
  %v1709 = vpop.f32.mrb[0].mxu0
  %v1710 = vadd.f32 0.0, %v1709
  %v1711 = vpop.f32.mrb[0].mxu0
  %1712 = vmatprep.mubr.f32.mxu0 0.0
  %1713 = vmatmul.mubr.f32.gmra.mrb[0].mxu0 %v1573
  %v1714 = vpop.f32.mrb[0].mxu0
  %v1715 = vadd.f32 0.0, %v1714
  %v1716 = vpop.f32.mrb[0].mxu0
  %1717 = vmatprep.mubr.f32.mxu0 0.0
  %1718 = vmatmul.mubr.f32.gmra.mrb[0].mxu0 %v1576
  %v1719 = vpop.f32.mrb[0].mxu0
  %v1720 = vadd.f32 0.0, %v1719
  %v1721 = vpop.f32.mrb[0].mxu0
  %1722 = vdwg.mxu0
  %v1723 = vadd.f32 %v1497, %v1645
  %v1724 = vadd.f32 %v1498, %v1650
  %v1725 = vadd.f32 %v1499, %v1655
  %v1726 = vadd.f32 %v1500, %v1660
  %v1727 = vadd.f32 %v1501, %v1665
  %v1728 = vadd.f32 %v1502, %v1670
  %v1729 = vadd.f32 %v1503, %v1675
  %v1730 = vadd.f32 %v1504, %v1680
  %v1731 = vadd.f32 %v1505, %v1685
  %v1732 = vadd.f32 %v1506, %v1690
  %v1733 = vadd.f32 %v1507, %v1695
  %v1734 = vadd.f32 %v1508, %v1700
  %v1735 = vadd.f32 %v1509, %v1705
  %v1736 = vadd.f32 %v1510, %v1710
  %v1737 = vadd.f32 %v1511, %v1715
  %v1738 = vadd.f32 %v1512, %v1720
  %v1739 = vld [vmem:[%s1513 + $0x1] sm:$0xff]
  %v1740 = vld [vmem:[%s1513 + $0x11] sm:$0xff]
  %v1741 = vld [vmem:[%s1513 + $0x21] sm:$0xff]
  %v1742 = vld [vmem:[%s1513 + $0x31] sm:$0xff]
  %v1743 = vld [vmem:[%s1513 + $0x41] sm:$0xff]
  %v1744 = vld [vmem:[%s1513 + $0x51] sm:$0xff]
  %v1745 = vld [vmem:[%s1513 + $0x61] sm:$0xff]
  %v1746 = vld [vmem:[%s1513 + $0x71] sm:$0xff]
  %v1747 = vld [vmem:[%s1513 + $0xa1] sm:$0xff]
  %v1748 = vld [vmem:[%s1513 + $0xb1] sm:$0xff]
  %v1749 = vld [vmem:[%s1513 + $0xc1] sm:$0xff]
  %v1750 = vld [vmem:[%s1513 + $0xd1] sm:$0xff]
  %v1751 = vld [vmem:[%s1513 + $0xe1] sm:$0xff]
  %v1752 = vld [vmem:[%s1513 + $0xf1] sm:$0xff]
  %v1753 = vld [vmem:[%s1513 + $0x101] sm:$0xff]
  %v1754 = vld [vmem:[%s1513 + $0x111] sm:$0xff]
  %v1756 = vsel %vm20, %v1739, 0
  %v1759 = vsel %vm20, %v1740, 0
  %v1762 = vsel %vm20, %v1741, 0
  %v1765 = vsel %vm20, %v1742, 0
  %v1768 = vsel %vm20, %v1743, 0
  %v1771 = vsel %vm20, %v1744, 0
  %v1774 = vsel %vm20, %v1745, 0
  %v1777 = vsel %vm20, %v1746, 0
  %v1780 = vsel %vm20, %v1747, 0
  %v1783 = vsel %vm20, %v1748, 0
  %v1786 = vsel %vm20, %v1749, 0
  %v1789 = vsel %vm20, %v1750, 0
  %v1792 = vsel %vm20, %v1751, 0
  %v1795 = vsel %vm20, %v1752, 0
  %v1798 = vsel %vm20, %v1753, 0
  %v1801 = vsel %vm20, %v1754, 0
  %1803 = vmatprep.subr.mxu0 0.0
  %1804 = vmatpush1.msra.mxu0 %v193
  %1805 = vmatprep.subr.mxu0 0.0
  %1806 = vmatpush1.msra.mxu0 0.0
  %1807 = vmatprep.subr.mxu0 0.0
  %1808 = vmatpush1.msra.mxu0 0.0
  %1809 = vmatprep.subr.mxu0 0.0
  %1810 = vmatpush1.msra.mxu0 0.0
  %1811 = vmatprep.subr.mxu0 0.0
  %1812 = vmatpush1.msra.mxu0 0.0
  %1813 = vmatprep.subr.mxu0 0.0
  %1814 = vmatpush1.msra.mxu0 0.0
  %1815 = vmatprep.subr.mxu0 0.0
  %1816 = vmatpush1.msra.mxu0 0.0
  %1817 = vmatprep.subr.mxu0 0.0
  %1818 = vmatpush1.msra.mxu0 0.0
  %1819 = vmatprep.subr.mxu0 0.0
  %1820 = vmatpush1.msra.mxu0 0.0
  %1821 = vmatprep.subr.mxu0 0.0
  %1822 = vmatpush1.msra.mxu0 0.0
  %1823 = vmatprep.subr.mxu0 0.0
  %1824 = vmatpush1.msra.mxu0 0.0
  %1825 = vmatprep.subr.mxu0 0.0
  %1826 = vmatpush1.msra.mxu0 0.0
  %1827 = vmatprep.subr.mxu0 0.0
  %1828 = vmatpush1.msra.mxu0 0.0
  %1829 = vmatprep.subr.mxu0 0.0
  %1830 = vmatpush1.msra.mxu0 0.0
  %1831 = vmatprep.subr.mxu0 0.0
  %1832 = vmatpush1.msra.mxu0 0.0
  %1833 = vmatprep.subr.mxu0 0.0
  %1834 = vmatpush1.msra.mxu0 0.0
  %1835 = vmatprep.subr.mxu0 0.0
  %1836 = vmatpush1.msra.mxu0 0.0
  %1837 = vmatprep.subr.mxu0 0.0
  %1838 = vmatpush1.msra.mxu0 0.0
  %1839 = vmatprep.subr.mxu0 0.0
  %1840 = vmatpush1.msra.mxu0 0.0
  %1841 = vmatprep.subr.mxu0 0.0
  %1842 = vmatpush1.msra.mxu0 0.0
  %1843 = vmatprep.subr.mxu0 0.0
  %1844 = vmatpush1.msra.mxu0 0.0
  %1845 = vmatprep.subr.mxu0 0.0
  %1846 = vmatpush1.msra.mxu0 0.0
  %1847 = vmatprep.subr.mxu0 0.0
  %1848 = vmatpush1.msra.mxu0 0.0
  %1849 = vmatprep.subr.mxu0 0.0
  %1850 = vmatpush1.msra.mxu0 0.0
  %1851 = vmatprep.subr.mxu0 0.0
  %1852 = vmatpush1.msra.mxu0 0.0
  %1853 = vmatprep.subr.mxu0 0.0
  %1854 = vmatpush1.msra.mxu0 0.0
  %1855 = vmatprep.subr.mxu0 0.0
  %1856 = vmatpush1.msra.mxu0 0.0
  %1857 = vmatprep.subr.mxu0 0.0
  %1858 = vmatpush1.msra.mxu0 0.0
  %1859 = vmatprep.subr.mxu0 0.0
  %1860 = vmatpush1.msra.mxu0 0.0
  %1861 = vmatprep.subr.mxu0 0.0
  %1862 = vmatpush1.msra.mxu0 0.0
  %1863 = vmatprep.subr.mxu0 0.0
  %1864 = vmatpush1.msra.mxu0 0.0
  %1865 = vmatprep.subr.mxu0 0.0
  %1866 = vmatpush1.msra.mxu0 0.0
  %1867 = vmatprep.mubr.f32.mxu0 0.0
  %1868 = vmatmul.mubr.f32.gmra.mrb[0].mxu0 %v1756
  %v1869 = vpop.f32.mrb[0].mxu0
  %v1870 = vadd.f32 0.0, %v1869
  %v1871 = vpop.f32.mrb[0].mxu0
  %1872 = vmatprep.mubr.f32.mxu0 0.0
  %1873 = vmatmul.mubr.f32.gmra.mrb[0].mxu0 %v1759
  %v1874 = vpop.f32.mrb[0].mxu0
  %v1875 = vadd.f32 0.0, %v1874
  %v1876 = vpop.f32.mrb[0].mxu0
  %1877 = vmatprep.mubr.f32.mxu0 0.0
  %1878 = vmatmul.mubr.f32.gmra.mrb[0].mxu0 %v1762
  %v1879 = vpop.f32.mrb[0].mxu0
  %v1880 = vadd.f32 0.0, %v1879
  %v1881 = vpop.f32.mrb[0].mxu0
  %1882 = vmatprep.mubr.f32.mxu0 0.0
  %1883 = vmatmul.mubr.f32.gmra.mrb[0].mxu0 %v1765
  %v1884 = vpop.f32.mrb[0].mxu0
  %v1885 = vadd.f32 0.0, %v1884
  %v1886 = vpop.f32.mrb[0].mxu0
  %1887 = vmatprep.mubr.f32.mxu0 0.0
  %1888 = vmatmul.mubr.f32.gmra.mrb[0].mxu0 %v1768
  %v1889 = vpop.f32.mrb[0].mxu0
  %v1890 = vadd.f32 0.0, %v1889
  %v1891 = vpop.f32.mrb[0].mxu0
  %1892 = vmatprep.mubr.f32.mxu0 0.0
  %1893 = vmatmul.mubr.f32.gmra.mrb[0].mxu0 %v1771
  %v1894 = vpop.f32.mrb[0].mxu0
  %v1895 = vadd.f32 0.0, %v1894
  %v1896 = vpop.f32.mrb[0].mxu0
  %1897 = vmatprep.mubr.f32.mxu0 0.0
  %1898 = vmatmul.mubr.f32.gmra.mrb[0].mxu0 %v1774
  %v1899 = vpop.f32.mrb[0].mxu0
  %v1900 = vadd.f32 0.0, %v1899
  %v1901 = vpop.f32.mrb[0].mxu0
  %1902 = vmatprep.mubr.f32.mxu0 0.0
  %1903 = vmatmul.mubr.f32.gmra.mrb[0].mxu0 %v1777
  %v1904 = vpop.f32.mrb[0].mxu0
  %v1905 = vadd.f32 0.0, %v1904
  %v1906 = vpop.f32.mrb[0].mxu0
  %1907 = vmatprep.mubr.f32.mxu0 0.0
  %1908 = vmatmul.mubr.f32.gmra.mrb[0].mxu0 %v1780
  %v1909 = vpop.f32.mrb[0].mxu0
  %v1910 = vadd.f32 0.0, %v1909
  %v1911 = vpop.f32.mrb[0].mxu0
  %1912 = vmatprep.mubr.f32.mxu0 0.0
  %1913 = vmatmul.mubr.f32.gmra.mrb[0].mxu0 %v1783
  %v1914 = vpop.f32.mrb[0].mxu0
  %v1915 = vadd.f32 0.0, %v1914
  %v1916 = vpop.f32.mrb[0].mxu0
  %1917 = vmatprep.mubr.f32.mxu0 0.0
  %1918 = vmatmul.mubr.f32.gmra.mrb[0].mxu0 %v1786
  %v1919 = vpop.f32.mrb[0].mxu0
  %v1920 = vadd.f32 0.0, %v1919
  %v1921 = vpop.f32.mrb[0].mxu0
  %1922 = vmatprep.mubr.f32.mxu0 0.0
  %1923 = vmatmul.mubr.f32.gmra.mrb[0].mxu0 %v1789
  %v1924 = vpop.f32.mrb[0].mxu0
  %v1925 = vadd.f32 0.0, %v1924
  %v1926 = vpop.f32.mrb[0].mxu0
  %1927 = vmatprep.mubr.f32.mxu0 0.0
  %1928 = vmatmul.mubr.f32.gmra.mrb[0].mxu0 %v1792
  %v1929 = vpop.f32.mrb[0].mxu0
  %v1930 = vadd.f32 0.0, %v1929
  %v1931 = vpop.f32.mrb[0].mxu0
  %1932 = vmatprep.mubr.f32.mxu0 0.0
  %1933 = vmatmul.mubr.f32.gmra.mrb[0].mxu0 %v1795
  %v1934 = vpop.f32.mrb[0].mxu0
  %v1935 = vadd.f32 0.0, %v1934
  %v1936 = vpop.f32.mrb[0].mxu0
  %1937 = vmatprep.mubr.f32.mxu0 0.0
  %1938 = vmatmul.mubr.f32.gmra.mrb[0].mxu0 %v1798
  %v1939 = vpop.f32.mrb[0].mxu0
  %v1940 = vadd.f32 0.0, %v1939
  %v1941 = vpop.f32.mrb[0].mxu0
  %1942 = vmatprep.mubr.f32.mxu0 0.0
  %1943 = vmatmul.mubr.f32.gmra.mrb[0].mxu0 %v1801
  %v1944 = vpop.f32.mrb[0].mxu0
  %v1945 = vadd.f32 0.0, %v1944
  %v1946 = vpop.f32.mrb[0].mxu0
  %1947 = vdwg.mxu0
  %v1948 = vadd.f32 %v1723, %v1870
  %v1949 = vadd.f32 %v1724, %v1875
  %v1950 = vadd.f32 %v1725, %v1880
  %v1951 = vadd.f32 %v1726, %v1885
  %v1952 = vadd.f32 %v1727, %v1890
  %v1953 = vadd.f32 %v1728, %v1895
  %v1954 = vadd.f32 %v1729, %v1900
  %v1955 = vadd.f32 %v1730, %v1905
  %v1956 = vadd.f32 %v1731, %v1910
  %v1957 = vadd.f32 %v1732, %v1915
  %v1958 = vadd.f32 %v1733, %v1920
  %v1959 = vadd.f32 %v1734, %v1925
  %v1960 = vadd.f32 %v1735, %v1930
  %v1961 = vadd.f32 %v1736, %v1935
  %v1962 = vadd.f32 %v1737, %v1940
  %v1963 = vadd.f32 %v1738, %v1945
  %v1964 = vld [vmem:[%s1513 + $0x2] sm:$0xff]
  %v1965 = vld [vmem:[%s1513 + $0x12] sm:$0xff]
  %v1966 = vld [vmem:[%s1513 + $0x22] sm:$0xff]
  %v1967 = vld [vmem:[%s1513 + $0x32] sm:$0xff]
  %v1968 = vld [vmem:[%s1513 + $0x42] sm:$0xff]
  %v1969 = vld [vmem:[%s1513 + $0x52] sm:$0xff]
  %v1970 = vld [vmem:[%s1513 + $0x62] sm:$0xff]
  %v1971 = vld [vmem:[%s1513 + $0x72] sm:$0xff]
  %v1972 = vld [vmem:[%s1513 + $0xa2] sm:$0xff]
  %v1973 = vld [vmem:[%s1513 + $0xb2] sm:$0xff]
  %v1974 = vld [vmem:[%s1513 + $0xc2] sm:$0xff]
  %v1975 = vld [vmem:[%s1513 + $0xd2] sm:$0xff]
  %v1976 = vld [vmem:[%s1513 + $0xe2] sm:$0xff]
  %v1977 = vld [vmem:[%s1513 + $0xf2] sm:$0xff]
  %v1978 = vld [vmem:[%s1513 + $0x102] sm:$0xff]
  %v1979 = vld [vmem:[%s1513 + $0x112] sm:$0xff]
  %v1981 = vsel %vm20, %v1964, 0
  %v1984 = vsel %vm20, %v1965, 0
  %v1987 = vsel %vm20, %v1966, 0
  %v1990 = vsel %vm20, %v1967, 0
  %v1993 = vsel %vm20, %v1968, 0
  %v1996 = vsel %vm20, %v1969, 0
  %v1999 = vsel %vm20, %v1970, 0
  %v2002 = vsel %vm20, %v1971, 0
  %v2005 = vsel %vm20, %v1972, 0
  %v2008 = vsel %vm20, %v1973, 0
  %v2011 = vsel %vm20, %v1974, 0
  %v2014 = vsel %vm20, %v1975, 0
  %v2017 = vsel %vm20, %v1976, 0
  %v2020 = vsel %vm20, %v1977, 0
  %v2023 = vsel %vm20, %v1978, 0
  %v2026 = vsel %vm20, %v1979, 0
  %2028 = vmatprep.subr.mxu0 0.0
  %2029 = vmatpush1.msra.mxu0 %v194
  %2030 = vmatprep.subr.mxu0 0.0
  %2031 = vmatpush1.msra.mxu0 0.0
  %2032 = vmatprep.subr.mxu0 0.0
  %2033 = vmatpush1.msra.mxu0 0.0
  %2034 = vmatprep.subr.mxu0 0.0
  %2035 = vmatpush1.msra.mxu0 0.0
  %2036 = vmatprep.subr.mxu0 0.0
  %2037 = vmatpush1.msra.mxu0 0.0
  %2038 = vmatprep.subr.mxu0 0.0
  %2039 = vmatpush1.msra.mxu0 0.0
  %2040 = vmatprep.subr.mxu0 0.0
  %2041 = vmatpush1.msra.mxu0 0.0
  %2042 = vmatprep.subr.mxu0 0.0
  %2043 = vmatpush1.msra.mxu0 0.0
  %2044 = vmatprep.subr.mxu0 0.0
  %2045 = vmatpush1.msra.mxu0 0.0
  %2046 = vmatprep.subr.mxu0 0.0
  %2047 = vmatpush1.msra.mxu0 0.0
  %2048 = vmatprep.subr.mxu0 0.0
  %2049 = vmatpush1.msra.mxu0 0.0
  %2050 = vmatprep.subr.mxu0 0.0
  %2051 = vmatpush1.msra.mxu0 0.0
  %2052 = vmatprep.subr.mxu0 0.0
  %2053 = vmatpush1.msra.mxu0 0.0
  %2054 = vmatprep.subr.mxu0 0.0
  %2055 = vmatpush1.msra.mxu0 0.0
  %2056 = vmatprep.subr.mxu0 0.0
  %2057 = vmatpush1.msra.mxu0 0.0
  %2058 = vmatprep.subr.mxu0 0.0
  %2059 = vmatpush1.msra.mxu0 0.0
  %2060 = vmatprep.subr.mxu0 0.0
  %2061 = vmatpush1.msra.mxu0 0.0
  %2062 = vmatprep.subr.mxu0 0.0
  %2063 = vmatpush1.msra.mxu0 0.0
  %2064 = vmatprep.subr.mxu0 0.0
  %2065 = vmatpush1.msra.mxu0 0.0
  %2066 = vmatprep.subr.mxu0 0.0
  %2067 = vmatpush1.msra.mxu0 0.0
  %2068 = vmatprep.subr.mxu0 0.0
  %2069 = vmatpush1.msra.mxu0 0.0
  %2070 = vmatprep.subr.mxu0 0.0
  %2071 = vmatpush1.msra.mxu0 0.0
  %2072 = vmatprep.subr.mxu0 0.0
  %2073 = vmatpush1.msra.mxu0 0.0
  %2074 = vmatprep.subr.mxu0 0.0
  %2075 = vmatpush1.msra.mxu0 0.0
  %2076 = vmatprep.subr.mxu0 0.0
  %2077 = vmatpush1.msra.mxu0 0.0
  %2078 = vmatprep.subr.mxu0 0.0
  %2079 = vmatpush1.msra.mxu0 0.0
  %2080 = vmatprep.subr.mxu0 0.0
  %2081 = vmatpush1.msra.mxu0 0.0
  %2082 = vmatprep.subr.mxu0 0.0
  %2083 = vmatpush1.msra.mxu0 0.0
  %2084 = vmatprep.subr.mxu0 0.0
  %2085 = vmatpush1.msra.mxu0 0.0
  %2086 = vmatprep.subr.mxu0 0.0
  %2087 = vmatpush1.msra.mxu0 0.0
  %2088 = vmatprep.subr.mxu0 0.0
  %2089 = vmatpush1.msra.mxu0 0.0
  %2090 = vmatprep.subr.mxu0 0.0
  %2091 = vmatpush1.msra.mxu0 0.0
  %2092 = vmatprep.mubr.f32.mxu0 0.0
  %2093 = vmatmul.mubr.f32.gmra.mrb[0].mxu0 %v1981
  %v2094 = vpop.f32.mrb[0].mxu0
  %v2095 = vadd.f32 0.0, %v2094
  %v2096 = vpop.f32.mrb[0].mxu0
  %2097 = vmatprep.mubr.f32.mxu0 0.0
  %2098 = vmatmul.mubr.f32.gmra.mrb[0].mxu0 %v1984
  %v2099 = vpop.f32.mrb[0].mxu0
  %v2100 = vadd.f32 0.0, %v2099
  %v2101 = vpop.f32.mrb[0].mxu0
  %2102 = vmatprep.mubr.f32.mxu0 0.0
  %2103 = vmatmul.mubr.f32.gmra.mrb[0].mxu0 %v1987
  %v2104 = vpop.f32.mrb[0].mxu0
  %v2105 = vadd.f32 0.0, %v2104
  %v2106 = vpop.f32.mrb[0].mxu0
  %2107 = vmatprep.mubr.f32.mxu0 0.0
  %2108 = vmatmul.mubr.f32.gmra.mrb[0].mxu0 %v1990
  %v2109 = vpop.f32.mrb[0].mxu0
  %v2110 = vadd.f32 0.0, %v2109
  %v2111 = vpop.f32.mrb[0].mxu0
  %2112 = vmatprep.mubr.f32.mxu0 0.0
  %2113 = vmatmul.mubr.f32.gmra.mrb[0].mxu0 %v1993
  %v2114 = vpop.f32.mrb[0].mxu0
  %v2115 = vadd.f32 0.0, %v2114
  %v2116 = vpop.f32.mrb[0].mxu0
  %2117 = vmatprep.mubr.f32.mxu0 0.0
  %2118 = vmatmul.mubr.f32.gmra.mrb[0].mxu0 %v1996
  %v2119 = vpop.f32.mrb[0].mxu0
  %v2120 = vadd.f32 0.0, %v2119
  %v2121 = vpop.f32.mrb[0].mxu0
  %2122 = vmatprep.mubr.f32.mxu0 0.0
  %2123 = vmatmul.mubr.f32.gmra.mrb[0].mxu0 %v1999
  %v2124 = vpop.f32.mrb[0].mxu0
  %v2125 = vadd.f32 0.0, %v2124
  %v2126 = vpop.f32.mrb[0].mxu0
  %2127 = vmatprep.mubr.f32.mxu0 0.0
  %2128 = vmatmul.mubr.f32.gmra.mrb[0].mxu0 %v2002
  %v2129 = vpop.f32.mrb[0].mxu0
  %v2130 = vadd.f32 0.0, %v2129
  %v2131 = vpop.f32.mrb[0].mxu0
  %2132 = vmatprep.mubr.f32.mxu0 0.0
  %2133 = vmatmul.mubr.f32.gmra.mrb[0].mxu0 %v2005
  %v2134 = vpop.f32.mrb[0].mxu0
  %v2135 = vadd.f32 0.0, %v2134
  %v2136 = vpop.f32.mrb[0].mxu0
  %2137 = vmatprep.mubr.f32.mxu0 0.0
  %2138 = vmatmul.mubr.f32.gmra.mrb[0].mxu0 %v2008
  %v2139 = vpop.f32.mrb[0].mxu0
  %v2140 = vadd.f32 0.0, %v2139
  %v2141 = vpop.f32.mrb[0].mxu0
  %2142 = vmatprep.mubr.f32.mxu0 0.0
  %2143 = vmatmul.mubr.f32.gmra.mrb[0].mxu0 %v2011
  %v2144 = vpop.f32.mrb[0].mxu0
  %v2145 = vadd.f32 0.0, %v2144
  %v2146 = vpop.f32.mrb[0].mxu0
  %2147 = vmatprep.mubr.f32.mxu0 0.0
  %2148 = vmatmul.mubr.f32.gmra.mrb[0].mxu0 %v2014
  %v2149 = vpop.f32.mrb[0].mxu0
  %v2150 = vadd.f32 0.0, %v2149
  %v2151 = vpop.f32.mrb[0].mxu0
  %2152 = vmatprep.mubr.f32.mxu0 0.0
  %2153 = vmatmul.mubr.f32.gmra.mrb[0].mxu0 %v2017
  %v2154 = vpop.f32.mrb[0].mxu0
  %v2155 = vadd.f32 0.0, %v2154
  %v2156 = vpop.f32.mrb[0].mxu0
  %2157 = vmatprep.mubr.f32.mxu0 0.0
  %2158 = vmatmul.mubr.f32.gmra.mrb[0].mxu0 %v2020
  %v2159 = vpop.f32.mrb[0].mxu0
  %v2160 = vadd.f32 0.0, %v2159
  %v2161 = vpop.f32.mrb[0].mxu0
  %2162 = vmatprep.mubr.f32.mxu0 0.0
  %2163 = vmatmul.mubr.f32.gmra.mrb[0].mxu0 %v2023
  %v2164 = vpop.f32.mrb[0].mxu0
  %v2165 = vadd.f32 0.0, %v2164
  %v2166 = vpop.f32.mrb[0].mxu0
  %2167 = vmatprep.mubr.f32.mxu0 0.0
  %2168 = vmatmul.mubr.f32.gmra.mrb[0].mxu0 %v2026
  %v2169 = vpop.f32.mrb[0].mxu0
  %v2170 = vadd.f32 0.0, %v2169
  %v2171 = vpop.f32.mrb[0].mxu0
  %2172 = vdwg.mxu0
  %v2173 = vadd.f32 %v1948, %v2095
  %v2174 = vadd.f32 %v1949, %v2100
  %v2175 = vadd.f32 %v1950, %v2105
  %v2176 = vadd.f32 %v1951, %v2110
  %v2177 = vadd.f32 %v1952, %v2115
  %v2178 = vadd.f32 %v1953, %v2120
  %v2179 = vadd.f32 %v1954, %v2125
  %v2180 = vadd.f32 %v1955, %v2130
  %v2181 = vadd.f32 %v1956, %v2135
  %v2182 = vadd.f32 %v1957, %v2140
  %v2183 = vadd.f32 %v1958, %v2145
  %v2184 = vadd.f32 %v1959, %v2150
  %v2185 = vadd.f32 %v1960, %v2155
  %v2186 = vadd.f32 %v1961, %v2160
  %v2187 = vadd.f32 %v1962, %v2165
  %v2188 = vadd.f32 %v1963, %v2170
  %v2189 = vld [vmem:[%s2] sm:$0x1]
  %v2191 = vlaneseq
  %v2192 = vshrl.u32 %v2191, 7
  %v2193 = vsub.s32 0, %v2192
  %v2194 = vrot.slane %v2189, %v2193
  %v2196 = vadd.f32 %v2173, %v2194
  %v2197 = vadd.f32 %v2174, %v2194
  %v2198 = vadd.f32 %v2175, %v2194
  %v2199 = vadd.f32 %v2176, %v2194
  %v2200 = vadd.f32 %v2177, %v2194
  %v2201 = vadd.f32 %v2178, %v2194
  %v2202 = vadd.f32 %v2179, %v2194
  %v2203 = vadd.f32 %v2180, %v2194
  %v2204 = vadd.f32 %v2181, %v2194
  %v2205 = vadd.f32 %v2182, %v2194
  %v2206 = vadd.f32 %v2183, %v2194
  %v2207 = vadd.f32 %v2184, %v2194
  %v2208 = vadd.f32 %v2185, %v2194
  %v2209 = vadd.f32 %v2186, %v2194
  %v2210 = vadd.f32 %v2187, %v2194
  %v2211 = vadd.f32 %v2188, %v2194
  %v2212 = vmul.f32 %v2196, 0.1
  %v2213 = vmul.f32 %v2197, 0.1
  %v2214 = vmul.f32 %v2198, 0.1
  %v2215 = vmul.f32 %v2199, 0.1
  %v2216 = vmul.f32 %v2200, 0.1
  %v2217 = vmul.f32 %v2201, 0.1
  %v2218 = vmul.f32 %v2202, 0.1
  %v2219 = vmul.f32 %v2203, 0.1
  %v2220 = vmul.f32 %v2204, 0.1
  %v2221 = vmul.f32 %v2205, 0.1
  %v2222 = vmul.f32 %v2206, 0.1
  %v2223 = vmul.f32 %v2207, 0.1
  %v2224 = vmul.f32 %v2208, 0.1
  %v2225 = vmul.f32 %v2209, 0.1
  %v2226 = vmul.f32 %v2210, 0.1
  %v2227 = vmul.f32 %v2211, 0.1
  %v2228 = vmax.f32 %v2196, %v2212
  %v2229 = vmax.f32 %v2197, %v2213
  %v2230 = vmax.f32 %v2198, %v2214
  %v2231 = vmax.f32 %v2199, %v2215
  %v2232 = vmax.f32 %v2200, %v2216
  %v2233 = vmax.f32 %v2201, %v2217
  %v2234 = vmax.f32 %v2202, %v2218
  %v2235 = vmax.f32 %v2203, %v2219
  %v2236 = vmax.f32 %v2204, %v2220
  %v2237 = vmax.f32 %v2205, %v2221
  %v2238 = vmax.f32 %v2206, %v2222
  %v2239 = vmax.f32 %v2207, %v2223
  %v2240 = vmax.f32 %v2208, %v2224
  %v2241 = vmax.f32 %v2209, %v2225
  %v2242 = vmax.f32 %v2210, %v2226
  %v2243 = vmax.f32 %v2211, %v2227
  %s2244 = scalar_lea.vmem [#allocation3], 16
  %2245 = vst.msk [vmem:[%s2244 + $0x1] sm:$0xff] %vm20, %v2228
  %2246 = vst.msk [vmem:[%s2244 + $0x11] sm:$0xff] %vm20, %v2229
  %2247 = vst.msk [vmem:[%s2244 + $0x21] sm:$0xff] %vm20, %v2230
  %2248 = vst.msk [vmem:[%s2244 + $0x31] sm:$0xff] %vm20, %v2231
  %2249 = vst.msk [vmem:[%s2244 + $0x41] sm:$0xff] %vm20, %v2232
  %2250 = vst.msk [vmem:[%s2244 + $0x51] sm:$0xff] %vm20, %v2233
  %2251 = vst.msk [vmem:[%s2244 + $0x61] sm:$0xff] %vm20, %v2234
  %2252 = vst.msk [vmem:[%s2244 + $0x71] sm:$0xff] %vm20, %v2235
  %2253 = vst.msk [vmem:[%s2244 + $0xa1] sm:$0xff] %vm20, %v2236
  %2254 = vst.msk [vmem:[%s2244 + $0xb1] sm:$0xff] %vm20, %v2237
  %2255 = vst.msk [vmem:[%s2244 + $0xc1] sm:$0xff] %vm20, %v2238
  %2256 = vst.msk [vmem:[%s2244 + $0xd1] sm:$0xff] %vm20, %v2239
  %2257 = vst.msk [vmem:[%s2244 + $0xe1] sm:$0xff] %vm20, %v2240
  %2258 = vst.msk [vmem:[%s2244 + $0xf1] sm:$0xff] %vm20, %v2241
  %2259 = vst.msk [vmem:[%s2244 + $0x101] sm:$0xff] %vm20, %v2242
  %2260 = vst.msk [vmem:[%s2244 + $0x111] sm:$0xff] %vm20, %v2243
  %v2261 = vld [vmem:[%s3] sm:$0xff]
  %v2262 = vld [vmem:[%s3 + $0x8] sm:$0xff]
  %v2263 = vld [vmem:[%s3 + $0x10] sm:$0xff]
  %v2264 = vld [vmem:[%s3 + $0x18] sm:$0xff]
  %v2265 = vld [vmem:[%s3 + $0x20] sm:$0xff]
  %v2266 = vld [vmem:[%s3 + $0x28] sm:$0xff]
  %v2267 = vld [vmem:[%s3 + $0x30] sm:$0xff]
  %v2268 = vld [vmem:[%s3 + $0x38] sm:$0xff]
  %v2269 = vld [vmem:[%s3 + $0x40] sm:$0xff]
  %v2270 = vld [vmem:[#allocation3] sm:$0xff]
  %v2271 = vld [vmem:[#allocation3 + $0x10] sm:$0xff]
  %v2272 = vld [vmem:[#allocation3 + $0x20] sm:$0xff]
  %v2273 = vld [vmem:[#allocation3 + $0x30] sm:$0xff]
  %v2274 = vld [vmem:[#allocation3 + $0x40] sm:$0xff]
  %v2275 = vld [vmem:[#allocation3 + $0x50] sm:$0xff]
  %v2276 = vld [vmem:[#allocation3 + $0x60] sm:$0xff]
  %v2277 = vld [vmem:[#allocation3 + $0x70] sm:$0xff]
  %v2278 = vld [vmem:[#allocation3 + $0xa0] sm:$0xff]
  %v2279 = vld [vmem:[#allocation3 + $0xb0] sm:$0xff]
  %v2280 = vld [vmem:[#allocation3 + $0xc0] sm:$0xff]
  %v2281 = vld [vmem:[#allocation3 + $0xd0] sm:$0xff]
  %v2282 = vld [vmem:[#allocation3 + $0xe0] sm:$0xff]
  %v2283 = vld [vmem:[#allocation3 + $0xf0] sm:$0xff]
  %v2284 = vld [vmem:[#allocation3 + $0x100] sm:$0xff]
  %v2285 = vld [vmem:[#allocation3 + $0x110] sm:$0xff]
  %v2286 = vld [vmem:[#allocation3 + $0x1] sm:$0xff]
  %v2287 = vld [vmem:[#allocation3 + $0x11] sm:$0xff]
  %v2288 = vld [vmem:[#allocation3 + $0x21] sm:$0xff]
  %v2289 = vld [vmem:[#allocation3 + $0x31] sm:$0xff]
  %v2290 = vld [vmem:[#allocation3 + $0x41] sm:$0xff]
  %v2291 = vld [vmem:[#allocation3 + $0x51] sm:$0xff]
  %v2292 = vld [vmem:[#allocation3 + $0x61] sm:$0xff]
  %v2293 = vld [vmem:[#allocation3 + $0x71] sm:$0xff]
  %v2294 = vld [vmem:[#allocation3 + $0xa1] sm:$0xff]
  %v2295 = vld [vmem:[#allocation3 + $0xb1] sm:$0xff]
  %v2296 = vld [vmem:[#allocation3 + $0xc1] sm:$0xff]
  %v2297 = vld [vmem:[#allocation3 + $0xd1] sm:$0xff]
  %v2298 = vld [vmem:[#allocation3 + $0xe1] sm:$0xff]
  %v2299 = vld [vmem:[#allocation3 + $0xf1] sm:$0xff]
  %v2300 = vld [vmem:[#allocation3 + $0x101] sm:$0xff]
  %v2301 = vld [vmem:[#allocation3 + $0x111] sm:$0xff]
  %v2303 = vsel %vm20, %v2286, 0
  %v2306 = vsel %vm20, %v2287, 0
  %v2309 = vsel %vm20, %v2288, 0
  %v2312 = vsel %vm20, %v2289, 0
  %v2315 = vsel %vm20, %v2290, 0
  %v2318 = vsel %vm20, %v2291, 0
  %v2321 = vsel %vm20, %v2292, 0
  %v2324 = vsel %vm20, %v2293, 0
  %v2327 = vsel %vm20, %v2294, 0
  %v2330 = vsel %vm20, %v2295, 0
  %v2333 = vsel %vm20, %v2296, 0
  %v2336 = vsel %vm20, %v2297, 0
  %v2339 = vsel %vm20, %v2298, 0
  %v2342 = vsel %vm20, %v2299, 0
  %v2345 = vsel %vm20, %v2300, 0
  %v2348 = vsel %vm20, %v2301, 0
  %2350 = vmatprep.subr.mxu0 0.0
  %2351 = vmatpush1.msra.mxu0 %v2262
  %2352 = vmatprep.subr.mxu0 0.0
  %2353 = vmatpush1.msra.mxu0 0.0
  %2354 = vmatprep.subr.mxu0 0.0
  %2355 = vmatpush1.msra.mxu0 0.0
  %2356 = vmatprep.subr.mxu0 0.0
  %2357 = vmatpush1.msra.mxu0 0.0
  %2358 = vmatprep.subr.mxu0 0.0
  %2359 = vmatpush1.msra.mxu0 0.0
  %2360 = vmatprep.subr.mxu0 0.0
  %2361 = vmatpush1.msra.mxu0 0.0
  %2362 = vmatprep.subr.mxu0 0.0
  %2363 = vmatpush1.msra.mxu0 0.0
  %2364 = vmatprep.subr.mxu0 0.0
  %2365 = vmatpush1.msra.mxu0 0.0
  %2366 = vmatprep.subr.mxu0 0.0
  %2367 = vmatpush1.msra.mxu0 0.0
  %2368 = vmatprep.subr.mxu0 0.0
  %2369 = vmatpush1.msra.mxu0 0.0
  %2370 = vmatprep.subr.mxu0 0.0
  %2371 = vmatpush1.msra.mxu0 0.0
  %2372 = vmatprep.subr.mxu0 0.0
  %2373 = vmatpush1.msra.mxu0 0.0
  %2374 = vmatprep.subr.mxu0 0.0
  %2375 = vmatpush1.msra.mxu0 0.0
  %2376 = vmatprep.subr.mxu0 0.0
  %2377 = vmatpush1.msra.mxu0 0.0
  %2378 = vmatprep.subr.mxu0 0.0
  %2379 = vmatpush1.msra.mxu0 0.0
  %2380 = vmatprep.subr.mxu0 0.0
  %2381 = vmatpush1.msra.mxu0 0.0
  %2382 = vmatprep.subr.mxu0 0.0
  %2383 = vmatpush1.msra.mxu0 0.0
  %2384 = vmatprep.subr.mxu0 0.0
  %2385 = vmatpush1.msra.mxu0 0.0
  %2386 = vmatprep.subr.mxu0 0.0
  %2387 = vmatpush1.msra.mxu0 0.0
  %2388 = vmatprep.subr.mxu0 0.0
  %2389 = vmatpush1.msra.mxu0 0.0
  %2390 = vmatprep.subr.mxu0 0.0
  %2391 = vmatpush1.msra.mxu0 0.0
  %2392 = vmatprep.subr.mxu0 0.0
  %2393 = vmatpush1.msra.mxu0 0.0
  %2394 = vmatprep.subr.mxu0 0.0
  %2395 = vmatpush1.msra.mxu0 0.0
  %2396 = vmatprep.subr.mxu0 0.0
  %2397 = vmatpush1.msra.mxu0 0.0
  %2398 = vmatprep.subr.mxu0 0.0
  %2399 = vmatpush1.msra.mxu0 0.0
  %2400 = vmatprep.subr.mxu0 0.0
  %2401 = vmatpush1.msra.mxu0 0.0
  %2402 = vmatprep.subr.mxu0 0.0
  %2403 = vmatpush1.msra.mxu0 0.0
  %2404 = vmatprep.subr.mxu0 0.0
  %2405 = vmatpush1.msra.mxu0 0.0
  %2406 = vmatprep.subr.mxu0 0.0
  %2407 = vmatpush1.msra.mxu0 0.0
  %2408 = vmatprep.subr.mxu0 0.0
  %2409 = vmatpush1.msra.mxu0 0.0
  %2410 = vmatprep.subr.mxu0 0.0
  %2411 = vmatpush1.msra.mxu0 0.0
  %2412 = vmatprep.subr.mxu0 0.0
  %2413 = vmatpush1.msra.mxu0 0.0
  %2414 = vmatprep.mubr.f32.mxu0 0.0
  %2415 = vmatmul.mubr.f32.gmra.mrb[0].mxu0 %v2303
  %v2416 = vpop.f32.mrb[0].mxu0
  %v2417 = vadd.f32 0.0, %v2416
  %v2418 = vpop.f32.mrb[0].mxu0
  %2419 = vmatprep.mubr.f32.mxu0 0.0
  %2420 = vmatmul.mubr.f32.gmra.mrb[0].mxu0 %v2306
  %v2421 = vpop.f32.mrb[0].mxu0
  %v2422 = vadd.f32 0.0, %v2421
  %v2423 = vpop.f32.mrb[0].mxu0
  %2424 = vmatprep.mubr.f32.mxu0 0.0
  %2425 = vmatmul.mubr.f32.gmra.mrb[0].mxu0 %v2309
  %v2426 = vpop.f32.mrb[0].mxu0
  %v2427 = vadd.f32 0.0, %v2426
  %v2428 = vpop.f32.mrb[0].mxu0
  %2429 = vmatprep.mubr.f32.mxu0 0.0
  %2430 = vmatmul.mubr.f32.gmra.mrb[0].mxu0 %v2312
  %v2431 = vpop.f32.mrb[0].mxu0
  %v2432 = vadd.f32 0.0, %v2431
  %v2433 = vpop.f32.mrb[0].mxu0
  %2434 = vmatprep.mubr.f32.mxu0 0.0
  %2435 = vmatmul.mubr.f32.gmra.mrb[0].mxu0 %v2315
  %v2436 = vpop.f32.mrb[0].mxu0
  %v2437 = vadd.f32 0.0, %v2436
  %v2438 = vpop.f32.mrb[0].mxu0
  %2439 = vmatprep.mubr.f32.mxu0 0.0
  %2440 = vmatmul.mubr.f32.gmra.mrb[0].mxu0 %v2318
  %v2441 = vpop.f32.mrb[0].mxu0
  %v2442 = vadd.f32 0.0, %v2441
  %v2443 = vpop.f32.mrb[0].mxu0
  %2444 = vmatprep.mubr.f32.mxu0 0.0
  %2445 = vmatmul.mubr.f32.gmra.mrb[0].mxu0 %v2321
  %v2446 = vpop.f32.mrb[0].mxu0
  %v2447 = vadd.f32 0.0, %v2446
  %v2448 = vpop.f32.mrb[0].mxu0
  %2449 = vmatprep.mubr.f32.mxu0 0.0
  %2450 = vmatmul.mubr.f32.gmra.mrb[0].mxu0 %v2324
  %v2451 = vpop.f32.mrb[0].mxu0
  %v2452 = vadd.f32 0.0, %v2451
  %v2453 = vpop.f32.mrb[0].mxu0
  %2454 = vmatprep.mubr.f32.mxu0 0.0
  %2455 = vmatmul.mubr.f32.gmra.mrb[0].mxu0 %v2327
  %v2456 = vpop.f32.mrb[0].mxu0
  %v2457 = vadd.f32 0.0, %v2456
  %v2458 = vpop.f32.mrb[0].mxu0
  %2459 = vmatprep.mubr.f32.mxu0 0.0
  %2460 = vmatmul.mubr.f32.gmra.mrb[0].mxu0 %v2330
  %v2461 = vpop.f32.mrb[0].mxu0
  %v2462 = vadd.f32 0.0, %v2461
  %v2463 = vpop.f32.mrb[0].mxu0
  %2464 = vmatprep.mubr.f32.mxu0 0.0
  %2465 = vmatmul.mubr.f32.gmra.mrb[0].mxu0 %v2333
  %v2466 = vpop.f32.mrb[0].mxu0
  %v2467 = vadd.f32 0.0, %v2466
  %v2468 = vpop.f32.mrb[0].mxu0
  %2469 = vmatprep.mubr.f32.mxu0 0.0
  %2470 = vmatmul.mubr.f32.gmra.mrb[0].mxu0 %v2336
  %v2471 = vpop.f32.mrb[0].mxu0
  %v2472 = vadd.f32 0.0, %v2471
  %v2473 = vpop.f32.mrb[0].mxu0
  %2474 = vmatprep.mubr.f32.mxu0 0.0
  %2475 = vmatmul.mubr.f32.gmra.mrb[0].mxu0 %v2339
  %v2476 = vpop.f32.mrb[0].mxu0
  %v2477 = vadd.f32 0.0, %v2476
  %v2478 = vpop.f32.mrb[0].mxu0
  %2479 = vmatprep.mubr.f32.mxu0 0.0
  %2480 = vmatmul.mubr.f32.gmra.mrb[0].mxu0 %v2342
  %v2481 = vpop.f32.mrb[0].mxu0
  %v2482 = vadd.f32 0.0, %v2481
  %v2483 = vpop.f32.mrb[0].mxu0
  %2484 = vmatprep.mubr.f32.mxu0 0.0
  %2485 = vmatmul.mubr.f32.gmra.mrb[0].mxu0 %v2345
  %v2486 = vpop.f32.mrb[0].mxu0
  %v2487 = vadd.f32 0.0, %v2486
  %v2488 = vpop.f32.mrb[0].mxu0
  %2489 = vmatprep.mubr.f32.mxu0 0.0
  %2490 = vmatmul.mubr.f32.gmra.mrb[0].mxu0 %v2348
  %v2491 = vpop.f32.mrb[0].mxu0
  %v2492 = vadd.f32 0.0, %v2491
  %v2493 = vpop.f32.mrb[0].mxu0
  %2494 = vdwg.mxu0
  %v2496 = vsel %vm20, %v2270, 0
  %v2499 = vsel %vm20, %v2271, 0
  %v2502 = vsel %vm20, %v2272, 0
  %v2505 = vsel %vm20, %v2273, 0
  %v2508 = vsel %vm20, %v2274, 0
  %v2511 = vsel %vm20, %v2275, 0
  %v2514 = vsel %vm20, %v2276, 0
  %v2517 = vsel %vm20, %v2277, 0
  %v2520 = vsel %vm20, %v2278, 0
  %v2523 = vsel %vm20, %v2279, 0
  %v2526 = vsel %vm20, %v2280, 0
  %v2529 = vsel %vm20, %v2281, 0
  %v2532 = vsel %vm20, %v2282, 0
  %v2535 = vsel %vm20, %v2283, 0
  %v2538 = vsel %vm20, %v2284, 0
  %v2541 = vsel %vm20, %v2285, 0
  %2543 = vmatprep.subr.mxu0 0.0
  %2544 = vmatpush1.msra.mxu0 %v2261
  %2545 = vmatprep.subr.mxu0 0.0
  %2546 = vmatpush1.msra.mxu0 0.0
  %2547 = vmatprep.subr.mxu0 0.0
  %2548 = vmatpush1.msra.mxu0 0.0
  %2549 = vmatprep.subr.mxu0 0.0
  %2550 = vmatpush1.msra.mxu0 0.0
  %2551 = vmatprep.subr.mxu0 0.0
  %2552 = vmatpush1.msra.mxu0 0.0
  %2553 = vmatprep.subr.mxu0 0.0
  %2554 = vmatpush1.msra.mxu0 0.0
  %2555 = vmatprep.subr.mxu0 0.0
  %2556 = vmatpush1.msra.mxu0 0.0
  %2557 = vmatprep.subr.mxu0 0.0
  %2558 = vmatpush1.msra.mxu0 0.0
  %2559 = vmatprep.subr.mxu0 0.0
  %2560 = vmatpush1.msra.mxu0 0.0
  %2561 = vmatprep.subr.mxu0 0.0
  %2562 = vmatpush1.msra.mxu0 0.0
  %2563 = vmatprep.subr.mxu0 0.0
  %2564 = vmatpush1.msra.mxu0 0.0
  %2565 = vmatprep.subr.mxu0 0.0
  %2566 = vmatpush1.msra.mxu0 0.0
  %2567 = vmatprep.subr.mxu0 0.0
  %2568 = vmatpush1.msra.mxu0 0.0
  %2569 = vmatprep.subr.mxu0 0.0
  %2570 = vmatpush1.msra.mxu0 0.0
  %2571 = vmatprep.subr.mxu0 0.0
  %2572 = vmatpush1.msra.mxu0 0.0
  %2573 = vmatprep.subr.mxu0 0.0
  %2574 = vmatpush1.msra.mxu0 0.0
  %2575 = vmatprep.subr.mxu0 0.0
  %2576 = vmatpush1.msra.mxu0 0.0
  %2577 = vmatprep.subr.mxu0 0.0
  %2578 = vmatpush1.msra.mxu0 0.0
  %2579 = vmatprep.subr.mxu0 0.0
  %2580 = vmatpush1.msra.mxu0 0.0
  %2581 = vmatprep.subr.mxu0 0.0
  %2582 = vmatpush1.msra.mxu0 0.0
  %2583 = vmatprep.subr.mxu0 0.0
  %2584 = vmatpush1.msra.mxu0 0.0
  %2585 = vmatprep.subr.mxu0 0.0
  %2586 = vmatpush1.msra.mxu0 0.0
  %2587 = vmatprep.subr.mxu0 0.0
  %2588 = vmatpush1.msra.mxu0 0.0
  %2589 = vmatprep.subr.mxu0 0.0
  %2590 = vmatpush1.msra.mxu0 0.0
  %2591 = vmatprep.subr.mxu0 0.0
  %2592 = vmatpush1.msra.mxu0 0.0
  %2593 = vmatprep.subr.mxu0 0.0
  %2594 = vmatpush1.msra.mxu0 0.0
  %2595 = vmatprep.subr.mxu0 0.0
  %2596 = vmatpush1.msra.mxu0 0.0
  %2597 = vmatprep.subr.mxu0 0.0
  %2598 = vmatpush1.msra.mxu0 0.0
  %2599 = vmatprep.subr.mxu0 0.0
  %2600 = vmatpush1.msra.mxu0 0.0
  %2601 = vmatprep.subr.mxu0 0.0
  %2602 = vmatpush1.msra.mxu0 0.0
  %2603 = vmatprep.subr.mxu0 0.0
  %2604 = vmatpush1.msra.mxu0 0.0
  %2605 = vmatprep.subr.mxu0 0.0
  %2606 = vmatpush1.msra.mxu0 0.0
  %2607 = vmatprep.mubr.f32.mxu0 0.0
  %2608 = vmatmul.mubr.f32.gmra.mrb[0].mxu0 %v2496
  %v2609 = vpop.f32.mrb[0].mxu0
  %v2610 = vadd.f32 %v2417, %v2609
  %v2611 = vpop.f32.mrb[0].mxu0
  %2612 = vmatprep.mubr.f32.mxu0 0.0
  %2613 = vmatmul.mubr.f32.gmra.mrb[0].mxu0 %v2499
  %v2614 = vpop.f32.mrb[0].mxu0
  %v2615 = vadd.f32 %v2422, %v2614
  %v2616 = vpop.f32.mrb[0].mxu0
  %2617 = vmatprep.mubr.f32.mxu0 0.0
  %2618 = vmatmul.mubr.f32.gmra.mrb[0].mxu0 %v2502
  %v2619 = vpop.f32.mrb[0].mxu0
  %v2620 = vadd.f32 %v2427, %v2619
  %v2621 = vpop.f32.mrb[0].mxu0
  %2622 = vmatprep.mubr.f32.mxu0 0.0
  %2623 = vmatmul.mubr.f32.gmra.mrb[0].mxu0 %v2505
  %v2624 = vpop.f32.mrb[0].mxu0
  %v2625 = vadd.f32 %v2432, %v2624
  %v2626 = vpop.f32.mrb[0].mxu0
  %2627 = vmatprep.mubr.f32.mxu0 0.0
  %2628 = vmatmul.mubr.f32.gmra.mrb[0].mxu0 %v2508
  %v2629 = vpop.f32.mrb[0].mxu0
  %v2630 = vadd.f32 %v2437, %v2629
  %v2631 = vpop.f32.mrb[0].mxu0
  %2632 = vmatprep.mubr.f32.mxu0 0.0
  %2633 = vmatmul.mubr.f32.gmra.mrb[0].mxu0 %v2511
  %v2634 = vpop.f32.mrb[0].mxu0
  %v2635 = vadd.f32 %v2442, %v2634
  %v2636 = vpop.f32.mrb[0].mxu0
  %2637 = vmatprep.mubr.f32.mxu0 0.0
  %2638 = vmatmul.mubr.f32.gmra.mrb[0].mxu0 %v2514
  %v2639 = vpop.f32.mrb[0].mxu0
  %v2640 = vadd.f32 %v2447, %v2639
  %v2641 = vpop.f32.mrb[0].mxu0
  %2642 = vmatprep.mubr.f32.mxu0 0.0
  %2643 = vmatmul.mubr.f32.gmra.mrb[0].mxu0 %v2517
  %v2644 = vpop.f32.mrb[0].mxu0
  %v2645 = vadd.f32 %v2452, %v2644
  %v2646 = vpop.f32.mrb[0].mxu0
  %2647 = vmatprep.mubr.f32.mxu0 0.0
  %2648 = vmatmul.mubr.f32.gmra.mrb[0].mxu0 %v2520
  %v2649 = vpop.f32.mrb[0].mxu0
  %v2650 = vadd.f32 %v2457, %v2649
  %v2651 = vpop.f32.mrb[0].mxu0
  %2652 = vmatprep.mubr.f32.mxu0 0.0
  %2653 = vmatmul.mubr.f32.gmra.mrb[0].mxu0 %v2523
  %v2654 = vpop.f32.mrb[0].mxu0
  %v2655 = vadd.f32 %v2462, %v2654
  %v2656 = vpop.f32.mrb[0].mxu0
  %2657 = vmatprep.mubr.f32.mxu0 0.0
  %2658 = vmatmul.mubr.f32.gmra.mrb[0].mxu0 %v2526
  %v2659 = vpop.f32.mrb[0].mxu0
  %v2660 = vadd.f32 %v2467, %v2659
  %v2661 = vpop.f32.mrb[0].mxu0
  %2662 = vmatprep.mubr.f32.mxu0 0.0
  %2663 = vmatmul.mubr.f32.gmra.mrb[0].mxu0 %v2529
  %v2664 = vpop.f32.mrb[0].mxu0
  %v2665 = vadd.f32 %v2472, %v2664
  %v2666 = vpop.f32.mrb[0].mxu0
  %2667 = vmatprep.mubr.f32.mxu0 0.0
  %2668 = vmatmul.mubr.f32.gmra.mrb[0].mxu0 %v2532
  %v2669 = vpop.f32.mrb[0].mxu0
  %v2670 = vadd.f32 %v2477, %v2669
  %v2671 = vpop.f32.mrb[0].mxu0
  %2672 = vmatprep.mubr.f32.mxu0 0.0
  %2673 = vmatmul.mubr.f32.gmra.mrb[0].mxu0 %v2535
  %v2674 = vpop.f32.mrb[0].mxu0
  %v2675 = vadd.f32 %v2482, %v2674
  %v2676 = vpop.f32.mrb[0].mxu0
  %2677 = vmatprep.mubr.f32.mxu0 0.0
  %2678 = vmatmul.mubr.f32.gmra.mrb[0].mxu0 %v2538
  %v2679 = vpop.f32.mrb[0].mxu0
  %v2680 = vadd.f32 %v2487, %v2679
  %v2681 = vpop.f32.mrb[0].mxu0
  %2682 = vmatprep.mubr.f32.mxu0 0.0
  %2683 = vmatmul.mubr.f32.gmra.mrb[0].mxu0 %v2541
  %v2684 = vpop.f32.mrb[0].mxu0
  %v2685 = vadd.f32 %v2492, %v2684
  %v2686 = vpop.f32.mrb[0].mxu0
  %2687 = vdwg.mxu0
  %v2688 = vld [vmem:[#allocation3 + $0x2] sm:$0xff]
  %v2689 = vld [vmem:[#allocation3 + $0x12] sm:$0xff]
  %v2690 = vld [vmem:[#allocation3 + $0x22] sm:$0xff]
  %v2691 = vld [vmem:[#allocation3 + $0x32] sm:$0xff]
  %v2692 = vld [vmem:[#allocation3 + $0x42] sm:$0xff]
  %v2693 = vld [vmem:[#allocation3 + $0x52] sm:$0xff]
  %v2694 = vld [vmem:[#allocation3 + $0x62] sm:$0xff]
  %v2695 = vld [vmem:[#allocation3 + $0x72] sm:$0xff]
  %v2696 = vld [vmem:[#allocation3 + $0xa2] sm:$0xff]
  %v2697 = vld [vmem:[#allocation3 + $0xb2] sm:$0xff]
  %v2698 = vld [vmem:[#allocation3 + $0xc2] sm:$0xff]
  %v2699 = vld [vmem:[#allocation3 + $0xd2] sm:$0xff]
  %v2700 = vld [vmem:[#allocation3 + $0xe2] sm:$0xff]
  %v2701 = vld [vmem:[#allocation3 + $0xf2] sm:$0xff]
  %v2702 = vld [vmem:[#allocation3 + $0x102] sm:$0xff]
  %v2703 = vld [vmem:[#allocation3 + $0x112] sm:$0xff]
  %v2705 = vsel %vm20, %v2688, 0
  %v2708 = vsel %vm20, %v2689, 0
  %v2711 = vsel %vm20, %v2690, 0
  %v2714 = vsel %vm20, %v2691, 0
  %v2717 = vsel %vm20, %v2692, 0
  %v2720 = vsel %vm20, %v2693, 0
  %v2723 = vsel %vm20, %v2694, 0
  %v2726 = vsel %vm20, %v2695, 0
  %v2729 = vsel %vm20, %v2696, 0
  %v2732 = vsel %vm20, %v2697, 0
  %v2735 = vsel %vm20, %v2698, 0
  %v2738 = vsel %vm20, %v2699, 0
  %v2741 = vsel %vm20, %v2700, 0
  %v2744 = vsel %vm20, %v2701, 0
  %v2747 = vsel %vm20, %v2702, 0
  %v2750 = vsel %vm20, %v2703, 0
  %2752 = vmatprep.subr.mxu0 0.0
  %2753 = vmatpush1.msra.mxu0 %v2263
  %2754 = vmatprep.subr.mxu0 0.0
  %2755 = vmatpush1.msra.mxu0 0.0
  %2756 = vmatprep.subr.mxu0 0.0
  %2757 = vmatpush1.msra.mxu0 0.0
  %2758 = vmatprep.subr.mxu0 0.0
  %2759 = vmatpush1.msra.mxu0 0.0
  %2760 = vmatprep.subr.mxu0 0.0
  %2761 = vmatpush1.msra.mxu0 0.0
  %2762 = vmatprep.subr.mxu0 0.0
  %2763 = vmatpush1.msra.mxu0 0.0
  %2764 = vmatprep.subr.mxu0 0.0
  %2765 = vmatpush1.msra.mxu0 0.0
  %2766 = vmatprep.subr.mxu0 0.0
  %2767 = vmatpush1.msra.mxu0 0.0
  %2768 = vmatprep.subr.mxu0 0.0
  %2769 = vmatpush1.msra.mxu0 0.0
  %2770 = vmatprep.subr.mxu0 0.0
  %2771 = vmatpush1.msra.mxu0 0.0
  %2772 = vmatprep.subr.mxu0 0.0
  %2773 = vmatpush1.msra.mxu0 0.0
  %2774 = vmatprep.subr.mxu0 0.0
  %2775 = vmatpush1.msra.mxu0 0.0
  %2776 = vmatprep.subr.mxu0 0.0
  %2777 = vmatpush1.msra.mxu0 0.0
  %2778 = vmatprep.subr.mxu0 0.0
  %2779 = vmatpush1.msra.mxu0 0.0
  %2780 = vmatprep.subr.mxu0 0.0
  %2781 = vmatpush1.msra.mxu0 0.0
  %2782 = vmatprep.subr.mxu0 0.0
  %2783 = vmatpush1.msra.mxu0 0.0
  %2784 = vmatprep.subr.mxu0 0.0
  %2785 = vmatpush1.msra.mxu0 0.0
  %2786 = vmatprep.subr.mxu0 0.0
  %2787 = vmatpush1.msra.mxu0 0.0
  %2788 = vmatprep.subr.mxu0 0.0
  %2789 = vmatpush1.msra.mxu0 0.0
  %2790 = vmatprep.subr.mxu0 0.0
  %2791 = vmatpush1.msra.mxu0 0.0
  %2792 = vmatprep.subr.mxu0 0.0
  %2793 = vmatpush1.msra.mxu0 0.0
  %2794 = vmatprep.subr.mxu0 0.0
  %2795 = vmatpush1.msra.mxu0 0.0
  %2796 = vmatprep.subr.mxu0 0.0
  %2797 = vmatpush1.msra.mxu0 0.0
  %2798 = vmatprep.subr.mxu0 0.0
  %2799 = vmatpush1.msra.mxu0 0.0
  %2800 = vmatprep.subr.mxu0 0.0
  %2801 = vmatpush1.msra.mxu0 0.0
  %2802 = vmatprep.subr.mxu0 0.0
  %2803 = vmatpush1.msra.mxu0 0.0
  %2804 = vmatprep.subr.mxu0 0.0
  %2805 = vmatpush1.msra.mxu0 0.0
  %2806 = vmatprep.subr.mxu0 0.0
  %2807 = vmatpush1.msra.mxu0 0.0
  %2808 = vmatprep.subr.mxu0 0.0
  %2809 = vmatpush1.msra.mxu0 0.0
  %2810 = vmatprep.subr.mxu0 0.0
  %2811 = vmatpush1.msra.mxu0 0.0
  %2812 = vmatprep.subr.mxu0 0.0
  %2813 = vmatpush1.msra.mxu0 0.0
  %2814 = vmatprep.subr.mxu0 0.0
  %2815 = vmatpush1.msra.mxu0 0.0
  %2816 = vmatprep.mubr.f32.mxu0 0.0
  %2817 = vmatmul.mubr.f32.gmra.mrb[0].mxu0 %v2705
  %v2818 = vpop.f32.mrb[0].mxu0
  %v2819 = vadd.f32 0.0, %v2818
  %v2820 = vpop.f32.mrb[0].mxu0
  %2821 = vmatprep.mubr.f32.mxu0 0.0
  %2822 = vmatmul.mubr.f32.gmra.mrb[0].mxu0 %v2708
  %v2823 = vpop.f32.mrb[0].mxu0
  %v2824 = vadd.f32 0.0, %v2823
  %v2825 = vpop.f32.mrb[0].mxu0
  %2826 = vmatprep.mubr.f32.mxu0 0.0
  %2827 = vmatmul.mubr.f32.gmra.mrb[0].mxu0 %v2711
  %v2828 = vpop.f32.mrb[0].mxu0
  %v2829 = vadd.f32 0.0, %v2828
  %v2830 = vpop.f32.mrb[0].mxu0
  %2831 = vmatprep.mubr.f32.mxu0 0.0
  %2832 = vmatmul.mubr.f32.gmra.mrb[0].mxu0 %v2714
  %v2833 = vpop.f32.mrb[0].mxu0
  %v2834 = vadd.f32 0.0, %v2833
  %v2835 = vpop.f32.mrb[0].mxu0
  %2836 = vmatprep.mubr.f32.mxu0 0.0
  %2837 = vmatmul.mubr.f32.gmra.mrb[0].mxu0 %v2717
  %v2838 = vpop.f32.mrb[0].mxu0
  %v2839 = vadd.f32 0.0, %v2838
  %v2840 = vpop.f32.mrb[0].mxu0
  %2841 = vmatprep.mubr.f32.mxu0 0.0
  %2842 = vmatmul.mubr.f32.gmra.mrb[0].mxu0 %v2720
  %v2843 = vpop.f32.mrb[0].mxu0
  %v2844 = vadd.f32 0.0, %v2843
  %v2845 = vpop.f32.mrb[0].mxu0
  %2846 = vmatprep.mubr.f32.mxu0 0.0
  %2847 = vmatmul.mubr.f32.gmra.mrb[0].mxu0 %v2723
  %v2848 = vpop.f32.mrb[0].mxu0
  %v2849 = vadd.f32 0.0, %v2848
  %v2850 = vpop.f32.mrb[0].mxu0
  %2851 = vmatprep.mubr.f32.mxu0 0.0
  %2852 = vmatmul.mubr.f32.gmra.mrb[0].mxu0 %v2726
  %v2853 = vpop.f32.mrb[0].mxu0
  %v2854 = vadd.f32 0.0, %v2853
  %v2855 = vpop.f32.mrb[0].mxu0
  %2856 = vmatprep.mubr.f32.mxu0 0.0
  %2857 = vmatmul.mubr.f32.gmra.mrb[0].mxu0 %v2729
  %v2858 = vpop.f32.mrb[0].mxu0
  %v2859 = vadd.f32 0.0, %v2858
  %v2860 = vpop.f32.mrb[0].mxu0
  %2861 = vmatprep.mubr.f32.mxu0 0.0
  %2862 = vmatmul.mubr.f32.gmra.mrb[0].mxu0 %v2732
  %v2863 = vpop.f32.mrb[0].mxu0
  %v2864 = vadd.f32 0.0, %v2863
  %v2865 = vpop.f32.mrb[0].mxu0
  %2866 = vmatprep.mubr.f32.mxu0 0.0
  %2867 = vmatmul.mubr.f32.gmra.mrb[0].mxu0 %v2735
  %v2868 = vpop.f32.mrb[0].mxu0
  %v2869 = vadd.f32 0.0, %v2868
  %v2870 = vpop.f32.mrb[0].mxu0
  %2871 = vmatprep.mubr.f32.mxu0 0.0
  %2872 = vmatmul.mubr.f32.gmra.mrb[0].mxu0 %v2738
  %v2873 = vpop.f32.mrb[0].mxu0
  %v2874 = vadd.f32 0.0, %v2873
  %v2875 = vpop.f32.mrb[0].mxu0
  %2876 = vmatprep.mubr.f32.mxu0 0.0
  %2877 = vmatmul.mubr.f32.gmra.mrb[0].mxu0 %v2741
  %v2878 = vpop.f32.mrb[0].mxu0
  %v2879 = vadd.f32 0.0, %v2878
  %v2880 = vpop.f32.mrb[0].mxu0
  %2881 = vmatprep.mubr.f32.mxu0 0.0
  %2882 = vmatmul.mubr.f32.gmra.mrb[0].mxu0 %v2744
  %v2883 = vpop.f32.mrb[0].mxu0
  %v2884 = vadd.f32 0.0, %v2883
  %v2885 = vpop.f32.mrb[0].mxu0
  %2886 = vmatprep.mubr.f32.mxu0 0.0
  %2887 = vmatmul.mubr.f32.gmra.mrb[0].mxu0 %v2747
  %v2888 = vpop.f32.mrb[0].mxu0
  %v2889 = vadd.f32 0.0, %v2888
  %v2890 = vpop.f32.mrb[0].mxu0
  %2891 = vmatprep.mubr.f32.mxu0 0.0
  %2892 = vmatmul.mubr.f32.gmra.mrb[0].mxu0 %v2750
  %v2893 = vpop.f32.mrb[0].mxu0
  %v2894 = vadd.f32 0.0, %v2893
  %v2895 = vpop.f32.mrb[0].mxu0
  %2896 = vdwg.mxu0
  %v2897 = vadd.f32 %v2610, %v2819
  %v2898 = vadd.f32 %v2615, %v2824
  %v2899 = vadd.f32 %v2620, %v2829
  %v2900 = vadd.f32 %v2625, %v2834
  %v2901 = vadd.f32 %v2630, %v2839
  %v2902 = vadd.f32 %v2635, %v2844
  %v2903 = vadd.f32 %v2640, %v2849
  %v2904 = vadd.f32 %v2645, %v2854
  %v2905 = vadd.f32 %v2650, %v2859
  %v2906 = vadd.f32 %v2655, %v2864
  %v2907 = vadd.f32 %v2660, %v2869
  %v2908 = vadd.f32 %v2665, %v2874
  %v2909 = vadd.f32 %v2670, %v2879
  %v2910 = vadd.f32 %v2675, %v2884
  %v2911 = vadd.f32 %v2680, %v2889
  %v2912 = vadd.f32 %v2685, %v2894
  %v2913 = vld [vmem:[%s2244] sm:$0xff]
  %v2914 = vld [vmem:[%s2244 + $0x10] sm:$0xff]
  %v2915 = vld [vmem:[%s2244 + $0x20] sm:$0xff]
  %v2916 = vld [vmem:[%s2244 + $0x30] sm:$0xff]
  %v2917 = vld [vmem:[%s2244 + $0x40] sm:$0xff]
  %v2918 = vld [vmem:[%s2244 + $0x50] sm:$0xff]
  %v2919 = vld [vmem:[%s2244 + $0x60] sm:$0xff]
  %v2920 = vld [vmem:[%s2244 + $0x70] sm:$0xff]
  %v2921 = vld [vmem:[%s2244 + $0xa0] sm:$0xff]
  %v2922 = vld [vmem:[%s2244 + $0xb0] sm:$0xff]
  %v2923 = vld [vmem:[%s2244 + $0xc0] sm:$0xff]
  %v2924 = vld [vmem:[%s2244 + $0xd0] sm:$0xff]
  %v2925 = vld [vmem:[%s2244 + $0xe0] sm:$0xff]
  %v2926 = vld [vmem:[%s2244 + $0xf0] sm:$0xff]
  %v2927 = vld [vmem:[%s2244 + $0x100] sm:$0xff]
  %v2928 = vld [vmem:[%s2244 + $0x110] sm:$0xff]
  %v2930 = vsel %vm20, %v2913, 0
  %v2933 = vsel %vm20, %v2914, 0
  %v2936 = vsel %vm20, %v2915, 0
  %v2939 = vsel %vm20, %v2916, 0
  %v2942 = vsel %vm20, %v2917, 0
  %v2945 = vsel %vm20, %v2918, 0
  %v2948 = vsel %vm20, %v2919, 0
  %v2951 = vsel %vm20, %v2920, 0
  %v2954 = vsel %vm20, %v2921, 0
  %v2957 = vsel %vm20, %v2922, 0
  %v2960 = vsel %vm20, %v2923, 0
  %v2963 = vsel %vm20, %v2924, 0
  %v2966 = vsel %vm20, %v2925, 0
  %v2969 = vsel %vm20, %v2926, 0
  %v2972 = vsel %vm20, %v2927, 0
  %v2975 = vsel %vm20, %v2928, 0
  %2977 = vmatprep.subr.mxu0 0.0
  %2978 = vmatpush1.msra.mxu0 %v2264
  %2979 = vmatprep.subr.mxu0 0.0
  %2980 = vmatpush1.msra.mxu0 0.0
  %2981 = vmatprep.subr.mxu0 0.0
  %2982 = vmatpush1.msra.mxu0 0.0
  %2983 = vmatprep.subr.mxu0 0.0
  %2984 = vmatpush1.msra.mxu0 0.0
  %2985 = vmatprep.subr.mxu0 0.0
  %2986 = vmatpush1.msra.mxu0 0.0
  %2987 = vmatprep.subr.mxu0 0.0
  %2988 = vmatpush1.msra.mxu0 0.0
  %2989 = vmatprep.subr.mxu0 0.0
  %2990 = vmatpush1.msra.mxu0 0.0
  %2991 = vmatprep.subr.mxu0 0.0
  %2992 = vmatpush1.msra.mxu0 0.0
  %2993 = vmatprep.subr.mxu0 0.0
  %2994 = vmatpush1.msra.mxu0 0.0
  %2995 = vmatprep.subr.mxu0 0.0
  %2996 = vmatpush1.msra.mxu0 0.0
  %2997 = vmatprep.subr.mxu0 0.0
  %2998 = vmatpush1.msra.mxu0 0.0
  %2999 = vmatprep.subr.mxu0 0.0
  %3000 = vmatpush1.msra.mxu0 0.0
  %3001 = vmatprep.subr.mxu0 0.0
  %3002 = vmatpush1.msra.mxu0 0.0
  %3003 = vmatprep.subr.mxu0 0.0
  %3004 = vmatpush1.msra.mxu0 0.0
  %3005 = vmatprep.subr.mxu0 0.0
  %3006 = vmatpush1.msra.mxu0 0.0
  %3007 = vmatprep.subr.mxu0 0.0
  %3008 = vmatpush1.msra.mxu0 0.0
  %3009 = vmatprep.subr.mxu0 0.0
  %3010 = vmatpush1.msra.mxu0 0.0
  %3011 = vmatprep.subr.mxu0 0.0
  %3012 = vmatpush1.msra.mxu0 0.0
  %3013 = vmatprep.subr.mxu0 0.0
  %3014 = vmatpush1.msra.mxu0 0.0
  %3015 = vmatprep.subr.mxu0 0.0
  %3016 = vmatpush1.msra.mxu0 0.0
  %3017 = vmatprep.subr.mxu0 0.0
  %3018 = vmatpush1.msra.mxu0 0.0
  %3019 = vmatprep.subr.mxu0 0.0
  %3020 = vmatpush1.msra.mxu0 0.0
  %3021 = vmatprep.subr.mxu0 0.0
  %3022 = vmatpush1.msra.mxu0 0.0
  %3023 = vmatprep.subr.mxu0 0.0
  %3024 = vmatpush1.msra.mxu0 0.0
  %3025 = vmatprep.subr.mxu0 0.0
  %3026 = vmatpush1.msra.mxu0 0.0
  %3027 = vmatprep.subr.mxu0 0.0
  %3028 = vmatpush1.msra.mxu0 0.0
  %3029 = vmatprep.subr.mxu0 0.0
  %3030 = vmatpush1.msra.mxu0 0.0
  %3031 = vmatprep.subr.mxu0 0.0
  %3032 = vmatpush1.msra.mxu0 0.0
  %3033 = vmatprep.subr.mxu0 0.0
  %3034 = vmatpush1.msra.mxu0 0.0
  %3035 = vmatprep.subr.mxu0 0.0
  %3036 = vmatpush1.msra.mxu0 0.0
  %3037 = vmatprep.subr.mxu0 0.0
  %3038 = vmatpush1.msra.mxu0 0.0
  %3039 = vmatprep.subr.mxu0 0.0
  %3040 = vmatpush1.msra.mxu0 0.0
  %3041 = vmatprep.mubr.f32.mxu0 0.0
  %3042 = vmatmul.mubr.f32.gmra.mrb[0].mxu0 %v2930
  %v3043 = vpop.f32.mrb[0].mxu0
  %v3044 = vadd.f32 0.0, %v3043
  %v3045 = vpop.f32.mrb[0].mxu0
  %3046 = vmatprep.mubr.f32.mxu0 0.0
  %3047 = vmatmul.mubr.f32.gmra.mrb[0].mxu0 %v2933
  %v3048 = vpop.f32.mrb[0].mxu0
  %v3049 = vadd.f32 0.0, %v3048
  %v3050 = vpop.f32.mrb[0].mxu0
  %3051 = vmatprep.mubr.f32.mxu0 0.0
  %3052 = vmatmul.mubr.f32.gmra.mrb[0].mxu0 %v2936
  %v3053 = vpop.f32.mrb[0].mxu0
  %v3054 = vadd.f32 0.0, %v3053
  %v3055 = vpop.f32.mrb[0].mxu0
  %3056 = vmatprep.mubr.f32.mxu0 0.0
  %3057 = vmatmul.mubr.f32.gmra.mrb[0].mxu0 %v2939
  %v3058 = vpop.f32.mrb[0].mxu0
  %v3059 = vadd.f32 0.0, %v3058
  %v3060 = vpop.f32.mrb[0].mxu0
  %3061 = vmatprep.mubr.f32.mxu0 0.0
  %3062 = vmatmul.mubr.f32.gmra.mrb[0].mxu0 %v2942
  %v3063 = vpop.f32.mrb[0].mxu0
  %v3064 = vadd.f32 0.0, %v3063
  %v3065 = vpop.f32.mrb[0].mxu0
  %3066 = vmatprep.mubr.f32.mxu0 0.0
  %3067 = vmatmul.mubr.f32.gmra.mrb[0].mxu0 %v2945
  %v3068 = vpop.f32.mrb[0].mxu0
  %v3069 = vadd.f32 0.0, %v3068
  %v3070 = vpop.f32.mrb[0].mxu0
  %3071 = vmatprep.mubr.f32.mxu0 0.0
  %3072 = vmatmul.mubr.f32.gmra.mrb[0].mxu0 %v2948
  %v3073 = vpop.f32.mrb[0].mxu0
  %v3074 = vadd.f32 0.0, %v3073
  %v3075 = vpop.f32.mrb[0].mxu0
  %3076 = vmatprep.mubr.f32.mxu0 0.0
  %3077 = vmatmul.mubr.f32.gmra.mrb[0].mxu0 %v2951
  %v3078 = vpop.f32.mrb[0].mxu0
  %v3079 = vadd.f32 0.0, %v3078
  %v3080 = vpop.f32.mrb[0].mxu0
  %3081 = vmatprep.mubr.f32.mxu0 0.0
  %3082 = vmatmul.mubr.f32.gmra.mrb[0].mxu0 %v2954
  %v3083 = vpop.f32.mrb[0].mxu0
  %v3084 = vadd.f32 0.0, %v3083
  %v3085 = vpop.f32.mrb[0].mxu0
  %3086 = vmatprep.mubr.f32.mxu0 0.0
  %3087 = vmatmul.mubr.f32.gmra.mrb[0].mxu0 %v2957
  %v3088 = vpop.f32.mrb[0].mxu0
  %v3089 = vadd.f32 0.0, %v3088
  %v3090 = vpop.f32.mrb[0].mxu0
  %3091 = vmatprep.mubr.f32.mxu0 0.0
  %3092 = vmatmul.mubr.f32.gmra.mrb[0].mxu0 %v2960
  %v3093 = vpop.f32.mrb[0].mxu0
  %v3094 = vadd.f32 0.0, %v3093
  %v3095 = vpop.f32.mrb[0].mxu0
  %3096 = vmatprep.mubr.f32.mxu0 0.0
  %3097 = vmatmul.mubr.f32.gmra.mrb[0].mxu0 %v2963
  %v3098 = vpop.f32.mrb[0].mxu0
  %v3099 = vadd.f32 0.0, %v3098
  %v3100 = vpop.f32.mrb[0].mxu0
  %3101 = vmatprep.mubr.f32.mxu0 0.0
  %3102 = vmatmul.mubr.f32.gmra.mrb[0].mxu0 %v2966
  %v3103 = vpop.f32.mrb[0].mxu0
  %v3104 = vadd.f32 0.0, %v3103
  %v3105 = vpop.f32.mrb[0].mxu0
  %3106 = vmatprep.mubr.f32.mxu0 0.0
  %3107 = vmatmul.mubr.f32.gmra.mrb[0].mxu0 %v2969
  %v3108 = vpop.f32.mrb[0].mxu0
  %v3109 = vadd.f32 0.0, %v3108
  %v3110 = vpop.f32.mrb[0].mxu0
  %3111 = vmatprep.mubr.f32.mxu0 0.0
  %3112 = vmatmul.mubr.f32.gmra.mrb[0].mxu0 %v2972
  %v3113 = vpop.f32.mrb[0].mxu0
  %v3114 = vadd.f32 0.0, %v3113
  %v3115 = vpop.f32.mrb[0].mxu0
  %3116 = vmatprep.mubr.f32.mxu0 0.0
  %3117 = vmatmul.mubr.f32.gmra.mrb[0].mxu0 %v2975
  %v3118 = vpop.f32.mrb[0].mxu0
  %v3119 = vadd.f32 0.0, %v3118
  %v3120 = vpop.f32.mrb[0].mxu0
  %3121 = vdwg.mxu0
  %v3122 = vadd.f32 %v2897, %v3044
  %v3123 = vadd.f32 %v2898, %v3049
  %v3124 = vadd.f32 %v2899, %v3054
  %v3125 = vadd.f32 %v2900, %v3059
  %v3126 = vadd.f32 %v2901, %v3064
  %v3127 = vadd.f32 %v2902, %v3069
  %v3128 = vadd.f32 %v2903, %v3074
  %v3129 = vadd.f32 %v2904, %v3079
  %v3130 = vadd.f32 %v2905, %v3084
  %v3131 = vadd.f32 %v2906, %v3089
  %v3132 = vadd.f32 %v2907, %v3094
  %v3133 = vadd.f32 %v2908, %v3099
  %v3134 = vadd.f32 %v2909, %v3104
  %v3135 = vadd.f32 %v2910, %v3109
  %v3136 = vadd.f32 %v2911, %v3114
  %v3137 = vadd.f32 %v2912, %v3119
  %v3138 = vld [vmem:[%s2244 + $0x1] sm:$0xff]
  %v3139 = vld [vmem:[%s2244 + $0x11] sm:$0xff]
  %v3140 = vld [vmem:[%s2244 + $0x21] sm:$0xff]
  %v3141 = vld [vmem:[%s2244 + $0x31] sm:$0xff]
  %v3142 = vld [vmem:[%s2244 + $0x41] sm:$0xff]
  %v3143 = vld [vmem:[%s2244 + $0x51] sm:$0xff]
  %v3144 = vld [vmem:[%s2244 + $0x61] sm:$0xff]
  %v3145 = vld [vmem:[%s2244 + $0x71] sm:$0xff]
  %v3146 = vld [vmem:[%s2244 + $0xa1] sm:$0xff]
  %v3147 = vld [vmem:[%s2244 + $0xb1] sm:$0xff]
  %v3148 = vld [vmem:[%s2244 + $0xc1] sm:$0xff]
  %v3149 = vld [vmem:[%s2244 + $0xd1] sm:$0xff]
  %v3150 = vld [vmem:[%s2244 + $0xe1] sm:$0xff]
  %v3151 = vld [vmem:[%s2244 + $0xf1] sm:$0xff]
  %v3152 = vld [vmem:[%s2244 + $0x101] sm:$0xff]
  %v3153 = vld [vmem:[%s2244 + $0x111] sm:$0xff]
  %v3155 = vsel %vm20, %v3138, 0
  %v3158 = vsel %vm20, %v3139, 0
  %v3161 = vsel %vm20, %v3140, 0
  %v3164 = vsel %vm20, %v3141, 0
  %v3167 = vsel %vm20, %v3142, 0
  %v3170 = vsel %vm20, %v3143, 0
  %v3173 = vsel %vm20, %v3144, 0
  %v3176 = vsel %vm20, %v3145, 0
  %v3179 = vsel %vm20, %v3146, 0
  %v3182 = vsel %vm20, %v3147, 0
  %v3185 = vsel %vm20, %v3148, 0
  %v3188 = vsel %vm20, %v3149, 0
  %v3191 = vsel %vm20, %v3150, 0
  %v3194 = vsel %vm20, %v3151, 0
  %v3197 = vsel %vm20, %v3152, 0
  %v3200 = vsel %vm20, %v3153, 0
  %3202 = vmatprep.subr.mxu0 0.0
  %3203 = vmatpush1.msra.mxu0 %v2265
  %3204 = vmatprep.subr.mxu0 0.0
  %3205 = vmatpush1.msra.mxu0 0.0
  %3206 = vmatprep.subr.mxu0 0.0
  %3207 = vmatpush1.msra.mxu0 0.0
  %3208 = vmatprep.subr.mxu0 0.0
  %3209 = vmatpush1.msra.mxu0 0.0
  %3210 = vmatprep.subr.mxu0 0.0
  %3211 = vmatpush1.msra.mxu0 0.0
  %3212 = vmatprep.subr.mxu0 0.0
  %3213 = vmatpush1.msra.mxu0 0.0
  %3214 = vmatprep.subr.mxu0 0.0
  %3215 = vmatpush1.msra.mxu0 0.0
  %3216 = vmatprep.subr.mxu0 0.0
  %3217 = vmatpush1.msra.mxu0 0.0
  %3218 = vmatprep.subr.mxu0 0.0
  %3219 = vmatpush1.msra.mxu0 0.0
  %3220 = vmatprep.subr.mxu0 0.0
  %3221 = vmatpush1.msra.mxu0 0.0
  %3222 = vmatprep.subr.mxu0 0.0
  %3223 = vmatpush1.msra.mxu0 0.0
  %3224 = vmatprep.subr.mxu0 0.0
  %3225 = vmatpush1.msra.mxu0 0.0
  %3226 = vmatprep.subr.mxu0 0.0
  %3227 = vmatpush1.msra.mxu0 0.0
  %3228 = vmatprep.subr.mxu0 0.0
  %3229 = vmatpush1.msra.mxu0 0.0
  %3230 = vmatprep.subr.mxu0 0.0
  %3231 = vmatpush1.msra.mxu0 0.0
  %3232 = vmatprep.subr.mxu0 0.0
  %3233 = vmatpush1.msra.mxu0 0.0
  %3234 = vmatprep.subr.mxu0 0.0
  %3235 = vmatpush1.msra.mxu0 0.0
  %3236 = vmatprep.subr.mxu0 0.0
  %3237 = vmatpush1.msra.mxu0 0.0
  %3238 = vmatprep.subr.mxu0 0.0
  %3239 = vmatpush1.msra.mxu0 0.0
  %3240 = vmatprep.subr.mxu0 0.0
  %3241 = vmatpush1.msra.mxu0 0.0
  %3242 = vmatprep.subr.mxu0 0.0
  %3243 = vmatpush1.msra.mxu0 0.0
  %3244 = vmatprep.subr.mxu0 0.0
  %3245 = vmatpush1.msra.mxu0 0.0
  %3246 = vmatprep.subr.mxu0 0.0
  %3247 = vmatpush1.msra.mxu0 0.0
  %3248 = vmatprep.subr.mxu0 0.0
  %3249 = vmatpush1.msra.mxu0 0.0
  %3250 = vmatprep.subr.mxu0 0.0
  %3251 = vmatpush1.msra.mxu0 0.0
  %3252 = vmatprep.subr.mxu0 0.0
  %3253 = vmatpush1.msra.mxu0 0.0
  %3254 = vmatprep.subr.mxu0 0.0
  %3255 = vmatpush1.msra.mxu0 0.0
  %3256 = vmatprep.subr.mxu0 0.0
  %3257 = vmatpush1.msra.mxu0 0.0
  %3258 = vmatprep.subr.mxu0 0.0
  %3259 = vmatpush1.msra.mxu0 0.0
  %3260 = vmatprep.subr.mxu0 0.0
  %3261 = vmatpush1.msra.mxu0 0.0
  %3262 = vmatprep.subr.mxu0 0.0
  %3263 = vmatpush1.msra.mxu0 0.0
  %3264 = vmatprep.subr.mxu0 0.0
  %3265 = vmatpush1.msra.mxu0 0.0
  %3266 = vmatprep.mubr.f32.mxu0 0.0
  %3267 = vmatmul.mubr.f32.gmra.mrb[0].mxu0 %v3155
  %v3268 = vpop.f32.mrb[0].mxu0
  %v3269 = vadd.f32 0.0, %v3268
  %v3270 = vpop.f32.mrb[0].mxu0
  %3271 = vmatprep.mubr.f32.mxu0 0.0
  %3272 = vmatmul.mubr.f32.gmra.mrb[0].mxu0 %v3158
  %v3273 = vpop.f32.mrb[0].mxu0
  %v3274 = vadd.f32 0.0, %v3273
  %v3275 = vpop.f32.mrb[0].mxu0
  %3276 = vmatprep.mubr.f32.mxu0 0.0
  %3277 = vmatmul.mubr.f32.gmra.mrb[0].mxu0 %v3161
  %v3278 = vpop.f32.mrb[0].mxu0
  %v3279 = vadd.f32 0.0, %v3278
  %v3280 = vpop.f32.mrb[0].mxu0
  %3281 = vmatprep.mubr.f32.mxu0 0.0
  %3282 = vmatmul.mubr.f32.gmra.mrb[0].mxu0 %v3164
  %v3283 = vpop.f32.mrb[0].mxu0
  %v3284 = vadd.f32 0.0, %v3283
  %v3285 = vpop.f32.mrb[0].mxu0
  %3286 = vmatprep.mubr.f32.mxu0 0.0
  %3287 = vmatmul.mubr.f32.gmra.mrb[0].mxu0 %v3167
  %v3288 = vpop.f32.mrb[0].mxu0
  %v3289 = vadd.f32 0.0, %v3288
  %v3290 = vpop.f32.mrb[0].mxu0
  %3291 = vmatprep.mubr.f32.mxu0 0.0
  %3292 = vmatmul.mubr.f32.gmra.mrb[0].mxu0 %v3170
  %v3293 = vpop.f32.mrb[0].mxu0
  %v3294 = vadd.f32 0.0, %v3293
  %v3295 = vpop.f32.mrb[0].mxu0
  %3296 = vmatprep.mubr.f32.mxu0 0.0
  %3297 = vmatmul.mubr.f32.gmra.mrb[0].mxu0 %v3173
  %v3298 = vpop.f32.mrb[0].mxu0
  %v3299 = vadd.f32 0.0, %v3298
  %v3300 = vpop.f32.mrb[0].mxu0
  %3301 = vmatprep.mubr.f32.mxu0 0.0
  %3302 = vmatmul.mubr.f32.gmra.mrb[0].mxu0 %v3176
  %v3303 = vpop.f32.mrb[0].mxu0
  %v3304 = vadd.f32 0.0, %v3303
  %v3305 = vpop.f32.mrb[0].mxu0
  %3306 = vmatprep.mubr.f32.mxu0 0.0
  %3307 = vmatmul.mubr.f32.gmra.mrb[0].mxu0 %v3179
  %v3308 = vpop.f32.mrb[0].mxu0
  %v3309 = vadd.f32 0.0, %v3308
  %v3310 = vpop.f32.mrb[0].mxu0
  %3311 = vmatprep.mubr.f32.mxu0 0.0
  %3312 = vmatmul.mubr.f32.gmra.mrb[0].mxu0 %v3182
  %v3313 = vpop.f32.mrb[0].mxu0
  %v3314 = vadd.f32 0.0, %v3313
  %v3315 = vpop.f32.mrb[0].mxu0
  %3316 = vmatprep.mubr.f32.mxu0 0.0
  %3317 = vmatmul.mubr.f32.gmra.mrb[0].mxu0 %v3185
  %v3318 = vpop.f32.mrb[0].mxu0
  %v3319 = vadd.f32 0.0, %v3318
  %v3320 = vpop.f32.mrb[0].mxu0
  %3321 = vmatprep.mubr.f32.mxu0 0.0
  %3322 = vmatmul.mubr.f32.gmra.mrb[0].mxu0 %v3188
  %v3323 = vpop.f32.mrb[0].mxu0
  %v3324 = vadd.f32 0.0, %v3323
  %v3325 = vpop.f32.mrb[0].mxu0
  %3326 = vmatprep.mubr.f32.mxu0 0.0
  %3327 = vmatmul.mubr.f32.gmra.mrb[0].mxu0 %v3191
  %v3328 = vpop.f32.mrb[0].mxu0
  %v3329 = vadd.f32 0.0, %v3328
  %v3330 = vpop.f32.mrb[0].mxu0
  %3331 = vmatprep.mubr.f32.mxu0 0.0
  %3332 = vmatmul.mubr.f32.gmra.mrb[0].mxu0 %v3194
  %v3333 = vpop.f32.mrb[0].mxu0
  %v3334 = vadd.f32 0.0, %v3333
  %v3335 = vpop.f32.mrb[0].mxu0
  %3336 = vmatprep.mubr.f32.mxu0 0.0
  %3337 = vmatmul.mubr.f32.gmra.mrb[0].mxu0 %v3197
  %v3338 = vpop.f32.mrb[0].mxu0
  %v3339 = vadd.f32 0.0, %v3338
  %v3340 = vpop.f32.mrb[0].mxu0
  %3341 = vmatprep.mubr.f32.mxu0 0.0
  %3342 = vmatmul.mubr.f32.gmra.mrb[0].mxu0 %v3200
  %v3343 = vpop.f32.mrb[0].mxu0
  %v3344 = vadd.f32 0.0, %v3343
  %v3345 = vpop.f32.mrb[0].mxu0
  %3346 = vdwg.mxu0
  %v3347 = vadd.f32 %v3122, %v3269
  %v3348 = vadd.f32 %v3123, %v3274
  %v3349 = vadd.f32 %v3124, %v3279
  %v3350 = vadd.f32 %v3125, %v3284
  %v3351 = vadd.f32 %v3126, %v3289
  %v3352 = vadd.f32 %v3127, %v3294
  %v3353 = vadd.f32 %v3128, %v3299
  %v3354 = vadd.f32 %v3129, %v3304
  %v3355 = vadd.f32 %v3130, %v3309
  %v3356 = vadd.f32 %v3131, %v3314
  %v3357 = vadd.f32 %v3132, %v3319
  %v3358 = vadd.f32 %v3133, %v3324
  %v3359 = vadd.f32 %v3134, %v3329
  %v3360 = vadd.f32 %v3135, %v3334
  %v3361 = vadd.f32 %v3136, %v3339
  %v3362 = vadd.f32 %v3137, %v3344
  %v3363 = vld [vmem:[%s2244 + $0x2] sm:$0xff]
  %v3364 = vld [vmem:[%s2244 + $0x12] sm:$0xff]
  %v3365 = vld [vmem:[%s2244 + $0x22] sm:$0xff]
  %v3366 = vld [vmem:[%s2244 + $0x32] sm:$0xff]
  %v3367 = vld [vmem:[%s2244 + $0x42] sm:$0xff]
  %v3368 = vld [vmem:[%s2244 + $0x52] sm:$0xff]
  %v3369 = vld [vmem:[%s2244 + $0x62] sm:$0xff]
  %v3370 = vld [vmem:[%s2244 + $0x72] sm:$0xff]
  %v3371 = vld [vmem:[%s2244 + $0xa2] sm:$0xff]
  %v3372 = vld [vmem:[%s2244 + $0xb2] sm:$0xff]
  %v3373 = vld [vmem:[%s2244 + $0xc2] sm:$0xff]
  %v3374 = vld [vmem:[%s2244 + $0xd2] sm:$0xff]
  %v3375 = vld [vmem:[%s2244 + $0xe2] sm:$0xff]
  %v3376 = vld [vmem:[%s2244 + $0xf2] sm:$0xff]
  %v3377 = vld [vmem:[%s2244 + $0x102] sm:$0xff]
  %v3378 = vld [vmem:[%s2244 + $0x112] sm:$0xff]
  %v3380 = vsel %vm20, %v3363, 0
  %v3383 = vsel %vm20, %v3364, 0
  %v3386 = vsel %vm20, %v3365, 0
  %v3389 = vsel %vm20, %v3366, 0
  %v3392 = vsel %vm20, %v3367, 0
  %v3395 = vsel %vm20, %v3368, 0
  %v3398 = vsel %vm20, %v3369, 0
  %v3401 = vsel %vm20, %v3370, 0
  %v3404 = vsel %vm20, %v3371, 0
  %v3407 = vsel %vm20, %v3372, 0
  %v3410 = vsel %vm20, %v3373, 0
  %v3413 = vsel %vm20, %v3374, 0
  %v3416 = vsel %vm20, %v3375, 0
  %v3419 = vsel %vm20, %v3376, 0
  %v3422 = vsel %vm20, %v3377, 0
  %v3425 = vsel %vm20, %v3378, 0
  %3427 = vmatprep.subr.mxu0 0.0
  %3428 = vmatpush1.msra.mxu0 %v2266
  %3429 = vmatprep.subr.mxu0 0.0
  %3430 = vmatpush1.msra.mxu0 0.0
  %3431 = vmatprep.subr.mxu0 0.0
  %3432 = vmatpush1.msra.mxu0 0.0
  %3433 = vmatprep.subr.mxu0 0.0
  %3434 = vmatpush1.msra.mxu0 0.0
  %3435 = vmatprep.subr.mxu0 0.0
  %3436 = vmatpush1.msra.mxu0 0.0
  %3437 = vmatprep.subr.mxu0 0.0
  %3438 = vmatpush1.msra.mxu0 0.0
  %3439 = vmatprep.subr.mxu0 0.0
  %3440 = vmatpush1.msra.mxu0 0.0
  %3441 = vmatprep.subr.mxu0 0.0
  %3442 = vmatpush1.msra.mxu0 0.0
  %3443 = vmatprep.subr.mxu0 0.0
  %3444 = vmatpush1.msra.mxu0 0.0
  %3445 = vmatprep.subr.mxu0 0.0
  %3446 = vmatpush1.msra.mxu0 0.0
  %3447 = vmatprep.subr.mxu0 0.0
  %3448 = vmatpush1.msra.mxu0 0.0
  %3449 = vmatprep.subr.mxu0 0.0
  %3450 = vmatpush1.msra.mxu0 0.0
  %3451 = vmatprep.subr.mxu0 0.0
  %3452 = vmatpush1.msra.mxu0 0.0
  %3453 = vmatprep.subr.mxu0 0.0
  %3454 = vmatpush1.msra.mxu0 0.0
  %3455 = vmatprep.subr.mxu0 0.0
  %3456 = vmatpush1.msra.mxu0 0.0
  %3457 = vmatprep.subr.mxu0 0.0
  %3458 = vmatpush1.msra.mxu0 0.0
  %3459 = vmatprep.subr.mxu0 0.0
  %3460 = vmatpush1.msra.mxu0 0.0
  %3461 = vmatprep.subr.mxu0 0.0
  %3462 = vmatpush1.msra.mxu0 0.0
  %3463 = vmatprep.subr.mxu0 0.0
  %3464 = vmatpush1.msra.mxu0 0.0
  %3465 = vmatprep.subr.mxu0 0.0
  %3466 = vmatpush1.msra.mxu0 0.0
  %3467 = vmatprep.subr.mxu0 0.0
  %3468 = vmatpush1.msra.mxu0 0.0
  %3469 = vmatprep.subr.mxu0 0.0
  %3470 = vmatpush1.msra.mxu0 0.0
  %3471 = vmatprep.subr.mxu0 0.0
  %3472 = vmatpush1.msra.mxu0 0.0
  %3473 = vmatprep.subr.mxu0 0.0
  %3474 = vmatpush1.msra.mxu0 0.0
  %3475 = vmatprep.subr.mxu0 0.0
  %3476 = vmatpush1.msra.mxu0 0.0
  %3477 = vmatprep.subr.mxu0 0.0
  %3478 = vmatpush1.msra.mxu0 0.0
  %3479 = vmatprep.subr.mxu0 0.0
  %3480 = vmatpush1.msra.mxu0 0.0
  %3481 = vmatprep.subr.mxu0 0.0
  %3482 = vmatpush1.msra.mxu0 0.0
  %3483 = vmatprep.subr.mxu0 0.0
  %3484 = vmatpush1.msra.mxu0 0.0
  %3485 = vmatprep.subr.mxu0 0.0
  %3486 = vmatpush1.msra.mxu0 0.0
  %3487 = vmatprep.subr.mxu0 0.0
  %3488 = vmatpush1.msra.mxu0 0.0
  %3489 = vmatprep.subr.mxu0 0.0
  %3490 = vmatpush1.msra.mxu0 0.0
  %3491 = vmatprep.mubr.f32.mxu0 0.0
  %3492 = vmatmul.mubr.f32.gmra.mrb[0].mxu0 %v3380
  %v3493 = vpop.f32.mrb[0].mxu0
  %v3494 = vadd.f32 0.0, %v3493
  %v3495 = vpop.f32.mrb[0].mxu0
  %3496 = vmatprep.mubr.f32.mxu0 0.0
  %3497 = vmatmul.mubr.f32.gmra.mrb[0].mxu0 %v3383
  %v3498 = vpop.f32.mrb[0].mxu0
  %v3499 = vadd.f32 0.0, %v3498
  %v3500 = vpop.f32.mrb[0].mxu0
  %3501 = vmatprep.mubr.f32.mxu0 0.0
  %3502 = vmatmul.mubr.f32.gmra.mrb[0].mxu0 %v3386
  %v3503 = vpop.f32.mrb[0].mxu0
  %v3504 = vadd.f32 0.0, %v3503
  %v3505 = vpop.f32.mrb[0].mxu0
  %3506 = vmatprep.mubr.f32.mxu0 0.0
  %3507 = vmatmul.mubr.f32.gmra.mrb[0].mxu0 %v3389
  %v3508 = vpop.f32.mrb[0].mxu0
  %v3509 = vadd.f32 0.0, %v3508
  %v3510 = vpop.f32.mrb[0].mxu0
  %3511 = vmatprep.mubr.f32.mxu0 0.0
  %3512 = vmatmul.mubr.f32.gmra.mrb[0].mxu0 %v3392
  %v3513 = vpop.f32.mrb[0].mxu0
  %v3514 = vadd.f32 0.0, %v3513
  %v3515 = vpop.f32.mrb[0].mxu0
  %3516 = vmatprep.mubr.f32.mxu0 0.0
  %3517 = vmatmul.mubr.f32.gmra.mrb[0].mxu0 %v3395
  %v3518 = vpop.f32.mrb[0].mxu0
  %v3519 = vadd.f32 0.0, %v3518
  %v3520 = vpop.f32.mrb[0].mxu0
  %3521 = vmatprep.mubr.f32.mxu0 0.0
  %3522 = vmatmul.mubr.f32.gmra.mrb[0].mxu0 %v3398
  %v3523 = vpop.f32.mrb[0].mxu0
  %v3524 = vadd.f32 0.0, %v3523
  %v3525 = vpop.f32.mrb[0].mxu0
  %3526 = vmatprep.mubr.f32.mxu0 0.0
  %3527 = vmatmul.mubr.f32.gmra.mrb[0].mxu0 %v3401
  %v3528 = vpop.f32.mrb[0].mxu0
  %v3529 = vadd.f32 0.0, %v3528
  %v3530 = vpop.f32.mrb[0].mxu0
  %3531 = vmatprep.mubr.f32.mxu0 0.0
  %3532 = vmatmul.mubr.f32.gmra.mrb[0].mxu0 %v3404
  %v3533 = vpop.f32.mrb[0].mxu0
  %v3534 = vadd.f32 0.0, %v3533
  %v3535 = vpop.f32.mrb[0].mxu0
  %3536 = vmatprep.mubr.f32.mxu0 0.0
  %3537 = vmatmul.mubr.f32.gmra.mrb[0].mxu0 %v3407
  %v3538 = vpop.f32.mrb[0].mxu0
  %v3539 = vadd.f32 0.0, %v3538
  %v3540 = vpop.f32.mrb[0].mxu0
  %3541 = vmatprep.mubr.f32.mxu0 0.0
  %3542 = vmatmul.mubr.f32.gmra.mrb[0].mxu0 %v3410
  %v3543 = vpop.f32.mrb[0].mxu0
  %v3544 = vadd.f32 0.0, %v3543
  %v3545 = vpop.f32.mrb[0].mxu0
  %3546 = vmatprep.mubr.f32.mxu0 0.0
  %3547 = vmatmul.mubr.f32.gmra.mrb[0].mxu0 %v3413
  %v3548 = vpop.f32.mrb[0].mxu0
  %v3549 = vadd.f32 0.0, %v3548
  %v3550 = vpop.f32.mrb[0].mxu0
  %3551 = vmatprep.mubr.f32.mxu0 0.0
  %3552 = vmatmul.mubr.f32.gmra.mrb[0].mxu0 %v3416
  %v3553 = vpop.f32.mrb[0].mxu0
  %v3554 = vadd.f32 0.0, %v3553
  %v3555 = vpop.f32.mrb[0].mxu0
  %3556 = vmatprep.mubr.f32.mxu0 0.0
  %3557 = vmatmul.mubr.f32.gmra.mrb[0].mxu0 %v3419
  %v3558 = vpop.f32.mrb[0].mxu0
  %v3559 = vadd.f32 0.0, %v3558
  %v3560 = vpop.f32.mrb[0].mxu0
  %3561 = vmatprep.mubr.f32.mxu0 0.0
  %3562 = vmatmul.mubr.f32.gmra.mrb[0].mxu0 %v3422
  %v3563 = vpop.f32.mrb[0].mxu0
  %v3564 = vadd.f32 0.0, %v3563
  %v3565 = vpop.f32.mrb[0].mxu0
  %3566 = vmatprep.mubr.f32.mxu0 0.0
  %3567 = vmatmul.mubr.f32.gmra.mrb[0].mxu0 %v3425
  %v3568 = vpop.f32.mrb[0].mxu0
  %v3569 = vadd.f32 0.0, %v3568
  %v3570 = vpop.f32.mrb[0].mxu0
  %3571 = vdwg.mxu0
  %v3572 = vadd.f32 %v3347, %v3494
  %v3573 = vadd.f32 %v3348, %v3499
  %v3574 = vadd.f32 %v3349, %v3504
  %v3575 = vadd.f32 %v3350, %v3509
  %v3576 = vadd.f32 %v3351, %v3514
  %v3577 = vadd.f32 %v3352, %v3519
  %v3578 = vadd.f32 %v3353, %v3524
  %v3579 = vadd.f32 %v3354, %v3529
  %v3580 = vadd.f32 %v3355, %v3534
  %v3581 = vadd.f32 %v3356, %v3539
  %v3582 = vadd.f32 %v3357, %v3544
  %v3583 = vadd.f32 %v3358, %v3549
  %v3584 = vadd.f32 %v3359, %v3554
  %v3585 = vadd.f32 %v3360, %v3559
  %v3586 = vadd.f32 %v3361, %v3564
  %v3587 = vadd.f32 %v3362, %v3569
  %s3588 = scalar_lea.vmem [#allocation3], 32
  %v3589 = vld [vmem:[%s3588] sm:$0xff]
  %v3590 = vld [vmem:[%s3588 + $0x10] sm:$0xff]
  %v3591 = vld [vmem:[%s3588 + $0x20] sm:$0xff]
  %v3592 = vld [vmem:[%s3588 + $0x30] sm:$0xff]
  %v3593 = vld [vmem:[%s3588 + $0x40] sm:$0xff]
  %v3594 = vld [vmem:[%s3588 + $0x50] sm:$0xff]
  %v3595 = vld [vmem:[%s3588 + $0x60] sm:$0xff]
  %v3596 = vld [vmem:[%s3588 + $0x70] sm:$0xff]
  %v3597 = vld [vmem:[%s3588 + $0xa0] sm:$0xff]
  %v3598 = vld [vmem:[%s3588 + $0xb0] sm:$0xff]
  %v3599 = vld [vmem:[%s3588 + $0xc0] sm:$0xff]
  %v3600 = vld [vmem:[%s3588 + $0xd0] sm:$0xff]
  %v3601 = vld [vmem:[%s3588 + $0xe0] sm:$0xff]
  %v3602 = vld [vmem:[%s3588 + $0xf0] sm:$0xff]
  %v3603 = vld [vmem:[%s3588 + $0x100] sm:$0xff]
  %v3604 = vld [vmem:[%s3588 + $0x110] sm:$0xff]
  %v3606 = vsel %vm20, %v3589, 0
  %v3609 = vsel %vm20, %v3590, 0
  %v3612 = vsel %vm20, %v3591, 0
  %v3615 = vsel %vm20, %v3592, 0
  %v3618 = vsel %vm20, %v3593, 0
  %v3621 = vsel %vm20, %v3594, 0
  %v3624 = vsel %vm20, %v3595, 0
  %v3627 = vsel %vm20, %v3596, 0
  %v3630 = vsel %vm20, %v3597, 0
  %v3633 = vsel %vm20, %v3598, 0
  %v3636 = vsel %vm20, %v3599, 0
  %v3639 = vsel %vm20, %v3600, 0
  %v3642 = vsel %vm20, %v3601, 0
  %v3645 = vsel %vm20, %v3602, 0
  %v3648 = vsel %vm20, %v3603, 0
  %v3651 = vsel %vm20, %v3604, 0
  %3653 = vmatprep.subr.mxu0 0.0
  %3654 = vmatpush1.msra.mxu0 %v2267
  %3655 = vmatprep.subr.mxu0 0.0
  %3656 = vmatpush1.msra.mxu0 0.0
  %3657 = vmatprep.subr.mxu0 0.0
  %3658 = vmatpush1.msra.mxu0 0.0
  %3659 = vmatprep.subr.mxu0 0.0
  %3660 = vmatpush1.msra.mxu0 0.0
  %3661 = vmatprep.subr.mxu0 0.0
  %3662 = vmatpush1.msra.mxu0 0.0
  %3663 = vmatprep.subr.mxu0 0.0
  %3664 = vmatpush1.msra.mxu0 0.0
  %3665 = vmatprep.subr.mxu0 0.0
  %3666 = vmatpush1.msra.mxu0 0.0
  %3667 = vmatprep.subr.mxu0 0.0
  %3668 = vmatpush1.msra.mxu0 0.0
  %3669 = vmatprep.subr.mxu0 0.0
  %3670 = vmatpush1.msra.mxu0 0.0
  %3671 = vmatprep.subr.mxu0 0.0
  %3672 = vmatpush1.msra.mxu0 0.0
  %3673 = vmatprep.subr.mxu0 0.0
  %3674 = vmatpush1.msra.mxu0 0.0
  %3675 = vmatprep.subr.mxu0 0.0
  %3676 = vmatpush1.msra.mxu0 0.0
  %3677 = vmatprep.subr.mxu0 0.0
  %3678 = vmatpush1.msra.mxu0 0.0
  %3679 = vmatprep.subr.mxu0 0.0
  %3680 = vmatpush1.msra.mxu0 0.0
  %3681 = vmatprep.subr.mxu0 0.0
  %3682 = vmatpush1.msra.mxu0 0.0
  %3683 = vmatprep.subr.mxu0 0.0
  %3684 = vmatpush1.msra.mxu0 0.0
  %3685 = vmatprep.subr.mxu0 0.0
  %3686 = vmatpush1.msra.mxu0 0.0
  %3687 = vmatprep.subr.mxu0 0.0
  %3688 = vmatpush1.msra.mxu0 0.0
  %3689 = vmatprep.subr.mxu0 0.0
  %3690 = vmatpush1.msra.mxu0 0.0
  %3691 = vmatprep.subr.mxu0 0.0
  %3692 = vmatpush1.msra.mxu0 0.0
  %3693 = vmatprep.subr.mxu0 0.0
  %3694 = vmatpush1.msra.mxu0 0.0
  %3695 = vmatprep.subr.mxu0 0.0
  %3696 = vmatpush1.msra.mxu0 0.0
  %3697 = vmatprep.subr.mxu0 0.0
  %3698 = vmatpush1.msra.mxu0 0.0
  %3699 = vmatprep.subr.mxu0 0.0
  %3700 = vmatpush1.msra.mxu0 0.0
  %3701 = vmatprep.subr.mxu0 0.0
  %3702 = vmatpush1.msra.mxu0 0.0
  %3703 = vmatprep.subr.mxu0 0.0
  %3704 = vmatpush1.msra.mxu0 0.0
  %3705 = vmatprep.subr.mxu0 0.0
  %3706 = vmatpush1.msra.mxu0 0.0
  %3707 = vmatprep.subr.mxu0 0.0
  %3708 = vmatpush1.msra.mxu0 0.0
  %3709 = vmatprep.subr.mxu0 0.0
  %3710 = vmatpush1.msra.mxu0 0.0
  %3711 = vmatprep.subr.mxu0 0.0
  %3712 = vmatpush1.msra.mxu0 0.0
  %3713 = vmatprep.subr.mxu0 0.0
  %3714 = vmatpush1.msra.mxu0 0.0
  %3715 = vmatprep.subr.mxu0 0.0
  %3716 = vmatpush1.msra.mxu0 0.0
  %3717 = vmatprep.mubr.f32.mxu0 0.0
  %3718 = vmatmul.mubr.f32.gmra.mrb[0].mxu0 %v3606
  %v3719 = vpop.f32.mrb[0].mxu0
  %v3720 = vadd.f32 0.0, %v3719
  %v3721 = vpop.f32.mrb[0].mxu0
  %3722 = vmatprep.mubr.f32.mxu0 0.0
  %3723 = vmatmul.mubr.f32.gmra.mrb[0].mxu0 %v3609
  %v3724 = vpop.f32.mrb[0].mxu0
  %v3725 = vadd.f32 0.0, %v3724
  %v3726 = vpop.f32.mrb[0].mxu0
  %3727 = vmatprep.mubr.f32.mxu0 0.0
  %3728 = vmatmul.mubr.f32.gmra.mrb[0].mxu0 %v3612
  %v3729 = vpop.f32.mrb[0].mxu0
  %v3730 = vadd.f32 0.0, %v3729
  %v3731 = vpop.f32.mrb[0].mxu0
  %3732 = vmatprep.mubr.f32.mxu0 0.0
  %3733 = vmatmul.mubr.f32.gmra.mrb[0].mxu0 %v3615
  %v3734 = vpop.f32.mrb[0].mxu0
  %v3735 = vadd.f32 0.0, %v3734
  %v3736 = vpop.f32.mrb[0].mxu0
  %3737 = vmatprep.mubr.f32.mxu0 0.0
  %3738 = vmatmul.mubr.f32.gmra.mrb[0].mxu0 %v3618
  %v3739 = vpop.f32.mrb[0].mxu0
  %v3740 = vadd.f32 0.0, %v3739
  %v3741 = vpop.f32.mrb[0].mxu0
  %3742 = vmatprep.mubr.f32.mxu0 0.0
  %3743 = vmatmul.mubr.f32.gmra.mrb[0].mxu0 %v3621
  %v3744 = vpop.f32.mrb[0].mxu0
  %v3745 = vadd.f32 0.0, %v3744
  %v3746 = vpop.f32.mrb[0].mxu0
  %3747 = vmatprep.mubr.f32.mxu0 0.0
  %3748 = vmatmul.mubr.f32.gmra.mrb[0].mxu0 %v3624
  %v3749 = vpop.f32.mrb[0].mxu0
  %v3750 = vadd.f32 0.0, %v3749
  %v3751 = vpop.f32.mrb[0].mxu0
  %3752 = vmatprep.mubr.f32.mxu0 0.0
  %3753 = vmatmul.mubr.f32.gmra.mrb[0].mxu0 %v3627
  %v3754 = vpop.f32.mrb[0].mxu0
  %v3755 = vadd.f32 0.0, %v3754
  %v3756 = vpop.f32.mrb[0].mxu0
  %3757 = vmatprep.mubr.f32.mxu0 0.0
  %3758 = vmatmul.mubr.f32.gmra.mrb[0].mxu0 %v3630
  %v3759 = vpop.f32.mrb[0].mxu0
  %v3760 = vadd.f32 0.0, %v3759
  %v3761 = vpop.f32.mrb[0].mxu0
  %3762 = vmatprep.mubr.f32.mxu0 0.0
  %3763 = vmatmul.mubr.f32.gmra.mrb[0].mxu0 %v3633
  %v3764 = vpop.f32.mrb[0].mxu0
  %v3765 = vadd.f32 0.0, %v3764
  %v3766 = vpop.f32.mrb[0].mxu0
  %3767 = vmatprep.mubr.f32.mxu0 0.0
  %3768 = vmatmul.mubr.f32.gmra.mrb[0].mxu0 %v3636
  %v3769 = vpop.f32.mrb[0].mxu0
  %v3770 = vadd.f32 0.0, %v3769
  %v3771 = vpop.f32.mrb[0].mxu0
  %3772 = vmatprep.mubr.f32.mxu0 0.0
  %3773 = vmatmul.mubr.f32.gmra.mrb[0].mxu0 %v3639
  %v3774 = vpop.f32.mrb[0].mxu0
  %v3775 = vadd.f32 0.0, %v3774
  %v3776 = vpop.f32.mrb[0].mxu0
  %3777 = vmatprep.mubr.f32.mxu0 0.0
  %3778 = vmatmul.mubr.f32.gmra.mrb[0].mxu0 %v3642
  %v3779 = vpop.f32.mrb[0].mxu0
  %v3780 = vadd.f32 0.0, %v3779
  %v3781 = vpop.f32.mrb[0].mxu0
  %3782 = vmatprep.mubr.f32.mxu0 0.0
  %3783 = vmatmul.mubr.f32.gmra.mrb[0].mxu0 %v3645
  %v3784 = vpop.f32.mrb[0].mxu0
  %v3785 = vadd.f32 0.0, %v3784
  %v3786 = vpop.f32.mrb[0].mxu0
  %3787 = vmatprep.mubr.f32.mxu0 0.0
  %3788 = vmatmul.mubr.f32.gmra.mrb[0].mxu0 %v3648
  %v3789 = vpop.f32.mrb[0].mxu0
  %v3790 = vadd.f32 0.0, %v3789
  %v3791 = vpop.f32.mrb[0].mxu0
  %3792 = vmatprep.mubr.f32.mxu0 0.0
  %3793 = vmatmul.mubr.f32.gmra.mrb[0].mxu0 %v3651
  %v3794 = vpop.f32.mrb[0].mxu0
  %v3795 = vadd.f32 0.0, %v3794
  %v3796 = vpop.f32.mrb[0].mxu0
  %3797 = vdwg.mxu0
  %v3798 = vadd.f32 %v3572, %v3720
  %v3799 = vadd.f32 %v3573, %v3725
  %v3800 = vadd.f32 %v3574, %v3730
  %v3801 = vadd.f32 %v3575, %v3735
  %v3802 = vadd.f32 %v3576, %v3740
  %v3803 = vadd.f32 %v3577, %v3745
  %v3804 = vadd.f32 %v3578, %v3750
  %v3805 = vadd.f32 %v3579, %v3755
  %v3806 = vadd.f32 %v3580, %v3760
  %v3807 = vadd.f32 %v3581, %v3765
  %v3808 = vadd.f32 %v3582, %v3770
  %v3809 = vadd.f32 %v3583, %v3775
  %v3810 = vadd.f32 %v3584, %v3780
  %v3811 = vadd.f32 %v3585, %v3785
  %v3812 = vadd.f32 %v3586, %v3790
  %v3813 = vadd.f32 %v3587, %v3795
  %v3814 = vld [vmem:[%s3588 + $0x1] sm:$0xff]
  %v3815 = vld [vmem:[%s3588 + $0x11] sm:$0xff]
  %v3816 = vld [vmem:[%s3588 + $0x21] sm:$0xff]
  %v3817 = vld [vmem:[%s3588 + $0x31] sm:$0xff]
  %v3818 = vld [vmem:[%s3588 + $0x41] sm:$0xff]
  %v3819 = vld [vmem:[%s3588 + $0x51] sm:$0xff]
  %v3820 = vld [vmem:[%s3588 + $0x61] sm:$0xff]
  %v3821 = vld [vmem:[%s3588 + $0x71] sm:$0xff]
  %v3822 = vld [vmem:[%s3588 + $0xa1] sm:$0xff]
  %v3823 = vld [vmem:[%s3588 + $0xb1] sm:$0xff]
  %v3824 = vld [vmem:[%s3588 + $0xc1] sm:$0xff]
  %v3825 = vld [vmem:[%s3588 + $0xd1] sm:$0xff]
  %v3826 = vld [vmem:[%s3588 + $0xe1] sm:$0xff]
  %v3827 = vld [vmem:[%s3588 + $0xf1] sm:$0xff]
  %v3828 = vld [vmem:[%s3588 + $0x101] sm:$0xff]
  %v3829 = vld [vmem:[%s3588 + $0x111] sm:$0xff]
  %v3831 = vsel %vm20, %v3814, 0
  %v3834 = vsel %vm20, %v3815, 0
  %v3837 = vsel %vm20, %v3816, 0
  %v3840 = vsel %vm20, %v3817, 0
  %v3843 = vsel %vm20, %v3818, 0
  %v3846 = vsel %vm20, %v3819, 0
  %v3849 = vsel %vm20, %v3820, 0
  %v3852 = vsel %vm20, %v3821, 0
  %v3855 = vsel %vm20, %v3822, 0
  %v3858 = vsel %vm20, %v3823, 0
  %v3861 = vsel %vm20, %v3824, 0
  %v3864 = vsel %vm20, %v3825, 0
  %v3867 = vsel %vm20, %v3826, 0
  %v3870 = vsel %vm20, %v3827, 0
  %v3873 = vsel %vm20, %v3828, 0
  %v3876 = vsel %vm20, %v3829, 0
  %3878 = vmatprep.subr.mxu0 0.0
  %3879 = vmatpush1.msra.mxu0 %v2268
  %3880 = vmatprep.subr.mxu0 0.0
  %3881 = vmatpush1.msra.mxu0 0.0
  %3882 = vmatprep.subr.mxu0 0.0
  %3883 = vmatpush1.msra.mxu0 0.0
  %3884 = vmatprep.subr.mxu0 0.0
  %3885 = vmatpush1.msra.mxu0 0.0
  %3886 = vmatprep.subr.mxu0 0.0
  %3887 = vmatpush1.msra.mxu0 0.0
  %3888 = vmatprep.subr.mxu0 0.0
  %3889 = vmatpush1.msra.mxu0 0.0
  %3890 = vmatprep.subr.mxu0 0.0
  %3891 = vmatpush1.msra.mxu0 0.0
  %3892 = vmatprep.subr.mxu0 0.0
  %3893 = vmatpush1.msra.mxu0 0.0
  %3894 = vmatprep.subr.mxu0 0.0
  %3895 = vmatpush1.msra.mxu0 0.0
  %3896 = vmatprep.subr.mxu0 0.0
  %3897 = vmatpush1.msra.mxu0 0.0
  %3898 = vmatprep.subr.mxu0 0.0
  %3899 = vmatpush1.msra.mxu0 0.0
  %3900 = vmatprep.subr.mxu0 0.0
  %3901 = vmatpush1.msra.mxu0 0.0
  %3902 = vmatprep.subr.mxu0 0.0
  %3903 = vmatpush1.msra.mxu0 0.0
  %3904 = vmatprep.subr.mxu0 0.0
  %3905 = vmatpush1.msra.mxu0 0.0
  %3906 = vmatprep.subr.mxu0 0.0
  %3907 = vmatpush1.msra.mxu0 0.0
  %3908 = vmatprep.subr.mxu0 0.0
  %3909 = vmatpush1.msra.mxu0 0.0
  %3910 = vmatprep.subr.mxu0 0.0
  %3911 = vmatpush1.msra.mxu0 0.0
  %3912 = vmatprep.subr.mxu0 0.0
  %3913 = vmatpush1.msra.mxu0 0.0
  %3914 = vmatprep.subr.mxu0 0.0
  %3915 = vmatpush1.msra.mxu0 0.0
  %3916 = vmatprep.subr.mxu0 0.0
  %3917 = vmatpush1.msra.mxu0 0.0
  %3918 = vmatprep.subr.mxu0 0.0
  %3919 = vmatpush1.msra.mxu0 0.0
  %3920 = vmatprep.subr.mxu0 0.0
  %3921 = vmatpush1.msra.mxu0 0.0
  %3922 = vmatprep.subr.mxu0 0.0
  %3923 = vmatpush1.msra.mxu0 0.0
  %3924 = vmatprep.subr.mxu0 0.0
  %3925 = vmatpush1.msra.mxu0 0.0
  %3926 = vmatprep.subr.mxu0 0.0
  %3927 = vmatpush1.msra.mxu0 0.0
  %3928 = vmatprep.subr.mxu0 0.0
  %3929 = vmatpush1.msra.mxu0 0.0
  %3930 = vmatprep.subr.mxu0 0.0
  %3931 = vmatpush1.msra.mxu0 0.0
  %3932 = vmatprep.subr.mxu0 0.0
  %3933 = vmatpush1.msra.mxu0 0.0
  %3934 = vmatprep.subr.mxu0 0.0
  %3935 = vmatpush1.msra.mxu0 0.0
  %3936 = vmatprep.subr.mxu0 0.0
  %3937 = vmatpush1.msra.mxu0 0.0
  %3938 = vmatprep.subr.mxu0 0.0
  %3939 = vmatpush1.msra.mxu0 0.0
  %3940 = vmatprep.subr.mxu0 0.0
  %3941 = vmatpush1.msra.mxu0 0.0
  %3942 = vmatprep.mubr.f32.mxu0 0.0
  %3943 = vmatmul.mubr.f32.gmra.mrb[0].mxu0 %v3831
  %v3944 = vpop.f32.mrb[0].mxu0
  %v3945 = vadd.f32 0.0, %v3944
  %v3946 = vpop.f32.mrb[0].mxu0
  %3947 = vmatprep.mubr.f32.mxu0 0.0
  %3948 = vmatmul.mubr.f32.gmra.mrb[0].mxu0 %v3834
  %v3949 = vpop.f32.mrb[0].mxu0
  %v3950 = vadd.f32 0.0, %v3949
  %v3951 = vpop.f32.mrb[0].mxu0
  %3952 = vmatprep.mubr.f32.mxu0 0.0
  %3953 = vmatmul.mubr.f32.gmra.mrb[0].mxu0 %v3837
  %v3954 = vpop.f32.mrb[0].mxu0
  %v3955 = vadd.f32 0.0, %v3954
  %v3956 = vpop.f32.mrb[0].mxu0
  %3957 = vmatprep.mubr.f32.mxu0 0.0
  %3958 = vmatmul.mubr.f32.gmra.mrb[0].mxu0 %v3840
  %v3959 = vpop.f32.mrb[0].mxu0
  %v3960 = vadd.f32 0.0, %v3959
  %v3961 = vpop.f32.mrb[0].mxu0
  %3962 = vmatprep.mubr.f32.mxu0 0.0
  %3963 = vmatmul.mubr.f32.gmra.mrb[0].mxu0 %v3843
  %v3964 = vpop.f32.mrb[0].mxu0
  %v3965 = vadd.f32 0.0, %v3964
  %v3966 = vpop.f32.mrb[0].mxu0
  %3967 = vmatprep.mubr.f32.mxu0 0.0
  %3968 = vmatmul.mubr.f32.gmra.mrb[0].mxu0 %v3846
  %v3969 = vpop.f32.mrb[0].mxu0
  %v3970 = vadd.f32 0.0, %v3969
  %v3971 = vpop.f32.mrb[0].mxu0
  %3972 = vmatprep.mubr.f32.mxu0 0.0
  %3973 = vmatmul.mubr.f32.gmra.mrb[0].mxu0 %v3849
  %v3974 = vpop.f32.mrb[0].mxu0
  %v3975 = vadd.f32 0.0, %v3974
  %v3976 = vpop.f32.mrb[0].mxu0
  %3977 = vmatprep.mubr.f32.mxu0 0.0
  %3978 = vmatmul.mubr.f32.gmra.mrb[0].mxu0 %v3852
  %v3979 = vpop.f32.mrb[0].mxu0
  %v3980 = vadd.f32 0.0, %v3979
  %v3981 = vpop.f32.mrb[0].mxu0
  %3982 = vmatprep.mubr.f32.mxu0 0.0
  %3983 = vmatmul.mubr.f32.gmra.mrb[0].mxu0 %v3855
  %v3984 = vpop.f32.mrb[0].mxu0
  %v3985 = vadd.f32 0.0, %v3984
  %v3986 = vpop.f32.mrb[0].mxu0
  %3987 = vmatprep.mubr.f32.mxu0 0.0
  %3988 = vmatmul.mubr.f32.gmra.mrb[0].mxu0 %v3858
  %v3989 = vpop.f32.mrb[0].mxu0
  %v3990 = vadd.f32 0.0, %v3989
  %v3991 = vpop.f32.mrb[0].mxu0
  %3992 = vmatprep.mubr.f32.mxu0 0.0
  %3993 = vmatmul.mubr.f32.gmra.mrb[0].mxu0 %v3861
  %v3994 = vpop.f32.mrb[0].mxu0
  %v3995 = vadd.f32 0.0, %v3994
  %v3996 = vpop.f32.mrb[0].mxu0
  %3997 = vmatprep.mubr.f32.mxu0 0.0
  %3998 = vmatmul.mubr.f32.gmra.mrb[0].mxu0 %v3864
  %v3999 = vpop.f32.mrb[0].mxu0
  %v4000 = vadd.f32 0.0, %v3999
  %v4001 = vpop.f32.mrb[0].mxu0
  %4002 = vmatprep.mubr.f32.mxu0 0.0
  %4003 = vmatmul.mubr.f32.gmra.mrb[0].mxu0 %v3867
  %v4004 = vpop.f32.mrb[0].mxu0
  %v4005 = vadd.f32 0.0, %v4004
  %v4006 = vpop.f32.mrb[0].mxu0
  %4007 = vmatprep.mubr.f32.mxu0 0.0
  %4008 = vmatmul.mubr.f32.gmra.mrb[0].mxu0 %v3870
  %v4009 = vpop.f32.mrb[0].mxu0
  %v4010 = vadd.f32 0.0, %v4009
  %v4011 = vpop.f32.mrb[0].mxu0
  %4012 = vmatprep.mubr.f32.mxu0 0.0
  %4013 = vmatmul.mubr.f32.gmra.mrb[0].mxu0 %v3873
  %v4014 = vpop.f32.mrb[0].mxu0
  %v4015 = vadd.f32 0.0, %v4014
  %v4016 = vpop.f32.mrb[0].mxu0
  %4017 = vmatprep.mubr.f32.mxu0 0.0
  %4018 = vmatmul.mubr.f32.gmra.mrb[0].mxu0 %v3876
  %v4019 = vpop.f32.mrb[0].mxu0
  %v4020 = vadd.f32 0.0, %v4019
  %v4021 = vpop.f32.mrb[0].mxu0
  %4022 = vdwg.mxu0
  %v4023 = vadd.f32 %v3798, %v3945
  %v4024 = vadd.f32 %v3799, %v3950
  %v4025 = vadd.f32 %v3800, %v3955
  %v4026 = vadd.f32 %v3801, %v3960
  %v4027 = vadd.f32 %v3802, %v3965
  %v4028 = vadd.f32 %v3803, %v3970
  %v4029 = vadd.f32 %v3804, %v3975
  %v4030 = vadd.f32 %v3805, %v3980
  %v4031 = vadd.f32 %v3806, %v3985
  %v4032 = vadd.f32 %v3807, %v3990
  %v4033 = vadd.f32 %v3808, %v3995
  %v4034 = vadd.f32 %v3809, %v4000
  %v4035 = vadd.f32 %v3810, %v4005
  %v4036 = vadd.f32 %v3811, %v4010
  %v4037 = vadd.f32 %v3812, %v4015
  %v4038 = vadd.f32 %v3813, %v4020
  %v4039 = vld [vmem:[%s3588 + $0x2] sm:$0xff]
  %v4040 = vld [vmem:[%s3588 + $0x12] sm:$0xff]
  %v4041 = vld [vmem:[%s3588 + $0x22] sm:$0xff]
  %v4042 = vld [vmem:[%s3588 + $0x32] sm:$0xff]
  %v4043 = vld [vmem:[%s3588 + $0x42] sm:$0xff]
  %v4044 = vld [vmem:[%s3588 + $0x52] sm:$0xff]
  %v4045 = vld [vmem:[%s3588 + $0x62] sm:$0xff]
  %v4046 = vld [vmem:[%s3588 + $0x72] sm:$0xff]
  %v4047 = vld [vmem:[%s3588 + $0xa2] sm:$0xff]
  %v4048 = vld [vmem:[%s3588 + $0xb2] sm:$0xff]
  %v4049 = vld [vmem:[%s3588 + $0xc2] sm:$0xff]
  %v4050 = vld [vmem:[%s3588 + $0xd2] sm:$0xff]
  %v4051 = vld [vmem:[%s3588 + $0xe2] sm:$0xff]
  %v4052 = vld [vmem:[%s3588 + $0xf2] sm:$0xff]
  %v4053 = vld [vmem:[%s3588 + $0x102] sm:$0xff]
  %v4054 = vld [vmem:[%s3588 + $0x112] sm:$0xff]
  %v4056 = vsel %vm20, %v4039, 0
  %v4059 = vsel %vm20, %v4040, 0
  %v4062 = vsel %vm20, %v4041, 0
  %v4065 = vsel %vm20, %v4042, 0
  %v4068 = vsel %vm20, %v4043, 0
  %v4071 = vsel %vm20, %v4044, 0
  %v4074 = vsel %vm20, %v4045, 0
  %v4077 = vsel %vm20, %v4046, 0
  %v4080 = vsel %vm20, %v4047, 0
  %v4083 = vsel %vm20, %v4048, 0
  %v4086 = vsel %vm20, %v4049, 0
  %v4089 = vsel %vm20, %v4050, 0
  %v4092 = vsel %vm20, %v4051, 0
  %v4095 = vsel %vm20, %v4052, 0
  %v4098 = vsel %vm20, %v4053, 0
  %v4101 = vsel %vm20, %v4054, 0
  %4103 = vmatprep.subr.mxu0 0.0
  %4104 = vmatpush1.msra.mxu0 %v2269
  %4105 = vmatprep.subr.mxu0 0.0
  %4106 = vmatpush1.msra.mxu0 0.0
  %4107 = vmatprep.subr.mxu0 0.0
  %4108 = vmatpush1.msra.mxu0 0.0
  %4109 = vmatprep.subr.mxu0 0.0
  %4110 = vmatpush1.msra.mxu0 0.0
  %4111 = vmatprep.subr.mxu0 0.0
  %4112 = vmatpush1.msra.mxu0 0.0
  %4113 = vmatprep.subr.mxu0 0.0
  %4114 = vmatpush1.msra.mxu0 0.0
  %4115 = vmatprep.subr.mxu0 0.0
  %4116 = vmatpush1.msra.mxu0 0.0
  %4117 = vmatprep.subr.mxu0 0.0
  %4118 = vmatpush1.msra.mxu0 0.0
  %4119 = vmatprep.subr.mxu0 0.0
  %4120 = vmatpush1.msra.mxu0 0.0
  %4121 = vmatprep.subr.mxu0 0.0
  %4122 = vmatpush1.msra.mxu0 0.0
  %4123 = vmatprep.subr.mxu0 0.0
  %4124 = vmatpush1.msra.mxu0 0.0
  %4125 = vmatprep.subr.mxu0 0.0
  %4126 = vmatpush1.msra.mxu0 0.0
  %4127 = vmatprep.subr.mxu0 0.0
  %4128 = vmatpush1.msra.mxu0 0.0
  %4129 = vmatprep.subr.mxu0 0.0
  %4130 = vmatpush1.msra.mxu0 0.0
  %4131 = vmatprep.subr.mxu0 0.0
  %4132 = vmatpush1.msra.mxu0 0.0
  %4133 = vmatprep.subr.mxu0 0.0
  %4134 = vmatpush1.msra.mxu0 0.0
  %4135 = vmatprep.subr.mxu0 0.0
  %4136 = vmatpush1.msra.mxu0 0.0
  %4137 = vmatprep.subr.mxu0 0.0
  %4138 = vmatpush1.msra.mxu0 0.0
  %4139 = vmatprep.subr.mxu0 0.0
  %4140 = vmatpush1.msra.mxu0 0.0
  %4141 = vmatprep.subr.mxu0 0.0
  %4142 = vmatpush1.msra.mxu0 0.0
  %4143 = vmatprep.subr.mxu0 0.0
  %4144 = vmatpush1.msra.mxu0 0.0
  %4145 = vmatprep.subr.mxu0 0.0
  %4146 = vmatpush1.msra.mxu0 0.0
  %4147 = vmatprep.subr.mxu0 0.0
  %4148 = vmatpush1.msra.mxu0 0.0
  %4149 = vmatprep.subr.mxu0 0.0
  %4150 = vmatpush1.msra.mxu0 0.0
  %4151 = vmatprep.subr.mxu0 0.0
  %4152 = vmatpush1.msra.mxu0 0.0
  %4153 = vmatprep.subr.mxu0 0.0
  %4154 = vmatpush1.msra.mxu0 0.0
  %4155 = vmatprep.subr.mxu0 0.0
  %4156 = vmatpush1.msra.mxu0 0.0
  %4157 = vmatprep.subr.mxu0 0.0
  %4158 = vmatpush1.msra.mxu0 0.0
  %4159 = vmatprep.subr.mxu0 0.0
  %4160 = vmatpush1.msra.mxu0 0.0
  %4161 = vmatprep.subr.mxu0 0.0
  %4162 = vmatpush1.msra.mxu0 0.0
  %4163 = vmatprep.subr.mxu0 0.0
  %4164 = vmatpush1.msra.mxu0 0.0
  %4165 = vmatprep.subr.mxu0 0.0
  %4166 = vmatpush1.msra.mxu0 0.0
  %4167 = vmatprep.mubr.f32.mxu0 0.0
  %4168 = vmatmul.mubr.f32.gmra.mrb[0].mxu0 %v4056
  %v4169 = vpop.f32.mrb[0].mxu0
  %v4170 = vadd.f32 0.0, %v4169
  %v4171 = vpop.f32.mrb[0].mxu0
  %4172 = vmatprep.mubr.f32.mxu0 0.0
  %4173 = vmatmul.mubr.f32.gmra.mrb[0].mxu0 %v4059
  %v4174 = vpop.f32.mrb[0].mxu0
  %v4175 = vadd.f32 0.0, %v4174
  %v4176 = vpop.f32.mrb[0].mxu0
  %4177 = vmatprep.mubr.f32.mxu0 0.0
  %4178 = vmatmul.mubr.f32.gmra.mrb[0].mxu0 %v4062
  %v4179 = vpop.f32.mrb[0].mxu0
  %v4180 = vadd.f32 0.0, %v4179
  %v4181 = vpop.f32.mrb[0].mxu0
  %4182 = vmatprep.mubr.f32.mxu0 0.0
  %4183 = vmatmul.mubr.f32.gmra.mrb[0].mxu0 %v4065
  %v4184 = vpop.f32.mrb[0].mxu0
  %v4185 = vadd.f32 0.0, %v4184
  %v4186 = vpop.f32.mrb[0].mxu0
  %4187 = vmatprep.mubr.f32.mxu0 0.0
  %4188 = vmatmul.mubr.f32.gmra.mrb[0].mxu0 %v4068
  %v4189 = vpop.f32.mrb[0].mxu0
  %v4190 = vadd.f32 0.0, %v4189
  %v4191 = vpop.f32.mrb[0].mxu0
  %4192 = vmatprep.mubr.f32.mxu0 0.0
  %4193 = vmatmul.mubr.f32.gmra.mrb[0].mxu0 %v4071
  %v4194 = vpop.f32.mrb[0].mxu0
  %v4195 = vadd.f32 0.0, %v4194
  %v4196 = vpop.f32.mrb[0].mxu0
  %4197 = vmatprep.mubr.f32.mxu0 0.0
  %4198 = vmatmul.mubr.f32.gmra.mrb[0].mxu0 %v4074
  %v4199 = vpop.f32.mrb[0].mxu0
  %v4200 = vadd.f32 0.0, %v4199
  %v4201 = vpop.f32.mrb[0].mxu0
  %4202 = vmatprep.mubr.f32.mxu0 0.0
  %4203 = vmatmul.mubr.f32.gmra.mrb[0].mxu0 %v4077
  %v4204 = vpop.f32.mrb[0].mxu0
  %v4205 = vadd.f32 0.0, %v4204
  %v4206 = vpop.f32.mrb[0].mxu0
  %4207 = vmatprep.mubr.f32.mxu0 0.0
  %4208 = vmatmul.mubr.f32.gmra.mrb[0].mxu0 %v4080
  %v4209 = vpop.f32.mrb[0].mxu0
  %v4210 = vadd.f32 0.0, %v4209
  %v4211 = vpop.f32.mrb[0].mxu0
  %4212 = vmatprep.mubr.f32.mxu0 0.0
  %4213 = vmatmul.mubr.f32.gmra.mrb[0].mxu0 %v4083
  %v4214 = vpop.f32.mrb[0].mxu0
  %v4215 = vadd.f32 0.0, %v4214
  %v4216 = vpop.f32.mrb[0].mxu0
  %4217 = vmatprep.mubr.f32.mxu0 0.0
  %4218 = vmatmul.mubr.f32.gmra.mrb[0].mxu0 %v4086
  %v4219 = vpop.f32.mrb[0].mxu0
  %v4220 = vadd.f32 0.0, %v4219
  %v4221 = vpop.f32.mrb[0].mxu0
  %4222 = vmatprep.mubr.f32.mxu0 0.0
  %4223 = vmatmul.mubr.f32.gmra.mrb[0].mxu0 %v4089
  %v4224 = vpop.f32.mrb[0].mxu0
  %v4225 = vadd.f32 0.0, %v4224
  %v4226 = vpop.f32.mrb[0].mxu0
  %4227 = vmatprep.mubr.f32.mxu0 0.0
  %4228 = vmatmul.mubr.f32.gmra.mrb[0].mxu0 %v4092
  %v4229 = vpop.f32.mrb[0].mxu0
  %v4230 = vadd.f32 0.0, %v4229
  %v4231 = vpop.f32.mrb[0].mxu0
  %4232 = vmatprep.mubr.f32.mxu0 0.0
  %4233 = vmatmul.mubr.f32.gmra.mrb[0].mxu0 %v4095
  %v4234 = vpop.f32.mrb[0].mxu0
  %v4235 = vadd.f32 0.0, %v4234
  %v4236 = vpop.f32.mrb[0].mxu0
  %4237 = vmatprep.mubr.f32.mxu0 0.0
  %4238 = vmatmul.mubr.f32.gmra.mrb[0].mxu0 %v4098
  %v4239 = vpop.f32.mrb[0].mxu0
  %v4240 = vadd.f32 0.0, %v4239
  %v4241 = vpop.f32.mrb[0].mxu0
  %4242 = vmatprep.mubr.f32.mxu0 0.0
  %4243 = vmatmul.mubr.f32.gmra.mrb[0].mxu0 %v4101
  %v4244 = vpop.f32.mrb[0].mxu0
  %v4245 = vadd.f32 0.0, %v4244
  %v4246 = vpop.f32.mrb[0].mxu0
  %4247 = vdwg.mxu0
  %v4248 = vadd.f32 %v4023, %v4170
  %v4249 = vadd.f32 %v4024, %v4175
  %v4250 = vadd.f32 %v4025, %v4180
  %v4251 = vadd.f32 %v4026, %v4185
  %v4252 = vadd.f32 %v4027, %v4190
  %v4253 = vadd.f32 %v4028, %v4195
  %v4254 = vadd.f32 %v4029, %v4200
  %v4255 = vadd.f32 %v4030, %v4205
  %v4256 = vadd.f32 %v4031, %v4210
  %v4257 = vadd.f32 %v4032, %v4215
  %v4258 = vadd.f32 %v4033, %v4220
  %v4259 = vadd.f32 %v4034, %v4225
  %v4260 = vadd.f32 %v4035, %v4230
  %v4261 = vadd.f32 %v4036, %v4235
  %v4262 = vadd.f32 %v4037, %v4240
  %v4263 = vadd.f32 %v4038, %v4245
  %v4264 = vld [vmem:[%s4] sm:$0x1]
  %v4266 = vlaneseq
  %v4267 = vshrl.u32 %v4266, 7
  %v4268 = vsub.s32 0, %v4267
  %v4269 = vrot.slane %v4264, %v4268
  %v4271 = vadd.f32 %v4248, %v4269
  %v4272 = vadd.f32 %v4249, %v4269
  %v4273 = vadd.f32 %v4250, %v4269
  %v4274 = vadd.f32 %v4251, %v4269
  %v4275 = vadd.f32 %v4252, %v4269
  %v4276 = vadd.f32 %v4253, %v4269
  %v4277 = vadd.f32 %v4254, %v4269
  %v4278 = vadd.f32 %v4255, %v4269
  %v4279 = vadd.f32 %v4256, %v4269
  %v4280 = vadd.f32 %v4257, %v4269
  %v4281 = vadd.f32 %v4258, %v4269
  %v4282 = vadd.f32 %v4259, %v4269
  %v4283 = vadd.f32 %v4260, %v4269
  %v4284 = vadd.f32 %v4261, %v4269
  %v4285 = vadd.f32 %v4262, %v4269
  %v4286 = vadd.f32 %v4263, %v4269
  %v4287 = vmul.f32 %v4271, 0.1
  %v4288 = vmul.f32 %v4272, 0.1
  %v4289 = vmul.f32 %v4273, 0.1
  %v4290 = vmul.f32 %v4274, 0.1
  %v4291 = vmul.f32 %v4275, 0.1
  %v4292 = vmul.f32 %v4276, 0.1
  %v4293 = vmul.f32 %v4277, 0.1
  %v4294 = vmul.f32 %v4278, 0.1
  %v4295 = vmul.f32 %v4279, 0.1
  %v4296 = vmul.f32 %v4280, 0.1
  %v4297 = vmul.f32 %v4281, 0.1
  %v4298 = vmul.f32 %v4282, 0.1
  %v4299 = vmul.f32 %v4283, 0.1
  %v4300 = vmul.f32 %v4284, 0.1
  %v4301 = vmul.f32 %v4285, 0.1
  %v4302 = vmul.f32 %v4286, 0.1
  %v4303 = vmax.f32 %v4271, %v4287
  %v4304 = vmax.f32 %v4272, %v4288
  %v4305 = vmax.f32 %v4273, %v4289
  %v4306 = vmax.f32 %v4274, %v4290
  %v4307 = vmax.f32 %v4275, %v4291
  %v4308 = vmax.f32 %v4276, %v4292
  %v4309 = vmax.f32 %v4277, %v4293
  %v4310 = vmax.f32 %v4278, %v4294
  %v4311 = vmax.f32 %v4279, %v4295
  %v4312 = vmax.f32 %v4280, %v4296
  %v4313 = vmax.f32 %v4281, %v4297
  %v4314 = vmax.f32 %v4282, %v4298
  %v4315 = vmax.f32 %v4283, %v4299
  %v4316 = vmax.f32 %v4284, %v4300
  %v4317 = vmax.f32 %v4285, %v4301
  %v4318 = vmax.f32 %v4286, %v4302
  %4319 = vst.msk [vmem:[%s5] sm:$0xff] %vm20, %v4303
  %4320 = vst.msk [vmem:[%s5 + $0x8] sm:$0xff] %vm20, %v4304
  %4321 = vst.msk [vmem:[%s5 + $0x10] sm:$0xff] %vm20, %v4305
  %4322 = vst.msk [vmem:[%s5 + $0x18] sm:$0xff] %vm20, %v4306
  %4323 = vst.msk [vmem:[%s5 + $0x20] sm:$0xff] %vm20, %v4307
  %4324 = vst.msk [vmem:[%s5 + $0x28] sm:$0xff] %vm20, %v4308
  %4325 = vst.msk [vmem:[%s5 + $0x30] sm:$0xff] %vm20, %v4309
  %4326 = vst.msk [vmem:[%s5 + $0x38] sm:$0xff] %vm20, %v4310
  %4327 = vst.msk [vmem:[%s5 + $0x40] sm:$0xff] %vm20, %v4311
  %4328 = vst.msk [vmem:[%s5 + $0x48] sm:$0xff] %vm20, %v4312
  %4329 = vst.msk [vmem:[%s5 + $0x50] sm:$0xff] %vm20, %v4313
  %4330 = vst.msk [vmem:[%s5 + $0x58] sm:$0xff] %vm20, %v4314
  %4331 = vst.msk [vmem:[%s5 + $0x60] sm:$0xff] %vm20, %v4315
  %4332 = vst.msk [vmem:[%s5 + $0x68] sm:$0xff] %vm20, %v4316
  %4333 = vst.msk [vmem:[%s5 + $0x70] sm:$0xff] %vm20, %v4317
  %4334 = vst.msk [vmem:[%s5 + $0x78] sm:$0xff] %vm20, %v4318
  // Predicated region
  $region22: #{down_forward.1} parent=0 // pred_check
    _
  $region23: #{down_forward.1} parent=0 // pred_check_branch
    %4336 = sbr.rel (0) target = $region25
  $region24: #{down_forward.1} parent=0 // pred_region
    _
  $region25: #{down_forward.1} parent=0 // pred_fallthru
    _
  // Predicated region
  $region26: #{down_forward.1} parent=0 // pred_check
    _
  $region27: #{down_forward.1} parent=0 // pred_check_branch
    %4338 = sbr.rel (0) target = $region29
  $region28: #{down_forward.1} parent=0 // pred_region
    _
  $region29: #{down_forward.1} parent=0 // pred_fallthru
    _

</llo_original>
